<compile_context>
chip_gen: v6e
topology: v6e:2x2x1
jax: 0.10.0
libtpu: 0.0.40
codegen_flags: <defaults>
</compile_context>

<pallas_src>
import numpy as np
import jax
import jax.numpy as jnp
from jax import lax
from jax.experimental import pallas as pl
from jax.experimental.pallas import tpu as pltpu  # noqa: F401  (grid=(), defaults suffice)

LEAKY_SLOPE = 0.2


def _leaky_relu(x):
    return jnp.where(x > 0, x, LEAKY_SLOPE * x)


# --------------------- host-side one-time folding & packing ---------------------

def _fold_conv3x3(w, W):
    """HWIO (3,3,Cin,Cout) -> (3, W*Cin, W*Cout): one banded matrix per dy tap.
    The three dx taps and the 'same' zero padding along W are folded in."""
    w = np.asarray(w, np.float32)
    Cin, Cout = w.shape[2], w.shape[3]
    out = np.zeros((3, W * Cin, W * Cout), np.float32)
    for ky in range(3):
        for kx in range(3):
            for wo in range(W):
                wi = wo + kx - 1
                if 0 <= wi < W:
                    out[ky, wi * Cin:(wi + 1) * Cin, wo * Cout:(wo + 1) * Cout] += w[ky, kx]
    return out


def _fold_conv1x1(w, W):
    """(Cin, Cout) -> block-diagonal (W*Cin, W*Cout) acting on a (.., W*Cin) slab."""
    w = np.asarray(w, np.float32)
    Cin, Cout = w.shape
    out = np.zeros((W * Cin, W * Cout), np.float32)
    for i in range(W):
        out[i * Cin:(i + 1) * Cin, i * Cout:(i + 1) * Cout] = w
    return out


def _w_upsample(W, C):
    """(W*C, 2W*C) 0/1 matrix: nearest 2x upsample along W (lane axis)."""
    out = np.zeros((W * C, 2 * W * C), np.float32)
    eye = np.eye(C, dtype=np.float32)
    for w in range(W):
        out[w * C:(w + 1) * C, (2 * w) * C:(2 * w + 1) * C] = eye
        out[w * C:(w + 1) * C, (2 * w + 1) * C:(2 * w + 2) * C] = eye
    return out


def _h_upsample(BH):
    """(2*BH, BH) 0/1 matrix: duplicate every slab row (nearest 2x upsample along H)."""
    m = np.zeros((2 * BH, BH), np.float32)
    m[np.arange(2 * BH), np.arange(2 * BH) // 2] = 1.0
    return m


class _Packer:
    """Packs many small matrices into one (rows, 128) bf16 buffer (single DMA).
    Every piece starts at a row offset that is a multiple of 16 (bf16 sublane tile)
    and its columns start at lane 0, so in-kernel static slices are clean."""
    WIDTH = 128
    ALIGN = 16

    def __init__(self):
        self.chunks = []
        self.offset = 0

    def add(self, arr):
        arr = np.asarray(arr, np.float32)
        r, c = arr.shape
        assert c <= self.WIDTH, (r, c)
        rp = -(-r // self.ALIGN) * self.ALIGN
        padded = np.zeros((rp, self.WIDTH), np.float32)
        padded[:r, :c] = arr
        off = self.offset
        self.chunks.append(padded)
        self.offset += rp
        return (off, int(r), int(c))          # slot = (row offset, rows, cols)

    def finalize(self):
        return jnp.asarray(np.concatenate(self.chunks, axis=0), dtype=jnp.bfloat16)


def prepare_generator(params, batch_size):
    """Fold + pack the parameters. Runs once. Returns (static plan, wcat_buf, const_buf)."""
    B = batch_size
    s0, nf0 = params['s0'], params['nf0']
    zdim = int(params['fc_w'].shape[0])
    pk = _Packer()
    plan = {'B': B, 's0': s0, 'nf0': nf0, 'zdim': zdim}

    # fc: slab row (b*s0 + h) = z[b] @ Wcat[:, h-block] + bias_slab[row]
    rrep = np.zeros((B * s0, B), np.float32)
    for b in range(B):
        rrep[b * s0:(b + 1) * s0, b] = 1.0
    plan['fc_rrep'] = pk.add(rrep)

    fc_w = np.asarray(params['fc_w'], np.float32)
    wcat = fc_w.reshape(zdim, nf0, s0, s0).transpose(0, 2, 3, 1)   # (z, h, w, c)
    wcat = wcat.reshape(zdim, s0 * s0 * nf0)                       # cols ordered (h, w, c)
    wcat_buf = jnp.asarray(wcat, dtype=jnp.bfloat16)

    fc_b = np.asarray(params['fc_b'], np.float32).reshape(nf0, s0, s0)
    fc_b = fc_b.transpose(1, 2, 0).reshape(s0, s0 * nf0)           # row h, cols (w, c)
    plan['fc_bias'] = pk.add(np.tile(fc_b, (B, 1)))                # rows ordered (b, h)

    blocks = []
    H = s0
    for blk in params['blocks']:
        fout = int(blk['conv1_w'].shape[3])
        e = {'H': H}
        e['w0'] = tuple(pk.add(t) for t in _fold_conv3x3(blk['conv0_w'], H))
        e['b0'] = pk.add(np.tile(np.asarray(blk['conv0_b'], np.float32), (1, H)))
        e['w1'] = tuple(pk.add(t) for t in _fold_conv3x3(blk['conv1_w'], H))
        e['b1'] = pk.add(np.tile(np.asarray(blk['conv1_b'], np.float32), (1, H)))
        e['shortcut'] = pk.add(_fold_conv1x1(blk['conv_s_w'], H)) if 'conv_s_w' in blk else None
        if blk['upsample']:
            e['up'] = (pk.add(_w_upsample(H, fout)), pk.add(_h_upsample(B * H)))
            H *= 2
        else:
            e['up'] = None
        blocks.append(e)
    plan['blocks'] = blocks

    # conv_img: permute output lanes (w, c) -> (c, w) so the kernel can emit NCHW rows
    cimg = int(params['conv_img_w'].shape[3])
    wimg = _fold_conv3x3(params['conv_img_w'], H)                  # (3, H*nf, H*cimg)
    K = wimg.shape[1]
    wimg = wimg.reshape(3, K, H, cimg).transpose(0, 1, 3, 2).reshape(3, K, cimg * H)
    plan['wimg'] = tuple(pk.add(t) for t in wimg)
    bimg = np.repeat(np.asarray(params['conv_img_b'], np.float32).reshape(1, cimg), H, axis=1)
    plan['bimg'] = pk.add(bimg)

    plan['H_out'] = H
    plan['img_cout'] = cimg
    return plan, wcat_buf, pk.finalize()


# --------------------- the fused Pallas kernel ---------------------

def _make_fused_kernel(plan):
    B, s0, nf0 = plan['B'], plan['s0'], plan['nf0']
    L0 = s0 * nf0

    def bf(x):
        return x.astype(jnp.bfloat16)

    def dot(a, b):
        # MXU: bf16 multiplies, f32 accumulation (default TPU matmul precision)
        return jnp.dot(bf(a), bf(b), preferred_element_type=jnp.float32)

    mask_cache = {}

    def row_masks(BH, H):
        # per-image boundary masks for the +-1 row shifts (rows are ordered (b, h))
        assert H & (H - 1) == 0
        key = (BH, H)
        if key not in mask_cache:
            hh = lax.broadcasted_iota(jnp.int32, (BH, 1), 0) & (H - 1)
            mask_cache[key] = (hh != 0, hh != H - 1)
        return mask_cache[key]

    def kernel(z_ref, wcat_ref, cst_ref, out_ref):
        def ld(slot):
            off, r, c = slot
            return cst_ref[pl.ds(off, r), pl.ds(0, c)]

        def conv3x3(x, w_slots, b_slot, H, *, pre_act):
            # 3x3 'same' conv on a (B*H, W*Cin) slab: dy row shifts via roll + mask
            # (VPU/XLU), dx taps + W zero-padding pre-folded into 3 banded matmuls.
            xa = _leaky_relu(x) if pre_act else x
            m_top, m_bot = row_masks(xa.shape[0], H)
            x_m1 = jnp.where(m_top, jnp.roll(xa, 1, axis=0), 0.0)    # image row h-1
            x_p1 = jnp.where(m_bot, jnp.roll(xa, -1, axis=0), 0.0)   # image row h+1
            acc = (dot(x_m1, ld(w_slots[0])) + dot(xa, ld(w_slots[1]))
                   + dot(x_p1, ld(w_slots[2])))
            return acc + ld(b_slot)

        # ---- fc -> (B*s0, s0*nf0) slab; rows (b, h), lanes (w, c) ----
        zr = dot(ld(plan['fc_rrep']), z_ref[...])         # replicate z rows: (B*s0, zdim)
        y = dot(zr, wcat_ref[...])                        # all h blocks at once: (B*s0, s0*L0)
        hidx = lax.broadcasted_iota(jnp.int32, (B * s0, 1), 0) & (s0 - 1)
        x = ld(plan['fc_bias']).astype(jnp.float32)
        for h in range(s0):                               # pick lane block h for rows with h(r)==h
            x = x + jnp.where(hidx == h, y[:, h * L0:(h + 1) * L0], 0.0)

        # ---- resnet blocks (+ nearest 2x upsamples) ----
        for blk in plan['blocks']:
            H = blk['H']
            x_s = dot(x, ld(blk['shortcut'])) if blk['shortcut'] is not None else x
            dx = conv3x3(x, blk['w0'], blk['b0'], H, pre_act=True)
            dx = conv3x3(dx, blk['w1'], blk['b1'], H, pre_act=True)
            x = x_s + 0.1 * dx
            if blk['up'] is not None:
                wup, hup = blk['up']
                x = dot(ld(hup), dot(x, ld(wup)))         # nearest 2x upsample: W then H

        # ---- conv_img + tanh; img lanes are ordered (c, w) ----
        Ho = plan['H_out']
        C = plan['img_cout']
        W = Ho
        img = jnp.tanh(conv3x3(x, plan['wimg'], plan['bimg'], Ho, pre_act=True))

        # scatter directly into NCHW row order: out row (b*C + c)*H + h <- img[b*H+h, c*W+w]
        for b in range(B):
            for c in range(C):
                out_ref[pl.ds((b * C + c) * Ho, Ho), :] = \
                    img[b * Ho:(b + 1) * Ho, c * W:(c + 1) * W]

    return kernel


def generator_forward(plan, wcat_buf, const_buf, z):
    """Fused forward: one pallas_call; returns an NCHW image like the PyTorch module."""
    B, H, C = plan['B'], plan['H_out'], plan['img_cout']
    assert int(z.shape[0]) == B
    flat = pl.pallas_call(
        _make_fused_kernel(plan),
        out_shape=jax.ShapeDtypeStruct((B * C * H, H), jnp.float32),
    )(z, wcat_buf, const_buf)                 # 3 input DMAs, 1 output DMA, grid=()
    return flat.reshape(B, C, H, H)           # pure (bitcast) reshape -> NCHW, no transpose


# --------------------- raw parameter init (mirrors the torch module) ---------------------

def build_generator_params(key, z_dim, size=16, nfilter=8, nfilter_max=512, s0=4):
    nlayers = int(np.log2(size / s0))
    nf0 = min(nfilter_max, nfilter * 2 ** nlayers)
    keys = iter(jax.random.split(key, 128))

    def nrm(shape, fan_in):
        return (jax.random.normal(next(keys), shape, dtype=jnp.float32)
                / np.sqrt(fan_in)).astype(jnp.float32)

    def bias(n):
        return 0.1 * jax.random.normal(next(keys), (1, n), dtype=jnp.float32)

    params = {'s0': s0, 'nf0': nf0,
              'fc_w': nrm((z_dim, nf0 * s0 * s0), z_dim),
              'fc_b': bias(nf0 * s0 * s0),
              'blocks': []}

    def resblock(fin, fout, upsample):
        fh = min(fin, fout)
        blk = {'conv0_w': nrm((3, 3, fin, fh), 9 * fin), 'conv0_b': bias(fh),
               'conv1_w': nrm((3, 3, fh, fout), 9 * fh), 'conv1_b': bias(fout),
               'upsample': upsample}
        if fin != fout:
            blk['conv_s_w'] = nrm((fin, fout), fin)
        return blk

    for i in range(nlayers):
        fin = min(nfilter * 2 ** (nlayers - i), nfilter_max)
        fout = min(nfilter * 2 ** (nlayers - i - 1), nfilter_max)
        params['blocks'].append(resblock(fin, fout, upsample=True))
    params['blocks'].append(resblock(nfilter, nfilter, upsample=False))

    params['conv_img_w'] = nrm((3, 3, nfilter, 3), 9 * nfilter)
    params['conv_img_b'] = bias(3)
    return params


# --------------------- pure-JAX reference (f32, HIGHEST precision) ---------------------

def _conv3x3_ref(x, w, b):
    y = lax.conv_general_dilated(x, w, (1, 1), 'SAME',
                                 dimension_numbers=('NHWC', 'HWIO', 'NHWC'),
                                 precision=lax.Precision.HIGHEST)
    return y + b.reshape(1, 1, 1, -1)


def _conv1x1_ref(x, w):
    w4 = w.reshape(1, 1, w.shape[0], w.shape[1])
    return lax.conv_general_dilated(x, w4, (1, 1), 'SAME',
                                    dimension_numbers=('NHWC', 'HWIO', 'NHWC'),
                                    precision=lax.Precision.HIGHEST)


def _upsample2x_ref(x):
    return jnp.repeat(jnp.repeat(x, 2, axis=1), 2, axis=2)


def generator_forward_ref(params, z):
    s0, nf0 = params['s0'], params['nf0']
    B = z.shape[0]
    out = jnp.dot(z, params['fc_w'], precision=lax.Precision.HIGHEST) + params['fc_b']
    out = out.reshape(B, nf0, s0, s0).transpose(0, 2, 3, 1)
    for blk in params['blocks']:
        x_s = _conv1x1_ref(out, blk['conv_s_w']) if 'conv_s_w' in blk else out
        dx = _conv3x3_ref(_leaky_relu(out), blk['conv0_w'], blk['conv0_b'])
        dx = _conv3x3_ref(_leaky_relu(dx), blk['conv1_w'], blk['conv1_b'])
        out = x_s + 0.1 * dx
        if blk['upsample']:
            out = _upsample2x_ref(out)
    img = jnp.tanh(_conv3x3_ref(_leaky_relu(out),
                                params['conv_img_w'], params['conv_img_b']))
    return img.transpose(0, 3, 1, 2)


# --------------------- main ---------------------

if __name__ == "__main__":
    key = jax.random.PRNGKey(0)
    kz, kp = jax.random.split(key)

    B, Z_DIM, SIZE, NF = 2, 32, 16, 8          # size=16 -> two upsample stages (4 -> 8 -> 16)
    z = jax.random.normal(kz, (B, Z_DIM), dtype=jnp.float32)
    params = build_generator_params(kp, Z_DIM, size=SIZE, nfilter=NF)

    # one-time folding + packing of parameters (outside the kernel)
    plan, wcat_buf, const_buf = prepare_generator(params, B)

    # TODO(synk): prior_dist / sample_z and .to(device) are host-side concerns, not kernel ops.
    fwd = jax.jit(lambda z_, wc, cb: generator_forward(plan, wc, cb, z_))
    out = jax.block_until_ready(fwd(z, wcat_buf, const_buf))
    assert out.shape == (B, 3, SIZE, SIZE), out.shape

    ref = generator_forward_ref(params, z)
    # kernel uses bf16 multiplies / f32 accumulation (default MXU precision) vs the
    # f32 HIGHEST-precision reference, hence the loose tolerances.
    np.testing.assert_allclose(np.asarray(out), np.asarray(ref), rtol=5e-2, atol=5e-2)

    print("KERNEL_OK")
</pallas_src>

<mosaic_0001>
module attributes {stable_mosaic.version = 11 : i64} {
  func.func @kernel(%arg0: memref<2x32xf32, #tpu.memory_space<vmem>>, %arg1: memref<32x512xbf16, #tpu.memory_space<vmem>>, %arg2: memref<2880x128xbf16, #tpu.memory_space<vmem>>, %arg3: memref<96x16xf32, #tpu.memory_space<vmem>>) attributes {dimension_semantics = [], scalar_prefetch = 0 : i64, scratch_operands = 0 : i64, tpu.core_type = #tpu.core_type<tc>} {
    %c0 = arith.constant 0 : index
    %c0_0 = arith.constant 0 : index
    %0 = vector.load %arg2[%c0, %c0_0] : memref<2880x128xbf16, #tpu.memory_space<vmem>>, vector<8x2xbf16>
    %c0_1 = arith.constant 0 : index
    %c0_2 = arith.constant 0 : index
    %1 = vector.load %arg0[%c0_1, %c0_2] : memref<2x32xf32, #tpu.memory_space<vmem>>, vector<2x32xf32>
    %2 = arith.truncf %1 : vector<2x32xf32> to vector<2x32xbf16>
    %cst = arith.constant dense<0.000000e+00> : vector<8x32xf32>
    %3 = tpu.matmul %0, %2, %cst {dimension_numbers = #tpu.dot_dimension_numbers<[1], [0], [0], [1], [0, 0, 1, 1], [], []>} : vector<8x2xbf16>, vector<2x32xbf16>, vector<8x32xf32> -> vector<8x32xf32>
    %c0_3 = arith.constant 0 : index
    %c0_4 = arith.constant 0 : index
    %4 = vector.load %arg1[%c0_3, %c0_4] : memref<32x512xbf16, #tpu.memory_space<vmem>>, vector<32x512xbf16>
    %5 = arith.truncf %3 : vector<8x32xf32> to vector<8x32xbf16>
    %cst_5 = arith.constant dense<0.000000e+00> : vector<8x512xf32>
    %6 = tpu.matmul %5, %4, %cst_5 {dimension_numbers = #tpu.dot_dimension_numbers<[1], [0], [0], [1], [0, 0, 1, 1], [], []>} : vector<8x32xbf16>, vector<32x512xbf16>, vector<8x512xf32> -> vector<8x512xf32>
    %7 = tpu.iota {dimensions = array<i32: 0>} : vector<8x1xi32>
    %c3_i32 = arith.constant 3 : i32
    %8 = vector.broadcast %c3_i32 : i32 to vector<8x1xi32>
    %9 = arith.andi %7, %8 : vector<8x1xi32>
    %c16 = arith.constant 16 : index
    %c0_6 = arith.constant 0 : index
    %10 = vector.load %arg2[%c16, %c0_6] : memref<2880x128xbf16, #tpu.memory_space<vmem>>, vector<8x128xbf16>
    %11 = arith.extf %10 : vector<8x128xbf16> to vector<8x128xf32>
    %c0_i32 = arith.constant 0 : i32
    %12 = vector.broadcast %c0_i32 : i32 to vector<8x1xi32>
    %13 = arith.cmpi eq, %9, %12 : vector<8x1xi32>
    %14 = vector.extract_strided_slice %6 {offsets = [0, 0], sizes = [8, 128], strides = [1, 1]} : vector<8x512xf32> to vector<8x128xf32>
    %cst_7 = arith.constant 0.000000e+00 : f32
    %15 = vector.shape_cast %13 : vector<8x1xi1> to vector<8x1xi1>
    %16 = vector.broadcast %15 : vector<8x1xi1> to vector<8x128xi1>
    %17 = vector.broadcast %cst_7 : f32 to vector<8x128xf32>
    %18 = arith.select %16, %14, %17 : vector<8x128xi1>, vector<8x128xf32>
    %19 = arith.addf %11, %18 : vector<8x128xf32>
    %c1_i32 = arith.constant 1 : i32
    %20 = vector.broadcast %c1_i32 : i32 to vector<8x1xi32>
    %21 = arith.cmpi eq, %9, %20 : vector<8x1xi32>
    %22 = vector.extract_strided_slice %6 {offsets = [0, 128], sizes = [8, 128], strides = [1, 1]} : vector<8x512xf32> to vector<8x128xf32>
    %cst_8 = arith.constant 0.000000e+00 : f32
    %23 = vector.shape_cast %21 : vector<8x1xi1> to vector<8x1xi1>
    %24 = vector.broadcast %23 : vector<8x1xi1> to vector<8x128xi1>
    %25 = vector.broadcast %cst_8 : f32 to vector<8x128xf32>
    %26 = arith.select %24, %22, %25 : vector<8x128xi1>, vector<8x128xf32>
    %27 = arith.addf %19, %26 : vector<8x128xf32>
    %c2_i32 = arith.constant 2 : i32
    %28 = vector.broadcast %c2_i32 : i32 to vector<8x1xi32>
    %29 = arith.cmpi eq, %9, %28 : vector<8x1xi32>
    %30 = vector.extract_strided_slice %6 {offsets = [0, 256], sizes = [8, 128], strides = [1, 1]} : vector<8x512xf32> to vector<8x128xf32>
    %cst_9 = arith.constant 0.000000e+00 : f32
    %31 = vector.shape_cast %29 : vector<8x1xi1> to vector<8x1xi1>
    %32 = vector.broadcast %31 : vector<8x1xi1> to vector<8x128xi1>
    %33 = vector.broadcast %cst_9 : f32 to vector<8x128xf32>
    %34 = arith.select %32, %30, %33 : vector<8x128xi1>, vector<8x128xf32>
    %35 = arith.addf %27, %34 : vector<8x128xf32>
    %c3_i32_10 = arith.constant 3 : i32
    %36 = vector.broadcast %c3_i32_10 : i32 to vector<8x1xi32>
    %37 = arith.cmpi eq, %9, %36 : vector<8x1xi32>
    %38 = vector.extract_strided_slice %6 {offsets = [0, 384], sizes = [8, 128], strides = [1, 1]} : vector<8x512xf32> to vector<8x128xf32>
    %cst_11 = arith.constant 0.000000e+00 : f32
    %39 = vector.shape_cast %37 : vector<8x1xi1> to vector<8x1xi1>
    %40 = vector.broadcast %39 : vector<8x1xi1> to vector<8x128xi1>
    %41 = vector.broadcast %cst_11 : f32 to vector<8x128xf32>
    %42 = arith.select %40, %38, %41 : vector<8x128xi1>, vector<8x128xf32>
    %43 = arith.addf %35, %42 : vector<8x128xf32>
    %c640 = arith.constant 640 : index
    %c0_12 = arith.constant 0 : index
    %44 = vector.load %arg2[%c640, %c0_12] : memref<2880x128xbf16, #tpu.memory_space<vmem>>, vector<128x64xbf16>
    %45 = arith.truncf %43 : vector<8x128xf32> to vector<8x128xbf16>
    %cst_13 = arith.constant dense<0.000000e+00> : vector<8x64xf32>
    %46 = tpu.matmul %45, %44, %cst_13 {dimension_numbers = #tpu.dot_dimension_numbers<[1], [0], [0], [1], [0, 0, 1, 1], [], []>} : vector<8x128xbf16>, vector<128x64xbf16>, vector<8x64xf32> -> vector<8x64xf32>
    %cst_14 = arith.constant 0.000000e+00 : f32
    %47 = vector.broadcast %cst_14 : f32 to vector<8x128xf32>
    %48 = arith.cmpf ogt, %43, %47 : vector<8x128xf32>
    %cst_15 = arith.constant 2.000000e-01 : f32
    %49 = vector.broadcast %cst_15 : f32 to vector<8x128xf32>
    %50 = arith.mulf %49, %43 : vector<8x128xf32>
    %51 = arith.select %48, %43, %50 : vector<8x128xi1>, vector<8x128xf32>
    %52 = tpu.iota {dimensions = array<i32: 0>} : vector<8x1xi32>
    %c3_i32_16 = arith.constant 3 : i32
    %53 = vector.broadcast %c3_i32_16 : i32 to vector<8x1xi32>
    %54 = arith.andi %52, %53 : vector<8x1xi32>
    %c0_i32_17 = arith.constant 0 : i32
    %55 = vector.broadcast %c0_i32_17 : i32 to vector<8x1xi32>
    %56 = arith.cmpi ne, %54, %55 : vector<8x1xi32>
    %c3_i32_18 = arith.constant 3 : i32
    %57 = vector.broadcast %c3_i32_18 : i32 to vector<8x1xi32>
    %58 = arith.cmpi ne, %54, %57 : vector<8x1xi32>
    %59 = vector.extract_strided_slice %51 {offsets = [7, 0], sizes = [1, 128], strides = [1, 1]} : vector<8x128xf32> to vector<1x128xf32>
    %60 = vector.extract_strided_slice %51 {offsets = [0, 0], sizes = [7, 128], strides = [1, 1]} : vector<8x128xf32> to vector<7x128xf32>
    %61 = tpu.concatenate %59, %60 in 0 : vector<1x128xf32>, vector<7x128xf32> -> vector<8x128xf32>
    %cst_19 = arith.constant 0.000000e+00 : f32
    %62 = vector.shape_cast %56 : vector<8x1xi1> to vector<8x1xi1>
    %63 = vector.broadcast %62 : vector<8x1xi1> to vector<8x128xi1>
    %64 = vector.broadcast %cst_19 : f32 to vector<8x128xf32>
    %65 = arith.select %63, %61, %64 : vector<8x128xi1>, vector<8x128xf32>
    %66 = vector.extract_strided_slice %51 {offsets = [1, 0], sizes = [7, 128], strides = [1, 1]} : vector<8x128xf32> to vector<7x128xf32>
    %67 = vector.extract_strided_slice %51 {offsets = [0, 0], sizes = [1, 128], strides = [1, 1]} : vector<8x128xf32> to vector<1x128xf32>
    %68 = tpu.concatenate %66, %67 in 0 : vector<7x128xf32>, vector<1x128xf32> -> vector<8x128xf32>
    %cst_20 = arith.constant 0.000000e+00 : f32
    %69 = vector.shape_cast %58 : vector<8x1xi1> to vector<8x1xi1>
    %70 = vector.broadcast %69 : vector<8x1xi1> to vector<8x128xi1>
    %71 = vector.broadcast %cst_20 : f32 to vector<8x128xf32>
    %72 = arith.select %70, %68, %71 : vector<8x128xi1>, vector<8x128xf32>
    %c32 = arith.constant 32 : index
    %c0_21 = arith.constant 0 : index
    %73 = vector.load %arg2[%c32, %c0_21] : memref<2880x128xbf16, #tpu.memory_space<vmem>>, vector<128x64xbf16>
    %74 = arith.truncf %65 : vector<8x128xf32> to vector<8x128xbf16>
    %cst_22 = arith.constant dense<0.000000e+00> : vector<8x64xf32>
    %75 = tpu.matmul %74, %73, %cst_22 {dimension_numbers = #tpu.dot_dimension_numbers<[1], [0], [0], [1], [0, 0, 1, 1], [], []>} : vector<8x128xbf16>, vector<128x64xbf16>, vector<8x64xf32> -> vector<8x64xf32>
    %c160 = arith.constant 160 : index
    %c0_23 = arith.constant 0 : index
    %76 = vector.load %arg2[%c160, %c0_23] : memref<2880x128xbf16, #tpu.memory_space<vmem>>, vector<128x64xbf16>
    %77 = arith.truncf %51 : vector<8x128xf32> to vector<8x128xbf16>
    %cst_24 = arith.constant dense<0.000000e+00> : vector<8x64xf32>
    %78 = tpu.matmul %77, %76, %cst_24 {dimension_numbers = #tpu.dot_dimension_numbers<[1], [0], [0], [1], [0, 0, 1, 1], [], []>} : vector<8x128xbf16>, vector<128x64xbf16>, vector<8x64xf32> -> vector<8x64xf32>
    %79 = arith.addf %75, %78 : vector<8x64xf32>
    %c288 = arith.constant 288 : index
    %c0_25 = arith.constant 0 : index
    %80 = vector.load %arg2[%c288, %c0_25] : memref<2880x128xbf16, #tpu.memory_space<vmem>>, vector<128x64xbf16>
    %81 = arith.truncf %72 : vector<8x128xf32> to vector<8x128xbf16>
    %cst_26 = arith.constant dense<0.000000e+00> : vector<8x64xf32>
    %82 = tpu.matmul %81, %80, %cst_26 {dimension_numbers = #tpu.dot_dimension_numbers<[1], [0], [0], [1], [0, 0, 1, 1], [], []>} : vector<8x128xbf16>, vector<128x64xbf16>, vector<8x64xf32> -> vector<8x64xf32>
    %83 = arith.addf %79, %82 : vector<8x64xf32>
    %c416 = arith.constant 416 : index
    %c0_27 = arith.constant 0 : index
    %84 = vector.load %arg2[%c416, %c0_27] : memref<2880x128xbf16, #tpu.memory_space<vmem>>, vector<1x64xbf16>
    %85 = arith.extf %84 : vector<1x64xbf16> to vector<1x64xf32>
    %86 = vector.broadcast %85 : vector<1x64xf32> to vector<8x64xf32>
    %87 = arith.addf %83, %86 : vector<8x64xf32>
    %cst_28 = arith.constant 0.000000e+00 : f32
    %88 = vector.broadcast %cst_28 : f32 to vector<8x64xf32>
    %89 = arith.cmpf ogt, %87, %88 : vector<8x64xf32>
    %cst_29 = arith.constant 2.000000e-01 : f32
    %90 = vector.broadcast %cst_29 : f32 to vector<8x64xf32>
    %91 = arith.mulf %90, %87 : vector<8x64xf32>
    %92 = arith.select %89, %87, %91 : vector<8x64xi1>, vector<8x64xf32>
    %93 = vector.extract_strided_slice %92 {offsets = [7, 0], sizes = [1, 64], strides = [1, 1]} : vector<8x64xf32> to vector<1x64xf32>
    %94 = vector.extract_strided_slice %92 {offsets = [0, 0], sizes = [7, 64], strides = [1, 1]} : vector<8x64xf32> to vector<7x64xf32>
    %95 = tpu.concatenate %93, %94 in 0 : vector<1x64xf32>, vector<7x64xf32> -> vector<8x64xf32>
    %cst_30 = arith.constant 0.000000e+00 : f32
    %96 = vector.shape_cast %56 : vector<8x1xi1> to vector<8x1xi1>
    %97 = vector.broadcast %96 : vector<8x1xi1> to vector<8x64xi1>
    %98 = vector.broadcast %cst_30 : f32 to vector<8x64xf32>
    %99 = arith.select %97, %95, %98 : vector<8x64xi1>, vector<8x64xf32>
    %100 = vector.extract_strided_slice %92 {offsets = [1, 0], sizes = [7, 64], strides = [1, 1]} : vector<8x64xf32> to vector<7x64xf32>
    %101 = vector.extract_strided_slice %92 {offsets = [0, 0], sizes = [1, 64], strides = [1, 1]} : vector<8x64xf32> to vector<1x64xf32>
    %102 = tpu.concatenate %100, %101 in 0 : vector<7x64xf32>, vector<1x64xf32> -> vector<8x64xf32>
    %cst_31 = arith.constant 0.000000e+00 : f32
    %103 = vector.shape_cast %58 : vector<8x1xi1> to vector<8x1xi1>
    %104 = vector.broadcast %103 : vector<8x1xi1> to vector<8x64xi1>
    %105 = vector.broadcast %cst_31 : f32 to vector<8x64xf32>
    %106 = arith.select %104, %102, %105 : vector<8x64xi1>, vector<8x64xf32>
    %c432 = arith.constant 432 : index
    %c0_32 = arith.constant 0 : index
    %107 = vector.load %arg2[%c432, %c0_32] : memref<2880x128xbf16, #tpu.memory_space<vmem>>, vector<64x64xbf16>
    %108 = arith.truncf %99 : vector<8x64xf32> to vector<8x64xbf16>
    %cst_33 = arith.constant dense<0.000000e+00> : vector<8x64xf32>
    %109 = tpu.matmul %108, %107, %cst_33 {dimension_numbers = #tpu.dot_dimension_numbers<[1], [0], [0], [1], [0, 0, 1, 1], [], []>} : vector<8x64xbf16>, vector<64x64xbf16>, vector<8x64xf32> -> vector<8x64xf32>
    %c496 = arith.constant 496 : index
    %c0_34 = arith.constant 0 : index
    %110 = vector.load %arg2[%c496, %c0_34] : memref<2880x128xbf16, #tpu.memory_space<vmem>>, vector<64x64xbf16>
    %111 = arith.truncf %92 : vector<8x64xf32> to vector<8x64xbf16>
    %cst_35 = arith.constant dense<0.000000e+00> : vector<8x64xf32>
    %112 = tpu.matmul %111, %110, %cst_35 {dimension_numbers = #tpu.dot_dimension_numbers<[1], [0], [0], [1], [0, 0, 1, 1], [], []>} : vector<8x64xbf16>, vector<64x64xbf16>, vector<8x64xf32> -> vector<8x64xf32>
    %113 = arith.addf %109, %112 : vector<8x64xf32>
    %c560 = arith.constant 560 : index
    %c0_36 = arith.constant 0 : index
    %114 = vector.load %arg2[%c560, %c0_36] : memref<2880x128xbf16, #tpu.memory_space<vmem>>, vector<64x64xbf16>
    %115 = arith.truncf %106 : vector<8x64xf32> to vector<8x64xbf16>
    %cst_37 = arith.constant dense<0.000000e+00> : vector<8x64xf32>
    %116 = tpu.matmul %115, %114, %cst_37 {dimension_numbers = #tpu.dot_dimension_numbers<[1], [0], [0], [1], [0, 0, 1, 1], [], []>} : vector<8x64xbf16>, vector<64x64xbf16>, vector<8x64xf32> -> vector<8x64xf32>
    %117 = arith.addf %113, %116 : vector<8x64xf32>
    %c624 = arith.constant 624 : index
    %c0_38 = arith.constant 0 : index
    %118 = vector.load %arg2[%c624, %c0_38] : memref<2880x128xbf16, #tpu.memory_space<vmem>>, vector<1x64xbf16>
    %119 = arith.extf %118 : vector<1x64xbf16> to vector<1x64xf32>
    %120 = vector.broadcast %119 : vector<1x64xf32> to vector<8x64xf32>
    %121 = arith.addf %117, %120 : vector<8x64xf32>
    %cst_39 = arith.constant 1.000000e-01 : f32
    %122 = vector.broadcast %cst_39 : f32 to vector<8x64xf32>
    %123 = arith.mulf %122, %121 : vector<8x64xf32>
    %124 = arith.addf %46, %123 : vector<8x64xf32>
    %c832 = arith.constant 832 : index
    %c0_40 = arith.constant 0 : index
    %125 = vector.load %arg2[%c832, %c0_40] : memref<2880x128xbf16, #tpu.memory_space<vmem>>, vector<16x8xbf16>
    %c768 = arith.constant 768 : index
    %c0_41 = arith.constant 0 : index
    %126 = vector.load %arg2[%c768, %c0_41] : memref<2880x128xbf16, #tpu.memory_space<vmem>>, vector<64x128xbf16>
    %127 = arith.truncf %124 : vector<8x64xf32> to vector<8x64xbf16>
    %cst_42 = arith.constant dense<0.000000e+00> : vector<8x128xf32>
    %128 = tpu.matmul %127, %126, %cst_42 {dimension_numbers = #tpu.dot_dimension_numbers<[1], [0], [0], [1], [0, 0, 1, 1], [], []>} : vector<8x64xbf16>, vector<64x128xbf16>, vector<8x128xf32> -> vector<8x128xf32>
    %129 = arith.truncf %128 : vector<8x128xf32> to vector<8x128xbf16>
    %cst_43 = arith.constant dense<0.000000e+00> : vector<16x128xf32>
    %130 = tpu.matmul %125, %129, %cst_43 {dimension_numbers = #tpu.dot_dimension_numbers<[1], [0], [0], [1], [0, 0, 1, 1], [], []>} : vector<16x8xbf16>, vector<8x128xbf16>, vector<16x128xf32> -> vector<16x128xf32>
    %c1456 = arith.constant 1456 : index
    %c0_44 = arith.constant 0 : index
    %131 = vector.load %arg2[%c1456, %c0_44] : memref<2880x128xbf16, #tpu.memory_space<vmem>>, vector<128x64xbf16>
    %132 = arith.truncf %130 : vector<16x128xf32> to vector<16x128xbf16>
    %cst_45 = arith.constant dense<0.000000e+00> : vector<16x64xf32>
    %133 = tpu.matmul %132, %131, %cst_45 {dimension_numbers = #tpu.dot_dimension_numbers<[1], [0], [0], [1], [0, 0, 1, 1], [], []>} : vector<16x128xbf16>, vector<128x64xbf16>, vector<16x64xf32> -> vector<16x64xf32>
    %cst_46 = arith.constant 0.000000e+00 : f32
    %134 = vector.broadcast %cst_46 : f32 to vector<16x128xf32>
    %135 = arith.cmpf ogt, %130, %134 : vector<16x128xf32>
    %cst_47 = arith.constant 2.000000e-01 : f32
    %136 = vector.broadcast %cst_47 : f32 to vector<16x128xf32>
    %137 = arith.mulf %136, %130 : vector<16x128xf32>
    %138 = arith.select %135, %130, %137 : vector<16x128xi1>, vector<16x128xf32>
    %139 = tpu.iota {dimensions = array<i32: 0>} : vector<16x1xi32>
    %c7_i32 = arith.constant 7 : i32
    %140 = vector.broadcast %c7_i32 : i32 to vector<16x1xi32>
    %141 = arith.andi %139, %140 : vector<16x1xi32>
    %c0_i32_48 = arith.constant 0 : i32
    %142 = vector.broadcast %c0_i32_48 : i32 to vector<16x1xi32>
    %143 = arith.cmpi ne, %141, %142 : vector<16x1xi32>
    %c7_i32_49 = arith.constant 7 : i32
    %144 = vector.broadcast %c7_i32_49 : i32 to vector<16x1xi32>
    %145 = arith.cmpi ne, %141, %144 : vector<16x1xi32>
    %146 = vector.extract_strided_slice %138 {offsets = [15, 0], sizes = [1, 128], strides = [1, 1]} : vector<16x128xf32> to vector<1x128xf32>
    %147 = vector.extract_strided_slice %138 {offsets = [0, 0], sizes = [15, 128], strides = [1, 1]} : vector<16x128xf32> to vector<15x128xf32>
    %148 = tpu.concatenate %146, %147 in 0 : vector<1x128xf32>, vector<15x128xf32> -> vector<16x128xf32>
    %cst_50 = arith.constant 0.000000e+00 : f32
    %149 = vector.shape_cast %143 : vector<16x1xi1> to vector<16x1xi1>
    %150 = vector.broadcast %149 : vector<16x1xi1> to vector<16x128xi1>
    %151 = vector.broadcast %cst_50 : f32 to vector<16x128xf32>
    %152 = arith.select %150, %148, %151 : vector<16x128xi1>, vector<16x128xf32>
    %153 = vector.extract_strided_slice %138 {offsets = [1, 0], sizes = [15, 128], strides = [1, 1]} : vector<16x128xf32> to vector<15x128xf32>
    %154 = vector.extract_strided_slice %138 {offsets = [0, 0], sizes = [1, 128], strides = [1, 1]} : vector<16x128xf32> to vector<1x128xf32>
    %155 = tpu.concatenate %153, %154 in 0 : vector<15x128xf32>, vector<1x128xf32> -> vector<16x128xf32>
    %cst_51 = arith.constant 0.000000e+00 : f32
    %156 = vector.shape_cast %145 : vector<16x1xi1> to vector<16x1xi1>
    %157 = vector.broadcast %156 : vector<16x1xi1> to vector<16x128xi1>
    %158 = vector.broadcast %cst_51 : f32 to vector<16x128xf32>
    %159 = arith.select %157, %155, %158 : vector<16x128xi1>, vector<16x128xf32>
    %c848 = arith.constant 848 : index
    %c0_52 = arith.constant 0 : index
    %160 = vector.load %arg2[%c848, %c0_52] : memref<2880x128xbf16, #tpu.memory_space<vmem>>, vector<128x64xbf16>
    %161 = arith.truncf %152 : vector<16x128xf32> to vector<16x128xbf16>
    %cst_53 = arith.constant dense<0.000000e+00> : vector<16x64xf32>
    %162 = tpu.matmul %161, %160, %cst_53 {dimension_numbers = #tpu.dot_dimension_numbers<[1], [0], [0], [1], [0, 0, 1, 1], [], []>} : vector<16x128xbf16>, vector<128x64xbf16>, vector<16x64xf32> -> vector<16x64xf32>
    %c976 = arith.constant 976 : index
    %c0_54 = arith.constant 0 : index
    %163 = vector.load %arg2[%c976, %c0_54] : memref<2880x128xbf16, #tpu.memory_space<vmem>>, vector<128x64xbf16>
    %164 = arith.truncf %138 : vector<16x128xf32> to vector<16x128xbf16>
    %cst_55 = arith.constant dense<0.000000e+00> : vector<16x64xf32>
    %165 = tpu.matmul %164, %163, %cst_55 {dimension_numbers = #tpu.dot_dimension_numbers<[1], [0], [0], [1], [0, 0, 1, 1], [], []>} : vector<16x128xbf16>, vector<128x64xbf16>, vector<16x64xf32> -> vector<16x64xf32>
    %166 = arith.addf %162, %165 : vector<16x64xf32>
    %c1104 = arith.constant 1104 : index
    %c0_56 = arith.constant 0 : index
    %167 = vector.load %arg2[%c1104, %c0_56] : memref<2880x128xbf16, #tpu.memory_space<vmem>>, vector<128x64xbf16>
    %168 = arith.truncf %159 : vector<16x128xf32> to vector<16x128xbf16>
    %cst_57 = arith.constant dense<0.000000e+00> : vector<16x64xf32>
    %169 = tpu.matmul %168, %167, %cst_57 {dimension_numbers = #tpu.dot_dimension_numbers<[1], [0], [0], [1], [0, 0, 1, 1], [], []>} : vector<16x128xbf16>, vector<128x64xbf16>, vector<16x64xf32> -> vector<16x64xf32>
    %170 = arith.addf %166, %169 : vector<16x64xf32>
    %c1232 = arith.constant 1232 : index
    %c0_58 = arith.constant 0 : index
    %171 = vector.load %arg2[%c1232, %c0_58] : memref<2880x128xbf16, #tpu.memory_space<vmem>>, vector<1x64xbf16>
    %172 = arith.extf %171 : vector<1x64xbf16> to vector<1x64xf32>
    %173 = vector.broadcast %172 : vector<1x64xf32> to vector<16x64xf32>
    %174 = arith.addf %170, %173 : vector<16x64xf32>
    %cst_59 = arith.constant 0.000000e+00 : f32
    %175 = vector.broadcast %cst_59 : f32 to vector<16x64xf32>
    %176 = arith.cmpf ogt, %174, %175 : vector<16x64xf32>
    %cst_60 = arith.constant 2.000000e-01 : f32
    %177 = vector.broadcast %cst_60 : f32 to vector<16x64xf32>
    %178 = arith.mulf %177, %174 : vector<16x64xf32>
    %179 = arith.select %176, %174, %178 : vector<16x64xi1>, vector<16x64xf32>
    %180 = vector.extract_strided_slice %179 {offsets = [15, 0], sizes = [1, 64], strides = [1, 1]} : vector<16x64xf32> to vector<1x64xf32>
    %181 = vector.extract_strided_slice %179 {offsets = [0, 0], sizes = [15, 64], strides = [1, 1]} : vector<16x64xf32> to vector<15x64xf32>
    %182 = tpu.concatenate %180, %181 in 0 : vector<1x64xf32>, vector<15x64xf32> -> vector<16x64xf32>
    %cst_61 = arith.constant 0.000000e+00 : f32
    %183 = vector.shape_cast %143 : vector<16x1xi1> to vector<16x1xi1>
    %184 = vector.broadcast %183 : vector<16x1xi1> to vector<16x64xi1>
    %185 = vector.broadcast %cst_61 : f32 to vector<16x64xf32>
    %186 = arith.select %184, %182, %185 : vector<16x64xi1>, vector<16x64xf32>
    %187 = vector.extract_strided_slice %179 {offsets = [1, 0], sizes = [15, 64], strides = [1, 1]} : vector<16x64xf32> to vector<15x64xf32>
    %188 = vector.extract_strided_slice %179 {offsets = [0, 0], sizes = [1, 64], strides = [1, 1]} : vector<16x64xf32> to vector<1x64xf32>
    %189 = tpu.concatenate %187, %188 in 0 : vector<15x64xf32>, vector<1x64xf32> -> vector<16x64xf32>
    %cst_62 = arith.constant 0.000000e+00 : f32
    %190 = vector.shape_cast %145 : vector<16x1xi1> to vector<16x1xi1>
    %191 = vector.broadcast %190 : vector<16x1xi1> to vector<16x64xi1>
    %192 = vector.broadcast %cst_62 : f32 to vector<16x64xf32>
    %193 = arith.select %191, %189, %192 : vector<16x64xi1>, vector<16x64xf32>
    %c1248 = arith.constant 1248 : index
    %c0_63 = arith.constant 0 : index
    %194 = vector.load %arg2[%c1248, %c0_63] : memref<2880x128xbf16, #tpu.memory_space<vmem>>, vector<64x64xbf16>
    %195 = arith.truncf %186 : vector<16x64xf32> to vector<16x64xbf16>
    %cst_64 = arith.constant dense<0.000000e+00> : vector<16x64xf32>
    %196 = tpu.matmul %195, %194, %cst_64 {dimension_numbers = #tpu.dot_dimension_numbers<[1], [0], [0], [1], [0, 0, 1, 1], [], []>} : vector<16x64xbf16>, vector<64x64xbf16>, vector<16x64xf32> -> vector<16x64xf32>
    %c1312 = arith.constant 1312 : index
    %c0_65 = arith.constant 0 : index
    %197 = vector.load %arg2[%c1312, %c0_65] : memref<2880x128xbf16, #tpu.memory_space<vmem>>, vector<64x64xbf16>
    %198 = arith.truncf %179 : vector<16x64xf32> to vector<16x64xbf16>
    %cst_66 = arith.constant dense<0.000000e+00> : vector<16x64xf32>
    %199 = tpu.matmul %198, %197, %cst_66 {dimension_numbers = #tpu.dot_dimension_numbers<[1], [0], [0], [1], [0, 0, 1, 1], [], []>} : vector<16x64xbf16>, vector<64x64xbf16>, vector<16x64xf32> -> vector<16x64xf32>
    %200 = arith.addf %196, %199 : vector<16x64xf32>
    %c1376 = arith.constant 1376 : index
    %c0_67 = arith.constant 0 : index
    %201 = vector.load %arg2[%c1376, %c0_67] : memref<2880x128xbf16, #tpu.memory_space<vmem>>, vector<64x64xbf16>
    %202 = arith.truncf %193 : vector<16x64xf32> to vector<16x64xbf16>
    %cst_68 = arith.constant dense<0.000000e+00> : vector<16x64xf32>
    %203 = tpu.matmul %202, %201, %cst_68 {dimension_numbers = #tpu.dot_dimension_numbers<[1], [0], [0], [1], [0, 0, 1, 1], [], []>} : vector<16x64xbf16>, vector<64x64xbf16>, vector<16x64xf32> -> vector<16x64xf32>
    %204 = arith.addf %200, %203 : vector<16x64xf32>
    %c1440 = arith.constant 1440 : index
    %c0_69 = arith.constant 0 : index
    %205 = vector.load %arg2[%c1440, %c0_69] : memref<2880x128xbf16, #tpu.memory_space<vmem>>, vector<1x64xbf16>
    %206 = arith.extf %205 : vector<1x64xbf16> to vector<1x64xf32>
    %207 = vector.broadcast %206 : vector<1x64xf32> to vector<16x64xf32>
    %208 = arith.addf %204, %207 : vector<16x64xf32>
    %cst_70 = arith.constant 1.000000e-01 : f32
    %209 = vector.broadcast %cst_70 : f32 to vector<16x64xf32>
    %210 = arith.mulf %209, %208 : vector<16x64xf32>
    %211 = arith.addf %133, %210 : vector<16x64xf32>
    %c1648 = arith.constant 1648 : index
    %c0_71 = arith.constant 0 : index
    %212 = vector.load %arg2[%c1648, %c0_71] : memref<2880x128xbf16, #tpu.memory_space<vmem>>, vector<32x16xbf16>
    %c1584 = arith.constant 1584 : index
    %c0_72 = arith.constant 0 : index
    %213 = vector.load %arg2[%c1584, %c0_72] : memref<2880x128xbf16, #tpu.memory_space<vmem>>, vector<64x128xbf16>
    %214 = arith.truncf %211 : vector<16x64xf32> to vector<16x64xbf16>
    %cst_73 = arith.constant dense<0.000000e+00> : vector<16x128xf32>
    %215 = tpu.matmul %214, %213, %cst_73 {dimension_numbers = #tpu.dot_dimension_numbers<[1], [0], [0], [1], [0, 0, 1, 1], [], []>} : vector<16x64xbf16>, vector<64x128xbf16>, vector<16x128xf32> -> vector<16x128xf32>
    %216 = arith.truncf %215 : vector<16x128xf32> to vector<16x128xbf16>
    %cst_74 = arith.constant dense<0.000000e+00> : vector<32x128xf32>
    %217 = tpu.matmul %212, %216, %cst_74 {dimension_numbers = #tpu.dot_dimension_numbers<[1], [0], [0], [1], [0, 0, 1, 1], [], []>} : vector<32x16xbf16>, vector<16x128xbf16>, vector<32x128xf32> -> vector<32x128xf32>
    %cst_75 = arith.constant 0.000000e+00 : f32
    %218 = vector.broadcast %cst_75 : f32 to vector<32x128xf32>
    %219 = arith.cmpf ogt, %217, %218 : vector<32x128xf32>
    %cst_76 = arith.constant 2.000000e-01 : f32
    %220 = vector.broadcast %cst_76 : f32 to vector<32x128xf32>
    %221 = arith.mulf %220, %217 : vector<32x128xf32>
    %222 = arith.select %219, %217, %221 : vector<32x128xi1>, vector<32x128xf32>
    %223 = tpu.iota {dimensions = array<i32: 0>} : vector<32x1xi32>
    %c15_i32 = arith.constant 15 : i32
    %224 = vector.broadcast %c15_i32 : i32 to vector<32x1xi32>
    %225 = arith.andi %223, %224 : vector<32x1xi32>
    %c0_i32_77 = arith.constant 0 : i32
    %226 = vector.broadcast %c0_i32_77 : i32 to vector<32x1xi32>
    %227 = arith.cmpi ne, %225, %226 : vector<32x1xi32>
    %c15_i32_78 = arith.constant 15 : i32
    %228 = vector.broadcast %c15_i32_78 : i32 to vector<32x1xi32>
    %229 = arith.cmpi ne, %225, %228 : vector<32x1xi32>
    %230 = vector.extract_strided_slice %222 {offsets = [31, 0], sizes = [1, 128], strides = [1, 1]} : vector<32x128xf32> to vector<1x128xf32>
    %231 = vector.extract_strided_slice %222 {offsets = [0, 0], sizes = [31, 128], strides = [1, 1]} : vector<32x128xf32> to vector<31x128xf32>
    %232 = tpu.concatenate %230, %231 in 0 : vector<1x128xf32>, vector<31x128xf32> -> vector<32x128xf32>
    %cst_79 = arith.constant 0.000000e+00 : f32
    %233 = vector.shape_cast %227 : vector<32x1xi1> to vector<32x1xi1>
    %234 = vector.broadcast %233 : vector<32x1xi1> to vector<32x128xi1>
    %235 = vector.broadcast %cst_79 : f32 to vector<32x128xf32>
    %236 = arith.select %234, %232, %235 : vector<32x128xi1>, vector<32x128xf32>
    %237 = vector.extract_strided_slice %222 {offsets = [1, 0], sizes = [31, 128], strides = [1, 1]} : vector<32x128xf32> to vector<31x128xf32>
    %238 = vector.extract_strided_slice %222 {offsets = [0, 0], sizes = [1, 128], strides = [1, 1]} : vector<32x128xf32> to vector<1x128xf32>
    %239 = tpu.concatenate %237, %238 in 0 : vector<31x128xf32>, vector<1x128xf32> -> vector<32x128xf32>
    %cst_80 = arith.constant 0.000000e+00 : f32
    %240 = vector.shape_cast %229 : vector<32x1xi1> to vector<32x1xi1>
    %241 = vector.broadcast %240 : vector<32x1xi1> to vector<32x128xi1>
    %242 = vector.broadcast %cst_80 : f32 to vector<32x128xf32>
    %243 = arith.select %241, %239, %242 : vector<32x128xi1>, vector<32x128xf32>
    %c1680 = arith.constant 1680 : index
    %c0_81 = arith.constant 0 : index
    %244 = vector.load %arg2[%c1680, %c0_81] : memref<2880x128xbf16, #tpu.memory_space<vmem>>, vector<128x128xbf16>
    %245 = arith.truncf %236 : vector<32x128xf32> to vector<32x128xbf16>
    %cst_82 = arith.constant dense<0.000000e+00> : vector<32x128xf32>
    %246 = tpu.matmul %245, %244, %cst_82 {dimension_numbers = #tpu.dot_dimension_numbers<[1], [0], [0], [1], [0, 0, 1, 1], [], []>} : vector<32x128xbf16>, vector<128x128xbf16>, vector<32x128xf32> -> vector<32x128xf32>
    %c1808 = arith.constant 1808 : index
    %c0_83 = arith.constant 0 : index
    %247 = vector.load %arg2[%c1808, %c0_83] : memref<2880x128xbf16, #tpu.memory_space<vmem>>, vector<128x128xbf16>
    %248 = arith.truncf %222 : vector<32x128xf32> to vector<32x128xbf16>
    %cst_84 = arith.constant dense<0.000000e+00> : vector<32x128xf32>
    %249 = tpu.matmul %248, %247, %cst_84 {dimension_numbers = #tpu.dot_dimension_numbers<[1], [0], [0], [1], [0, 0, 1, 1], [], []>} : vector<32x128xbf16>, vector<128x128xbf16>, vector<32x128xf32> -> vector<32x128xf32>
    %250 = arith.addf %246, %249 : vector<32x128xf32>
    %c1936 = arith.constant 1936 : index
    %c0_85 = arith.constant 0 : index
    %251 = vector.load %arg2[%c1936, %c0_85] : memref<2880x128xbf16, #tpu.memory_space<vmem>>, vector<128x128xbf16>
    %252 = arith.truncf %243 : vector<32x128xf32> to vector<32x128xbf16>
    %cst_86 = arith.constant dense<0.000000e+00> : vector<32x128xf32>
    %253 = tpu.matmul %252, %251, %cst_86 {dimension_numbers = #tpu.dot_dimension_numbers<[1], [0], [0], [1], [0, 0, 1, 1], [], []>} : vector<32x128xbf16>, vector<128x128xbf16>, vector<32x128xf32> -> vector<32x128xf32>
    %254 = arith.addf %250, %253 : vector<32x128xf32>
    %c2064 = arith.constant 2064 : index
    %c0_87 = arith.constant 0 : index
    %255 = vector.load %arg2[%c2064, %c0_87] : memref<2880x128xbf16, #tpu.memory_space<vmem>>, vector<1x128xbf16>
    %256 = arith.extf %255 : vector<1x128xbf16> to vector<1x128xf32>
    %257 = vector.broadcast %256 : vector<1x128xf32> to vector<32x128xf32>
    %258 = arith.addf %254, %257 : vector<32x128xf32>
    %cst_88 = arith.constant 0.000000e+00 : f32
    %259 = vector.broadcast %cst_88 : f32 to vector<32x128xf32>
    %260 = arith.cmpf ogt, %258, %259 : vector<32x128xf32>
    %cst_89 = arith.constant 2.000000e-01 : f32
    %261 = vector.broadcast %cst_89 : f32 to vector<32x128xf32>
    %262 = arith.mulf %261, %258 : vector<32x128xf32>
    %263 = arith.select %260, %258, %262 : vector<32x128xi1>, vector<32x128xf32>
    %264 = vector.extract_strided_slice %263 {offsets = [31, 0], sizes = [1, 128], strides = [1, 1]} : vector<32x128xf32> to vector<1x128xf32>
    %265 = vector.extract_strided_slice %263 {offsets = [0, 0], sizes = [31, 128], strides = [1, 1]} : vector<32x128xf32> to vector<31x128xf32>
    %266 = tpu.concatenate %264, %265 in 0 : vector<1x128xf32>, vector<31x128xf32> -> vector<32x128xf32>
    %cst_90 = arith.constant 0.000000e+00 : f32
    %267 = vector.shape_cast %227 : vector<32x1xi1> to vector<32x1xi1>
    %268 = vector.broadcast %267 : vector<32x1xi1> to vector<32x128xi1>
    %269 = vector.broadcast %cst_90 : f32 to vector<32x128xf32>
    %270 = arith.select %268, %266, %269 : vector<32x128xi1>, vector<32x128xf32>
    %271 = vector.extract_strided_slice %263 {offsets = [1, 0], sizes = [31, 128], strides = [1, 1]} : vector<32x128xf32> to vector<31x128xf32>
    %272 = vector.extract_strided_slice %263 {offsets = [0, 0], sizes = [1, 128], strides = [1, 1]} : vector<32x128xf32> to vector<1x128xf32>
    %273 = tpu.concatenate %271, %272 in 0 : vector<31x128xf32>, vector<1x128xf32> -> vector<32x128xf32>
    %cst_91 = arith.constant 0.000000e+00 : f32
    %274 = vector.shape_cast %229 : vector<32x1xi1> to vector<32x1xi1>
    %275 = vector.broadcast %274 : vector<32x1xi1> to vector<32x128xi1>
    %276 = vector.broadcast %cst_91 : f32 to vector<32x128xf32>
    %277 = arith.select %275, %273, %276 : vector<32x128xi1>, vector<32x128xf32>
    %c2080 = arith.constant 2080 : index
    %c0_92 = arith.constant 0 : index
    %278 = vector.load %arg2[%c2080, %c0_92] : memref<2880x128xbf16, #tpu.memory_space<vmem>>, vector<128x128xbf16>
    %279 = arith.truncf %270 : vector<32x128xf32> to vector<32x128xbf16>
    %cst_93 = arith.constant dense<0.000000e+00> : vector<32x128xf32>
    %280 = tpu.matmul %279, %278, %cst_93 {dimension_numbers = #tpu.dot_dimension_numbers<[1], [0], [0], [1], [0, 0, 1, 1], [], []>} : vector<32x128xbf16>, vector<128x128xbf16>, vector<32x128xf32> -> vector<32x128xf32>
    %c2208 = arith.constant 2208 : index
    %c0_94 = arith.constant 0 : index
    %281 = vector.load %arg2[%c2208, %c0_94] : memref<2880x128xbf16, #tpu.memory_space<vmem>>, vector<128x128xbf16>
    %282 = arith.truncf %263 : vector<32x128xf32> to vector<32x128xbf16>
    %cst_95 = arith.constant dense<0.000000e+00> : vector<32x128xf32>
    %283 = tpu.matmul %282, %281, %cst_95 {dimension_numbers = #tpu.dot_dimension_numbers<[1], [0], [0], [1], [0, 0, 1, 1], [], []>} : vector<32x128xbf16>, vector<128x128xbf16>, vector<32x128xf32> -> vector<32x128xf32>
    %284 = arith.addf %280, %283 : vector<32x128xf32>
    %c2336 = arith.constant 2336 : index
    %c0_96 = arith.constant 0 : index
    %285 = vector.load %arg2[%c2336, %c0_96] : memref<2880x128xbf16, #tpu.memory_space<vmem>>, vector<128x128xbf16>
    %286 = arith.truncf %277 : vector<32x128xf32> to vector<32x128xbf16>
    %cst_97 = arith.constant dense<0.000000e+00> : vector<32x128xf32>
    %287 = tpu.matmul %286, %285, %cst_97 {dimension_numbers = #tpu.dot_dimension_numbers<[1], [0], [0], [1], [0, 0, 1, 1], [], []>} : vector<32x128xbf16>, vector<128x128xbf16>, vector<32x128xf32> -> vector<32x128xf32>
    %288 = arith.addf %284, %287 : vector<32x128xf32>
    %c2464 = arith.constant 2464 : index
    %c0_98 = arith.constant 0 : index
    %289 = vector.load %arg2[%c2464, %c0_98] : memref<2880x128xbf16, #tpu.memory_space<vmem>>, vector<1x128xbf16>
    %290 = arith.extf %289 : vector<1x128xbf16> to vector<1x128xf32>
    %291 = vector.broadcast %290 : vector<1x128xf32> to vector<32x128xf32>
    %292 = arith.addf %288, %291 : vector<32x128xf32>
    %cst_99 = arith.constant 1.000000e-01 : f32
    %293 = vector.broadcast %cst_99 : f32 to vector<32x128xf32>
    %294 = arith.mulf %293, %292 : vector<32x128xf32>
    %295 = arith.addf %217, %294 : vector<32x128xf32>
    %cst_100 = arith.constant 0.000000e+00 : f32
    %296 = vector.broadcast %cst_100 : f32 to vector<32x128xf32>
    %297 = arith.cmpf ogt, %295, %296 : vector<32x128xf32>
    %cst_101 = arith.constant 2.000000e-01 : f32
    %298 = vector.broadcast %cst_101 : f32 to vector<32x128xf32>
    %299 = arith.mulf %298, %295 : vector<32x128xf32>
    %300 = arith.select %297, %295, %299 : vector<32x128xi1>, vector<32x128xf32>
    %301 = vector.extract_strided_slice %300 {offsets = [31, 0], sizes = [1, 128], strides = [1, 1]} : vector<32x128xf32> to vector<1x128xf32>
    %302 = vector.extract_strided_slice %300 {offsets = [0, 0], sizes = [31, 128], strides = [1, 1]} : vector<32x128xf32> to vector<31x128xf32>
    %303 = tpu.concatenate %301, %302 in 0 : vector<1x128xf32>, vector<31x128xf32> -> vector<32x128xf32>
    %cst_102 = arith.constant 0.000000e+00 : f32
    %304 = vector.shape_cast %227 : vector<32x1xi1> to vector<32x1xi1>
    %305 = vector.broadcast %304 : vector<32x1xi1> to vector<32x128xi1>
    %306 = vector.broadcast %cst_102 : f32 to vector<32x128xf32>
    %307 = arith.select %305, %303, %306 : vector<32x128xi1>, vector<32x128xf32>
    %308 = vector.extract_strided_slice %300 {offsets = [1, 0], sizes = [31, 128], strides = [1, 1]} : vector<32x128xf32> to vector<31x128xf32>
    %309 = vector.extract_strided_slice %300 {offsets = [0, 0], sizes = [1, 128], strides = [1, 1]} : vector<32x128xf32> to vector<1x128xf32>
    %310 = tpu.concatenate %308, %309 in 0 : vector<31x128xf32>, vector<1x128xf32> -> vector<32x128xf32>
    %cst_103 = arith.constant 0.000000e+00 : f32
    %311 = vector.shape_cast %229 : vector<32x1xi1> to vector<32x1xi1>
    %312 = vector.broadcast %311 : vector<32x1xi1> to vector<32x128xi1>
    %313 = vector.broadcast %cst_103 : f32 to vector<32x128xf32>
    %314 = arith.select %312, %310, %313 : vector<32x128xi1>, vector<32x128xf32>
    %c2480 = arith.constant 2480 : index
    %c0_104 = arith.constant 0 : index
    %315 = vector.load %arg2[%c2480, %c0_104] : memref<2880x128xbf16, #tpu.memory_space<vmem>>, vector<128x48xbf16>
    %316 = arith.truncf %307 : vector<32x128xf32> to vector<32x128xbf16>
    %cst_105 = arith.constant dense<0.000000e+00> : vector<32x48xf32>
    %317 = tpu.matmul %316, %315, %cst_105 {dimension_numbers = #tpu.dot_dimension_numbers<[1], [0], [0], [1], [0, 0, 1, 1], [], []>} : vector<32x128xbf16>, vector<128x48xbf16>, vector<32x48xf32> -> vector<32x48xf32>
    %c2608 = arith.constant 2608 : index
    %c0_106 = arith.constant 0 : index
    %318 = vector.load %arg2[%c2608, %c0_106] : memref<2880x128xbf16, #tpu.memory_space<vmem>>, vector<128x48xbf16>
    %319 = arith.truncf %300 : vector<32x128xf32> to vector<32x128xbf16>
    %cst_107 = arith.constant dense<0.000000e+00> : vector<32x48xf32>
    %320 = tpu.matmul %319, %318, %cst_107 {dimension_numbers = #tpu.dot_dimension_numbers<[1], [0], [0], [1], [0, 0, 1, 1], [], []>} : vector<32x128xbf16>, vector<128x48xbf16>, vector<32x48xf32> -> vector<32x48xf32>
    %321 = arith.addf %317, %320 : vector<32x48xf32>
    %c2736 = arith.constant 2736 : index
    %c0_108 = arith.constant 0 : index
    %322 = vector.load %arg2[%c2736, %c0_108] : memref<2880x128xbf16, #tpu.memory_space<vmem>>, vector<128x48xbf16>
    %323 = arith.truncf %314 : vector<32x128xf32> to vector<32x128xbf16>
    %cst_109 = arith.constant dense<0.000000e+00> : vector<32x48xf32>
    %324 = tpu.matmul %323, %322, %cst_109 {dimension_numbers = #tpu.dot_dimension_numbers<[1], [0], [0], [1], [0, 0, 1, 1], [], []>} : vector<32x128xbf16>, vector<128x48xbf16>, vector<32x48xf32> -> vector<32x48xf32>
    %325 = arith.addf %321, %324 : vector<32x48xf32>
    %c2864 = arith.constant 2864 : index
    %c0_110 = arith.constant 0 : index
    %326 = vector.load %arg2[%c2864, %c0_110] : memref<2880x128xbf16, #tpu.memory_space<vmem>>, vector<1x48xbf16>
    %327 = arith.extf %326 : vector<1x48xbf16> to vector<1x48xf32>
    %328 = vector.broadcast %327 : vector<1x48xf32> to vector<32x48xf32>
    %329 = arith.addf %325, %328 : vector<32x48xf32>
    %330 = math.tanh %329 : vector<32x48xf32>
    %331 = vector.extract_strided_slice %330 {offsets = [0, 0], sizes = [16, 16], strides = [1, 1]} : vector<32x48xf32> to vector<16x16xf32>
    %c0_111 = arith.constant 0 : index
    %c0_112 = arith.constant 0 : index
    %332 = vector.load %arg3[%c0_111, %c0_112] : memref<96x16xf32, #tpu.memory_space<vmem>>, vector<16x16xf32>
    tpu.vector_store %arg3[%c0_111, %c0_112], %331 {strides = array<i32>} : memref<96x16xf32, #tpu.memory_space<vmem>>, vector<16x16xf32>,
    %333 = vector.extract_strided_slice %330 {offsets = [0, 16], sizes = [16, 16], strides = [1, 1]} : vector<32x48xf32> to vector<16x16xf32>
    %c16_113 = arith.constant 16 : index
    %c0_114 = arith.constant 0 : index
    %334 = vector.load %arg3[%c16_113, %c0_114] : memref<96x16xf32, #tpu.memory_space<vmem>>, vector<16x16xf32>
    tpu.vector_store %arg3[%c16_113, %c0_114], %333 {strides = array<i32>} : memref<96x16xf32, #tpu.memory_space<vmem>>, vector<16x16xf32>,
    %335 = vector.extract_strided_slice %330 {offsets = [0, 32], sizes = [16, 16], strides = [1, 1]} : vector<32x48xf32> to vector<16x16xf32>
    %c32_115 = arith.constant 32 : index
    %c0_116 = arith.constant 0 : index
    %336 = vector.load %arg3[%c32_115, %c0_116] : memref<96x16xf32, #tpu.memory_space<vmem>>, vector<16x16xf32>
    tpu.vector_store %arg3[%c32_115, %c0_116], %335 {strides = array<i32>} : memref<96x16xf32, #tpu.memory_space<vmem>>, vector<16x16xf32>,
    %337 = vector.extract_strided_slice %330 {offsets = [16, 0], sizes = [16, 16], strides = [1, 1]} : vector<32x48xf32> to vector<16x16xf32>
    %c48 = arith.constant 48 : index
    %c0_117 = arith.constant 0 : index
    %338 = vector.load %arg3[%c48, %c0_117] : memref<96x16xf32, #tpu.memory_space<vmem>>, vector<16x16xf32>
    tpu.vector_store %arg3[%c48, %c0_117], %337 {strides = array<i32>} : memref<96x16xf32, #tpu.memory_space<vmem>>, vector<16x16xf32>,
    %339 = vector.extract_strided_slice %330 {offsets = [16, 16], sizes = [16, 16], strides = [1, 1]} : vector<32x48xf32> to vector<16x16xf32>
    %c64 = arith.constant 64 : index
    %c0_118 = arith.constant 0 : index
    %340 = vector.load %arg3[%c64, %c0_118] : memref<96x16xf32, #tpu.memory_space<vmem>>, vector<16x16xf32>
    tpu.vector_store %arg3[%c64, %c0_118], %339 {strides = array<i32>} : memref<96x16xf32, #tpu.memory_space<vmem>>, vector<16x16xf32>,
    %341 = vector.extract_strided_slice %330 {offsets = [16, 32], sizes = [16, 16], strides = [1, 1]} : vector<32x48xf32> to vector<16x16xf32>
    %c80 = arith.constant 80 : index
    %c0_119 = arith.constant 0 : index
    %342 = vector.load %arg3[%c80, %c0_119] : memref<96x16xf32, #tpu.memory_space<vmem>>, vector<16x16xf32>
    tpu.vector_store %arg3[%c80, %c0_119], %341 {strides = array<i32>} : memref<96x16xf32, #tpu.memory_space<vmem>>, vector<16x16xf32>,
    return
  }
}

</mosaic_0001>

<llo_original>
// kernel: _lambda_.1
$region0: #{_lambda_.1}
  #allocation0 [shape = 'u32[]', space=smem, size = 0x4, offset = 0x4, fixed_abs, tag = 'smem constant byte address 0x4 - core index']
  #allocation1 [shape = 'u32[144,128]{1,0:T(1,128)}', space=vmem, size = 0x12000, scoped, tag = 'internal scratch']
  %s0 = inlined_call_operand.hbm [shape: f32[2,32], index: 0, kind: input, shape index: {}]
  %s1 = inlined_call_operand.hbm [shape: bf16[32,512], index: 1, kind: input, shape index: {}]
  %s2 = inlined_call_operand.hbm [shape: bf16[2880,128], index: 2, kind: input, shape index: {}]
  %s3 = inlined_call_operand.hbm [shape: f32[96,16], index: 3, kind: output, shape index: {}]
  %s4 = sld [smem:[#allocation0]]
  $region34: #{_lambda_.1} parent=0
    _
  %s6 = ssub.s32 1, %s4
  %s7 = scalar_select 0, %s6, %s4
  $region1: #{_lambda_.1} parent=0
    #allocation2 [shape = 'u8[1024]{0}', space=vmem, size = 0x400, scoped, tag = 'input window, operand 0, single buffered']
    #allocation3 [shape = 's32[1]{0}', space=sflag, size = 0x4, scoped, tag = 'scoped memory for _lambda_.1']
    #allocation4 [shape = 's32[1]{0}', space=sflag, size = 0x4, scoped, tag = 'scoped memory for _lambda_.1']
    #allocation5 [shape = 'u8[32768]{0}', space=vmem, size = 0x8000, scoped, tag = 'input window, operand 1, single buffered']
    #allocation6 [shape = 's32[1]{0}', space=sflag, size = 0x4, scoped, tag = 'scoped memory for _lambda_.1']
    #allocation7 [shape = 'u8[737280]{0}', space=vmem, size = 0xb4000, scoped, tag = 'input window, operand 2, single buffered']
    #allocation8 [shape = 'u8[49152]{0}', space=vmem, size = 0xc000, scoped, tag = 'output window, operand 0, single buffered']
    %8 = vsyncpa [#allocation3], 0
    %9 = vsyncpa [#allocation6], 0
    %10 = vsyncpa [#allocation4], 0
    // Predicated region
    $region2: #{_lambda_.1} parent=1 // pred_check
      _
    $region3: #{_lambda_.1} parent=1 // pred_check_branch
      %12 = sbr.rel (0) target = $region5
    $region4: #{_lambda_.1} parent=1 // pred_region
      %s14 = ssub.s32 32, 32
      %15 = vsyncadd [#allocation3], %s14
      %s17 = sshll.u32 [#allocation2], 4
      %s18 = int_to_ptr.vmem [resolvable:$true] %s17
      %20 = dma.hbm_to_vmem [thread:$0]  %s0, 32, %s18, [#allocation3]
    $region5: #{_lambda_.1} parent=1 // pred_fallthru
      _
    // Predicated region
    $region6: #{_lambda_.1} parent=1 // pred_check
      _
    $region7: #{_lambda_.1} parent=1 // pred_check_branch
      %22 = sbr.rel (0) target = $region9
    $region8: #{_lambda_.1} parent=1 // pred_region
      %s24 = ssub.s32 1024, 1024
      %25 = vsyncadd [#allocation6], %s24
      %s26 = sshll.u32 [#allocation5], 4
      %s27 = int_to_ptr.vmem [resolvable:$true] %s26
      %32 = dma.hbm_to_vmem [thread:$0]  %s1, 1024, %s27, [#allocation6], 256, 256, 16
    $region9: #{_lambda_.1} parent=1 // pred_fallthru
      _
    // Predicated region
    $region10: #{_lambda_.1} parent=1 // pred_check
      _
    $region11: #{_lambda_.1} parent=1 // pred_check_branch
      %34 = sbr.rel (0) target = $region13
    $region12: #{_lambda_.1} parent=1 // pred_region
      %s36 = ssub.s32 23040, 23040
      %37 = vsyncadd [#allocation6], %s36
      %s38 = sshll.u32 [#allocation7], 4
      %s39 = int_to_ptr.vmem [resolvable:$true] %s38
      %44 = dma.hbm_to_vmem [thread:$0]  %s2, 23040, %s39, [#allocation6], 64, 64, 4
    $region13: #{_lambda_.1} parent=1 // pred_fallthru
      _
    // Predicated region
    $region14: #{_lambda_.1} parent=1 // pred_check
      _
    $region15: #{_lambda_.1} parent=1 // pred_check_branch
      %46 = sbr.rel (0) target = $region17
    $region16: #{_lambda_.1} parent=1 // pred_region
      %47 = dma.done [#allocation3], 32
    $region17: #{_lambda_.1} parent=1 // pred_fallthru
      _
    // Predicated region
    $region18: #{_lambda_.1} parent=1 // pred_check
      _
    $region19: #{_lambda_.1} parent=1 // pred_check_branch
      %49 = sbr.rel (0) target = $region21
    $region20: #{_lambda_.1} parent=1 // pred_region
      %50 = dma.done [#allocation6], 1024
    $region21: #{_lambda_.1} parent=1 // pred_fallthru
      _
    // Predicated region
    $region22: #{_lambda_.1} parent=1 // pred_check
      _
    $region23: #{_lambda_.1} parent=1 // pred_check_branch
      %52 = sbr.rel (0) target = $region25
    $region24: #{_lambda_.1} parent=1 // pred_region
      %53 = dma.done [#allocation6], 23040
    $region25: #{_lambda_.1} parent=1 // pred_fallthru
      _
    %v55 = vld [vmem:[#allocation7] sm:$0xf]
    %v56 = vld [vmem:[#allocation2] sm:$0x3]
    %v57 = vpack.c.bf16 %v56, %v56
    %vm58 = vcmask 15360
    %v60 = vsel %vm58, %v55, 0
    %vm62 = vcmask 1040384
    %v64 = vsel %vm62, %v57, 0
    %66 = vmatprep.subr.bf16.mxu0 0
    %67 = vmatpush1.bf16.msra.mxu0 0
    %68 = vmatprep.subr.bf16.mxu0 0
    %69 = vmatpush1.bf16.msra.mxu0 0
    %70 = vmatprep.subr.bf16.mxu0 0
    %71 = vmatpush1.bf16.msra.mxu0 0
    %72 = vmatprep.subr.bf16.mxu0 0
    %73 = vmatpush1.bf16.msra.mxu0 0
    %74 = vmatprep.subr.bf16.mxu0 0
    %75 = vmatpush1.bf16.msra.mxu0 0
    %76 = vmatprep.subr.bf16.mxu0 0
    %77 = vmatpush1.bf16.msra.mxu0 0
    %78 = vmatprep.subr.bf16.mxu0 0
    %79 = vmatpush1.bf16.msra.mxu0 0
    %80 = vmatprep.subr.bf16.mxu0 0
    %81 = vmatpush1.bf16.msra.mxu0 %v64
    %82 = vmatprep.subr.bf16.mxu0 0
    %83 = vmatpush2.bf16.msra.mxu0 0
    %84 = vmatprep.subr.bf16.mxu0 0
    %85 = vmatpush2.bf16.msra.mxu0 0
    %86 = vmatprep.subr.bf16.mxu0 0
    %87 = vmatpush2.bf16.msra.mxu0 0
    %88 = vmatprep.subr.bf16.mxu0 0
    %89 = vmatpush2.bf16.msra.mxu0 0
    %90 = vmatprep.subr.bf16.mxu0 0
    %91 = vmatpush2.bf16.msra.mxu0 0
    %92 = vmatprep.subr.bf16.mxu0 0
    %93 = vmatpush2.bf16.msra.mxu0 0
    %94 = vmatprep.subr.bf16.mxu0 0
    %95 = vmatpush2.bf16.msra.mxu0 0
    %96 = vmatprep.subr.bf16.mxu0 0
    %97 = vmatpush2.bf16.msra.mxu0 0
    %98 = vmatprep.mubr.bf16.mxu0 0
    %99 = vmatmul.mubr.bf16.gmra.mxu0 %v60
    %v100 = vpop.f32.mrf.mxu0
    %v101 = vadd.f32 0.0, %v100
    %v102 = vpop.f32.mrf.mxu0
    %v103 = vpop.f32.mrf.mxu0
    %v104 = vpop.f32.mrf.mxu0
    %105 = vdwg.mxu0
    %v106 = vld [vmem:[#allocation5] sm:$0xff]
    %v107 = vld [vmem:[#allocation5 + $0x8] sm:$0xff]
    %v108 = vld [vmem:[#allocation5 + $0x10] sm:$0xff]
    %v109 = vld [vmem:[#allocation5 + $0x18] sm:$0xff]
    %v110 = vld [vmem:[#allocation5 + $0x20] sm:$0xff]
    %v111 = vld [vmem:[#allocation5 + $0x28] sm:$0xff]
    %v112 = vld [vmem:[#allocation5 + $0x30] sm:$0xff]
    %v113 = vld [vmem:[#allocation5 + $0x38] sm:$0xff]
    %v114 = vpack.c.bf16 %v101, %v101
    %v123 = vunpack.c.l.b16 %v106
    %v124 = vunpack.c.h.b16 %v106
    %v125 = vunpack.c.l.b16 %v107
    %v126 = vunpack.c.h.b16 %v107
    %v127 = vunpack.c.l.b16 %v108
    %v128 = vunpack.c.h.b16 %v108
    %v129 = vunpack.c.l.b16 %v109
    %v130 = vunpack.c.h.b16 %v109
    %v131 = vunpack.c.l.b16 %v110
    %v132 = vunpack.c.h.b16 %v110
    %v133 = vunpack.c.l.b16 %v111
    %v134 = vunpack.c.h.b16 %v111
    %v135 = vunpack.c.l.b16 %v112
    %v136 = vunpack.c.h.b16 %v112
    %v137 = vunpack.c.l.b16 %v113
    %v138 = vunpack.c.h.b16 %v113
    %v139 = vpack.c.b16 %v127, %v123
    %v140 = vpack.c.b16 %v128, %v124
    %v141 = vpack.c.b16 %v129, %v125
    %v142 = vpack.c.b16 %v130, %v126
    %v143 = vpack.c.b16 %v135, %v131
    %v144 = vpack.c.b16 %v136, %v132
    %v145 = vpack.c.b16 %v137, %v133
    %v146 = vpack.c.b16 %v138, %v134
    %vm155 = vcmask 261120
    %v157 = vsel %vm155, %v114, 0
    %159 = vmatprep.subr.bf16.mxu0 0
    %160 = vmatpush1.bf16.msra.mxu0 0
    %161 = vmatprep.subr.bf16.mxu0 0
    %162 = vmatpush1.bf16.msra.mxu0 0
    %163 = vmatprep.subr.bf16.mxu0 0
    %164 = vmatpush1.bf16.msra.mxu0 0
    %165 = vmatprep.subr.bf16.mxu0 0
    %166 = vmatpush1.bf16.msra.mxu0 0
    %167 = vmatprep.subr.bf16.mxu0 0
    %168 = vmatpush1.bf16.msra.mxu0 0
    %169 = vmatprep.subr.bf16.mxu0 0
    %170 = vmatpush1.bf16.msra.mxu0 0
    %171 = vmatprep.subr.bf16.mxu0 %v144
    %172 = vmatpush1.bf16.msra.mxu0 %v143
    %173 = vmatprep.subr.bf16.mxu0 %v140
    %174 = vmatpush1.bf16.msra.mxu0 %v139
    %175 = vmatprep.subr.bf16.mxu0 0
    %176 = vmatpush2.bf16.msra.mxu0 0
    %177 = vmatprep.subr.bf16.mxu0 0
    %178 = vmatpush2.bf16.msra.mxu0 0
    %179 = vmatprep.subr.bf16.mxu0 0
    %180 = vmatpush2.bf16.msra.mxu0 0
    %181 = vmatprep.subr.bf16.mxu0 0
    %182 = vmatpush2.bf16.msra.mxu0 0
    %183 = vmatprep.subr.bf16.mxu0 0
    %184 = vmatpush2.bf16.msra.mxu0 0
    %185 = vmatprep.subr.bf16.mxu0 0
    %186 = vmatpush2.bf16.msra.mxu0 0
    %187 = vmatprep.subr.bf16.mxu0 0
    %188 = vmatpush2.bf16.msra.mxu0 0
    %189 = vmatprep.subr.bf16.mxu0 0
    %190 = vmatpush2.bf16.msra.mxu0 0
    %191 = vmatprep.mubr.bf16.mxu0 0
    %192 = vmatmul.mubr.bf16.gmra.mxu0 %v157
    %v193 = vpop.f32.mrf.mxu0
    %v194 = vadd.f32 0.0, %v193
    %v195 = vpop.f32.mrf.mxu0
    %v196 = vadd.f32 0.0, %v195
    %v197 = vpop.f32.mrf.mxu0
    %v198 = vpop.f32.mrf.mxu0
    %199 = vdwg.mxu0
    %200 = vmatprep.subr.bf16.mxu0 0
    %201 = vmatpush1.bf16.msra.mxu0 0
    %202 = vmatprep.subr.bf16.mxu0 0
    %203 = vmatpush1.bf16.msra.mxu0 0
    %204 = vmatprep.subr.bf16.mxu0 0
    %205 = vmatpush1.bf16.msra.mxu0 0
    %206 = vmatprep.subr.bf16.mxu0 0
    %207 = vmatpush1.bf16.msra.mxu0 0
    %208 = vmatprep.subr.bf16.mxu0 0
    %209 = vmatpush1.bf16.msra.mxu0 0
    %210 = vmatprep.subr.bf16.mxu0 0
    %211 = vmatpush1.bf16.msra.mxu0 0
    %212 = vmatprep.subr.bf16.mxu0 %v146
    %213 = vmatpush1.bf16.msra.mxu0 %v145
    %214 = vmatprep.subr.bf16.mxu0 %v142
    %215 = vmatpush1.bf16.msra.mxu0 %v141
    %216 = vmatprep.subr.bf16.mxu0 0
    %217 = vmatpush2.bf16.msra.mxu0 0
    %218 = vmatprep.subr.bf16.mxu0 0
    %219 = vmatpush2.bf16.msra.mxu0 0
    %220 = vmatprep.subr.bf16.mxu0 0
    %221 = vmatpush2.bf16.msra.mxu0 0
    %222 = vmatprep.subr.bf16.mxu0 0
    %223 = vmatpush2.bf16.msra.mxu0 0
    %224 = vmatprep.subr.bf16.mxu0 0
    %225 = vmatpush2.bf16.msra.mxu0 0
    %226 = vmatprep.subr.bf16.mxu0 0
    %227 = vmatpush2.bf16.msra.mxu0 0
    %228 = vmatprep.subr.bf16.mxu0 0
    %229 = vmatpush2.bf16.msra.mxu0 0
    %230 = vmatprep.subr.bf16.mxu0 0
    %231 = vmatpush2.bf16.msra.mxu0 0
    %232 = vmatprep.mubr.bf16.mxu0 0
    %233 = vmatmul.mubr.bf16.gmra.mxu0 %v157
    %v234 = vpop.f32.mrf.mxu0
    %v235 = vadd.f32 0.0, %v234
    %v236 = vpop.f32.mrf.mxu0
    %v237 = vadd.f32 0.0, %v236
    %v238 = vpop.f32.mrf.mxu0
    %v239 = vpop.f32.mrf.mxu0
    %240 = vdwg.mxu0
    %v241 = vlaneseq
    %v242 = vshrl.u32 %v241, 7
    %v243 = vand.u32 %v242, 3
    %v244 = vld [vmem:[#allocation7 + $0x8] sm:$0xf]
    %v245 = vunpack.c.l.bf16 %v244
    %vm246 = vcmp.eq.s32.totalorder %v243, 0
    %v247 = vsel %vm246, 1, 0
    %vm248 = vcmp.eq.s32.totalorder %v247, 1
    %v249 = vsel %vm248, %v194, 0.0
    %v250 = vadd.f32 %v245, %v249
    %vm251 = vcmp.eq.s32.totalorder %v243, 1
    %v252 = vsel %vm251, 1, 0
    %vm253 = vcmp.eq.s32.totalorder %v252, 1
    %v254 = vsel %vm253, %v196, 0.0
    %v255 = vadd.f32 %v250, %v254
    %vm256 = vcmp.eq.s32.totalorder %v243, 2
    %v257 = vsel %vm256, 1, 0
    %vm258 = vcmp.eq.s32.totalorder %v257, 1
    %v259 = vsel %vm258, %v235, 0.0
    %v260 = vadd.f32 %v255, %v259
    %vm261 = vcmp.eq.s32.totalorder %v243, 3
    %v262 = vsel %vm261, 1, 0
    %vm263 = vcmp.eq.s32.totalorder %v262, 1
    %v264 = vsel %vm263, %v237, 0.0
    %v265 = vadd.f32 %v260, %v264
    %v266 = vld [vmem:[#allocation7 + $0x140] sm:$0xf]
    %v267 = vld [vmem:[#allocation7 + $0x144] sm:$0xf]
    %v268 = vld [vmem:[#allocation7 + $0x148] sm:$0xf]
    %v269 = vld [vmem:[#allocation7 + $0x14c] sm:$0xf]
    %v270 = vld [vmem:[#allocation7 + $0x150] sm:$0xf]
    %v271 = vld [vmem:[#allocation7 + $0x154] sm:$0xf]
    %v272 = vld [vmem:[#allocation7 + $0x158] sm:$0xf]
    %v273 = vld [vmem:[#allocation7 + $0x15c] sm:$0xf]
    %v274 = vld [vmem:[#allocation7 + $0x160] sm:$0xf]
    %v275 = vld [vmem:[#allocation7 + $0x164] sm:$0xf]
    %v276 = vld [vmem:[#allocation7 + $0x168] sm:$0xf]
    %v277 = vld [vmem:[#allocation7 + $0x16c] sm:$0xf]
    %v278 = vld [vmem:[#allocation7 + $0x170] sm:$0xf]
    %v279 = vld [vmem:[#allocation7 + $0x174] sm:$0xf]
    %v280 = vld [vmem:[#allocation7 + $0x178] sm:$0xf]
    %v281 = vld [vmem:[#allocation7 + $0x17c] sm:$0xf]
    %v282 = vpack.c.bf16 %v265, %v265
    %vm283 = vcmp.gt.f32.partialorder %v265, 0.0
    %v284 = vmul.f32 %v265, 0.2
    %v285 = vsel %vm283, %v265, %v284
    %vm286 = vcmp.ne.s32.totalorder %v243, 0
    %vm287 = vcmp.ne.s32.totalorder %v243, 3
    %v289 = vrot.slane %v285, 7
    %v291 = vsel %vm62, %v289, %v289
    %v292 = vsel %vm286, 1, 0
    %vm293 = vcmp.eq.s32.totalorder %v292, 1
    %v294 = vsel %vm293, %v291, 0.0
    %v295 = vrot.slane %v285, 1
    %vm297 = vcmask 1046528
    %v298 = vsel %vm297, %v295, %v295
    %v299 = vsel %vm287, 1, 0
    %vm300 = vcmp.eq.s32.totalorder %v299, 1
    %v301 = vsel %vm300, %v298, 0.0
    %v302 = vld [vmem:[#allocation7 + $0x10] sm:$0xf]
    %v303 = vld [vmem:[#allocation7 + $0x14] sm:$0xf]
    %v304 = vld [vmem:[#allocation7 + $0x18] sm:$0xf]
    %v305 = vld [vmem:[#allocation7 + $0x1c] sm:$0xf]
    %v306 = vld [vmem:[#allocation7 + $0x20] sm:$0xf]
    %v307 = vld [vmem:[#allocation7 + $0x24] sm:$0xf]
    %v308 = vld [vmem:[#allocation7 + $0x28] sm:$0xf]
    %v309 = vld [vmem:[#allocation7 + $0x2c] sm:$0xf]
    %v310 = vld [vmem:[#allocation7 + $0x30] sm:$0xf]
    %v311 = vld [vmem:[#allocation7 + $0x34] sm:$0xf]
    %v312 = vld [vmem:[#allocation7 + $0x38] sm:$0xf]
    %v313 = vld [vmem:[#allocation7 + $0x3c] sm:$0xf]
    %v314 = vld [vmem:[#allocation7 + $0x40] sm:$0xf]
    %v315 = vld [vmem:[#allocation7 + $0x44] sm:$0xf]
    %v316 = vld [vmem:[#allocation7 + $0x48] sm:$0xf]
    %v317 = vld [vmem:[#allocation7 + $0x4c] sm:$0xf]
    %v318 = vpack.c.bf16 %v294, %v294
    %v319 = vld [vmem:[#allocation7 + $0x50] sm:$0xf]
    %v320 = vld [vmem:[#allocation7 + $0x54] sm:$0xf]
    %v321 = vld [vmem:[#allocation7 + $0x58] sm:$0xf]
    %v322 = vld [vmem:[#allocation7 + $0x5c] sm:$0xf]
    %v323 = vld [vmem:[#allocation7 + $0x60] sm:$0xf]
    %v324 = vld [vmem:[#allocation7 + $0x64] sm:$0xf]
    %v325 = vld [vmem:[#allocation7 + $0x68] sm:$0xf]
    %v326 = vld [vmem:[#allocation7 + $0x6c] sm:$0xf]
    %v327 = vld [vmem:[#allocation7 + $0x70] sm:$0xf]
    %v328 = vld [vmem:[#allocation7 + $0x74] sm:$0xf]
    %v329 = vld [vmem:[#allocation7 + $0x78] sm:$0xf]
    %v330 = vld [vmem:[#allocation7 + $0x7c] sm:$0xf]
    %v331 = vld [vmem:[#allocation7 + $0x80] sm:$0xf]
    %v332 = vld [vmem:[#allocation7 + $0x84] sm:$0xf]
    %v333 = vld [vmem:[#allocation7 + $0x88] sm:$0xf]
    %v334 = vld [vmem:[#allocation7 + $0x8c] sm:$0xf]
    %v335 = vpack.c.bf16 %v285, %v285
    %v352 = vunpack.c.l.b16 %v319
    %v353 = vunpack.c.l.b16 %v320
    %v354 = vunpack.c.l.b16 %v321
    %v355 = vunpack.c.l.b16 %v322
    %v356 = vunpack.c.l.b16 %v323
    %v357 = vunpack.c.l.b16 %v324
    %v358 = vunpack.c.l.b16 %v325
    %v359 = vunpack.c.l.b16 %v326
    %v360 = vunpack.c.l.b16 %v327
    %v361 = vunpack.c.l.b16 %v328
    %v362 = vunpack.c.l.b16 %v329
    %v363 = vunpack.c.l.b16 %v330
    %v364 = vunpack.c.l.b16 %v331
    %v365 = vunpack.c.l.b16 %v332
    %v366 = vunpack.c.l.b16 %v333
    %v367 = vunpack.c.l.b16 %v334
    %v368 = vpack.c.b16 %v353, %v352
    %v369 = vpack.c.b16 %v355, %v354
    %v370 = vpack.c.b16 %v357, %v356
    %v371 = vpack.c.b16 %v359, %v358
    %v372 = vpack.c.b16 %v361, %v360
    %v373 = vpack.c.b16 %v363, %v362
    %v374 = vpack.c.b16 %v365, %v364
    %v375 = vpack.c.b16 %v367, %v366
    %384 = vmatprep.subr.bf16.mxu0 0
    %385 = vmatpush1.bf16.msra.mxu0 %v375
    %386 = vmatprep.subr.bf16.mxu0 0
    %387 = vmatpush1.bf16.msra.mxu0 %v374
    %388 = vmatprep.subr.bf16.mxu0 0
    %389 = vmatpush1.bf16.msra.mxu0 %v373
    %390 = vmatprep.subr.bf16.mxu0 0
    %391 = vmatpush1.bf16.msra.mxu0 %v372
    %392 = vmatprep.subr.bf16.mxu0 0
    %393 = vmatpush1.bf16.msra.mxu0 %v371
    %394 = vmatprep.subr.bf16.mxu0 0
    %395 = vmatpush1.bf16.msra.mxu0 %v370
    %396 = vmatprep.subr.bf16.mxu0 0
    %397 = vmatpush1.bf16.msra.mxu0 %v369
    %398 = vmatprep.subr.bf16.mxu0 0
    %399 = vmatpush1.bf16.msra.mxu0 %v368
    %400 = vmatprep.subr.bf16.mxu0 0
    %401 = vmatpush2.bf16.msra.mxu0 0
    %402 = vmatprep.subr.bf16.mxu0 0
    %403 = vmatpush2.bf16.msra.mxu0 0
    %404 = vmatprep.subr.bf16.mxu0 0
    %405 = vmatpush2.bf16.msra.mxu0 0
    %406 = vmatprep.subr.bf16.mxu0 0
    %407 = vmatpush2.bf16.msra.mxu0 0
    %408 = vmatprep.subr.bf16.mxu0 0
    %409 = vmatpush2.bf16.msra.mxu0 0
    %410 = vmatprep.subr.bf16.mxu0 0
    %411 = vmatpush2.bf16.msra.mxu0 0
    %412 = vmatprep.subr.bf16.mxu0 0
    %413 = vmatpush2.bf16.msra.mxu0 0
    %414 = vmatprep.subr.bf16.mxu0 0
    %415 = vmatpush2.bf16.msra.mxu0 0
    %416 = vmatprep.mubr.bf16.mxu0 0
    %417 = vmatmul.mubr.bf16.gmra.mxu0 %v335
    %v418 = vpop.f32.mrf.mxu0
    %v419 = vadd.f32 0.0, %v418
    %v420 = vpop.f32.mrf.mxu0
    %v421 = vpop.f32.mrf.mxu0
    %v422 = vpop.f32.mrf.mxu0
    %423 = vdwg.mxu0
    %v440 = vunpack.c.l.b16 %v302
    %v441 = vunpack.c.l.b16 %v303
    %v442 = vunpack.c.l.b16 %v304
    %v443 = vunpack.c.l.b16 %v305
    %v444 = vunpack.c.l.b16 %v306
    %v445 = vunpack.c.l.b16 %v307
    %v446 = vunpack.c.l.b16 %v308
    %v447 = vunpack.c.l.b16 %v309
    %v448 = vunpack.c.l.b16 %v310
    %v449 = vunpack.c.l.b16 %v311
    %v450 = vunpack.c.l.b16 %v312
    %v451 = vunpack.c.l.b16 %v313
    %v452 = vunpack.c.l.b16 %v314
    %v453 = vunpack.c.l.b16 %v315
    %v454 = vunpack.c.l.b16 %v316
    %v455 = vunpack.c.l.b16 %v317
    %v456 = vpack.c.b16 %v441, %v440
    %v457 = vpack.c.b16 %v443, %v442
    %v458 = vpack.c.b16 %v445, %v444
    %v459 = vpack.c.b16 %v447, %v446
    %v460 = vpack.c.b16 %v449, %v448
    %v461 = vpack.c.b16 %v451, %v450
    %v462 = vpack.c.b16 %v453, %v452
    %v463 = vpack.c.b16 %v455, %v454
    %472 = vmatprep.subr.bf16.mxu0 0
    %473 = vmatpush1.bf16.msra.mxu0 %v463
    %474 = vmatprep.subr.bf16.mxu0 0
    %475 = vmatpush1.bf16.msra.mxu0 %v462
    %476 = vmatprep.subr.bf16.mxu0 0
    %477 = vmatpush1.bf16.msra.mxu0 %v461
    %478 = vmatprep.subr.bf16.mxu0 0
    %479 = vmatpush1.bf16.msra.mxu0 %v460
    %480 = vmatprep.subr.bf16.mxu0 0
    %481 = vmatpush1.bf16.msra.mxu0 %v459
    %482 = vmatprep.subr.bf16.mxu0 0
    %483 = vmatpush1.bf16.msra.mxu0 %v458
    %484 = vmatprep.subr.bf16.mxu0 0
    %485 = vmatpush1.bf16.msra.mxu0 %v457
    %486 = vmatprep.subr.bf16.mxu0 0
    %487 = vmatpush1.bf16.msra.mxu0 %v456
    %488 = vmatprep.subr.bf16.mxu0 0
    %489 = vmatpush2.bf16.msra.mxu0 0
    %490 = vmatprep.subr.bf16.mxu0 0
    %491 = vmatpush2.bf16.msra.mxu0 0
    %492 = vmatprep.subr.bf16.mxu0 0
    %493 = vmatpush2.bf16.msra.mxu0 0
    %494 = vmatprep.subr.bf16.mxu0 0
    %495 = vmatpush2.bf16.msra.mxu0 0
    %496 = vmatprep.subr.bf16.mxu0 0
    %497 = vmatpush2.bf16.msra.mxu0 0
    %498 = vmatprep.subr.bf16.mxu0 0
    %499 = vmatpush2.bf16.msra.mxu0 0
    %500 = vmatprep.subr.bf16.mxu0 0
    %501 = vmatpush2.bf16.msra.mxu0 0
    %502 = vmatprep.subr.bf16.mxu0 0
    %503 = vmatpush2.bf16.msra.mxu0 0
    %504 = vmatprep.mubr.bf16.mxu0 0
    %505 = vmatmul.mubr.bf16.gmra.mxu0 %v318
    %v506 = vpop.f32.mrf.mxu0
    %v507 = vadd.f32 %v419, %v506
    %v508 = vpop.f32.mrf.mxu0
    %v509 = vpop.f32.mrf.mxu0
    %v510 = vpop.f32.mrf.mxu0
    %511 = vdwg.mxu0
    %v512 = vld [vmem:[#allocation7 + $0x90] sm:$0xf]
    %v513 = vld [vmem:[#allocation7 + $0x94] sm:$0xf]
    %v514 = vld [vmem:[#allocation7 + $0x98] sm:$0xf]
    %v515 = vld [vmem:[#allocation7 + $0x9c] sm:$0xf]
    %v516 = vld [vmem:[#allocation7 + $0xa0] sm:$0xf]
    %v517 = vld [vmem:[#allocation7 + $0xa4] sm:$0xf]
    %v518 = vld [vmem:[#allocation7 + $0xa8] sm:$0xf]
    %v519 = vld [vmem:[#allocation7 + $0xac] sm:$0xf]
    %v520 = vld [vmem:[#allocation7 + $0xb0] sm:$0xf]
    %v521 = vld [vmem:[#allocation7 + $0xb4] sm:$0xf]
    %v522 = vld [vmem:[#allocation7 + $0xb8] sm:$0xf]
    %v523 = vld [vmem:[#allocation7 + $0xbc] sm:$0xf]
    %v524 = vld [vmem:[#allocation7 + $0xc0] sm:$0xf]
    %v525 = vld [vmem:[#allocation7 + $0xc4] sm:$0xf]
    %v526 = vld [vmem:[#allocation7 + $0xc8] sm:$0xf]
    %v527 = vld [vmem:[#allocation7 + $0xcc] sm:$0xf]
    %v528 = vpack.c.bf16 %v301, %v301
    %v545 = vunpack.c.l.b16 %v512
    %v546 = vunpack.c.l.b16 %v513
    %v547 = vunpack.c.l.b16 %v514
    %v548 = vunpack.c.l.b16 %v515
    %v549 = vunpack.c.l.b16 %v516
    %v550 = vunpack.c.l.b16 %v517
    %v551 = vunpack.c.l.b16 %v518
    %v552 = vunpack.c.l.b16 %v519
    %v553 = vunpack.c.l.b16 %v520
    %v554 = vunpack.c.l.b16 %v521
    %v555 = vunpack.c.l.b16 %v522
    %v556 = vunpack.c.l.b16 %v523
    %v557 = vunpack.c.l.b16 %v524
    %v558 = vunpack.c.l.b16 %v525
    %v559 = vunpack.c.l.b16 %v526
    %v560 = vunpack.c.l.b16 %v527
    %v561 = vpack.c.b16 %v546, %v545
    %v562 = vpack.c.b16 %v548, %v547
    %v563 = vpack.c.b16 %v550, %v549
    %v564 = vpack.c.b16 %v552, %v551
    %v565 = vpack.c.b16 %v554, %v553
    %v566 = vpack.c.b16 %v556, %v555
    %v567 = vpack.c.b16 %v558, %v557
    %v568 = vpack.c.b16 %v560, %v559
    %577 = vmatprep.subr.bf16.mxu0 0
    %578 = vmatpush1.bf16.msra.mxu0 %v568
    %579 = vmatprep.subr.bf16.mxu0 0
    %580 = vmatpush1.bf16.msra.mxu0 %v567
    %581 = vmatprep.subr.bf16.mxu0 0
    %582 = vmatpush1.bf16.msra.mxu0 %v566
    %583 = vmatprep.subr.bf16.mxu0 0
    %584 = vmatpush1.bf16.msra.mxu0 %v565
    %585 = vmatprep.subr.bf16.mxu0 0
    %586 = vmatpush1.bf16.msra.mxu0 %v564
    %587 = vmatprep.subr.bf16.mxu0 0
    %588 = vmatpush1.bf16.msra.mxu0 %v563
    %589 = vmatprep.subr.bf16.mxu0 0
    %590 = vmatpush1.bf16.msra.mxu0 %v562
    %591 = vmatprep.subr.bf16.mxu0 0
    %592 = vmatpush1.bf16.msra.mxu0 %v561
    %593 = vmatprep.subr.bf16.mxu0 0
    %594 = vmatpush2.bf16.msra.mxu0 0
    %595 = vmatprep.subr.bf16.mxu0 0
    %596 = vmatpush2.bf16.msra.mxu0 0
    %597 = vmatprep.subr.bf16.mxu0 0
    %598 = vmatpush2.bf16.msra.mxu0 0
    %599 = vmatprep.subr.bf16.mxu0 0
    %600 = vmatpush2.bf16.msra.mxu0 0
    %601 = vmatprep.subr.bf16.mxu0 0
    %602 = vmatpush2.bf16.msra.mxu0 0
    %603 = vmatprep.subr.bf16.mxu0 0
    %604 = vmatpush2.bf16.msra.mxu0 0
    %605 = vmatprep.subr.bf16.mxu0 0
    %606 = vmatpush2.bf16.msra.mxu0 0
    %607 = vmatprep.subr.bf16.mxu0 0
    %608 = vmatpush2.bf16.msra.mxu0 0
    %609 = vmatprep.mubr.bf16.mxu0 0
    %610 = vmatmul.mubr.bf16.gmra.mxu0 %v528
    %v611 = vpop.f32.mrf.mxu0
    %v612 = vadd.f32 0.0, %v611
    %v613 = vpop.f32.mrf.mxu0
    %v614 = vpop.f32.mrf.mxu0
    %v615 = vpop.f32.mrf.mxu0
    %616 = vdwg.mxu0
    %v617 = vadd.f32 %v507, %v612
    %v618 = vld [vmem:[#allocation7 + $0xd0] sm:$0x1]
    %v619 = vunpack.c.l.bf16 %v618
    %v620 = vlaneseq
    %v621 = vshrl.u32 %v620, 7
    %v622 = vsub.s32 0, %v621
    %v623 = vrot.slane %v619, %v622
    %v624 = vadd.f32 %v617, %v623
    %vm625 = vcmp.gt.f32.partialorder %v624, 0.0
    %v626 = vmul.f32 %v624, 0.2
    %v627 = vsel %vm625, %v624, %v626
    %v629 = vrot.slane %v627, 7
    %v631 = vsel %vm62, %v629, %v629
    %v632 = vsel %vm293, %v631, 0.0
    %v633 = vrot.slane %v627, 1
    %v635 = vsel %vm297, %v633, %v633
    %v636 = vsel %vm300, %v635, 0.0
    %v637 = vld [vmem:[#allocation7 + $0xd8] sm:$0xf]
    %v638 = vld [vmem:[#allocation7 + $0xdc] sm:$0xf]
    %v639 = vld [vmem:[#allocation7 + $0xe0] sm:$0xf]
    %v640 = vld [vmem:[#allocation7 + $0xe4] sm:$0xf]
    %v641 = vld [vmem:[#allocation7 + $0xe8] sm:$0xf]
    %v642 = vld [vmem:[#allocation7 + $0xec] sm:$0xf]
    %v643 = vld [vmem:[#allocation7 + $0xf0] sm:$0xf]
    %v644 = vld [vmem:[#allocation7 + $0xf4] sm:$0xf]
    %v645 = vpack.c.bf16 %v632, %v632
    %v646 = vld [vmem:[#allocation7 + $0xf8] sm:$0xf]
    %v647 = vld [vmem:[#allocation7 + $0xfc] sm:$0xf]
    %v648 = vld [vmem:[#allocation7 + $0x100] sm:$0xf]
    %v649 = vld [vmem:[#allocation7 + $0x104] sm:$0xf]
    %v650 = vld [vmem:[#allocation7 + $0x108] sm:$0xf]
    %v651 = vld [vmem:[#allocation7 + $0x10c] sm:$0xf]
    %v652 = vld [vmem:[#allocation7 + $0x110] sm:$0xf]
    %v653 = vld [vmem:[#allocation7 + $0x114] sm:$0xf]
    %v654 = vpack.c.bf16 %v627, %v627
    %v663 = vunpack.c.l.b16 %v646
    %v664 = vunpack.c.l.b16 %v647
    %v665 = vunpack.c.l.b16 %v648
    %v666 = vunpack.c.l.b16 %v649
    %v667 = vunpack.c.l.b16 %v650
    %v668 = vunpack.c.l.b16 %v651
    %v669 = vunpack.c.l.b16 %v652
    %v670 = vunpack.c.l.b16 %v653
    %v671 = vpack.c.b16 %v664, %v663
    %v672 = vpack.c.b16 %v666, %v665
    %v673 = vpack.c.b16 %v668, %v667
    %v674 = vpack.c.b16 %v670, %v669
    %vm679 = vcmask 523264
    %v681 = vsel %vm679, %v654, 0
    %683 = vmatprep.subr.bf16.mxu0 0
    %684 = vmatpush1.bf16.msra.mxu0 0
    %685 = vmatprep.subr.bf16.mxu0 0
    %686 = vmatpush1.bf16.msra.mxu0 0
    %687 = vmatprep.subr.bf16.mxu0 0
    %688 = vmatpush1.bf16.msra.mxu0 0
    %689 = vmatprep.subr.bf16.mxu0 0
    %690 = vmatpush1.bf16.msra.mxu0 0
    %691 = vmatprep.subr.bf16.mxu0 0
    %692 = vmatpush1.bf16.msra.mxu0 %v674
    %693 = vmatprep.subr.bf16.mxu0 0
    %694 = vmatpush1.bf16.msra.mxu0 %v673
    %695 = vmatprep.subr.bf16.mxu0 0
    %696 = vmatpush1.bf16.msra.mxu0 %v672
    %697 = vmatprep.subr.bf16.mxu0 0
    %698 = vmatpush1.bf16.msra.mxu0 %v671
    %699 = vmatprep.subr.bf16.mxu0 0
    %700 = vmatpush2.bf16.msra.mxu0 0
    %701 = vmatprep.subr.bf16.mxu0 0
    %702 = vmatpush2.bf16.msra.mxu0 0
    %703 = vmatprep.subr.bf16.mxu0 0
    %704 = vmatpush2.bf16.msra.mxu0 0
    %705 = vmatprep.subr.bf16.mxu0 0
    %706 = vmatpush2.bf16.msra.mxu0 0
    %707 = vmatprep.subr.bf16.mxu0 0
    %708 = vmatpush2.bf16.msra.mxu0 0
    %709 = vmatprep.subr.bf16.mxu0 0
    %710 = vmatpush2.bf16.msra.mxu0 0
    %711 = vmatprep.subr.bf16.mxu0 0
    %712 = vmatpush2.bf16.msra.mxu0 0
    %713 = vmatprep.subr.bf16.mxu0 0
    %714 = vmatpush2.bf16.msra.mxu0 0
    %715 = vmatprep.mubr.bf16.mxu0 0
    %716 = vmatmul.mubr.bf16.gmra.mxu0 %v681
    %v717 = vpop.f32.mrf.mxu0
    %v718 = vadd.f32 0.0, %v717
    %v719 = vpop.f32.mrf.mxu0
    %v720 = vpop.f32.mrf.mxu0
    %v721 = vpop.f32.mrf.mxu0
    %722 = vdwg.mxu0
    %v731 = vunpack.c.l.b16 %v637
    %v732 = vunpack.c.l.b16 %v638
    %v733 = vunpack.c.l.b16 %v639
    %v734 = vunpack.c.l.b16 %v640
    %v735 = vunpack.c.l.b16 %v641
    %v736 = vunpack.c.l.b16 %v642
    %v737 = vunpack.c.l.b16 %v643
    %v738 = vunpack.c.l.b16 %v644
    %v739 = vpack.c.b16 %v732, %v731
    %v740 = vpack.c.b16 %v734, %v733
    %v741 = vpack.c.b16 %v736, %v735
    %v742 = vpack.c.b16 %v738, %v737
    %v748 = vsel %vm679, %v645, 0
    %750 = vmatprep.subr.bf16.mxu0 0
    %751 = vmatpush1.bf16.msra.mxu0 0
    %752 = vmatprep.subr.bf16.mxu0 0
    %753 = vmatpush1.bf16.msra.mxu0 0
    %754 = vmatprep.subr.bf16.mxu0 0
    %755 = vmatpush1.bf16.msra.mxu0 0
    %756 = vmatprep.subr.bf16.mxu0 0
    %757 = vmatpush1.bf16.msra.mxu0 0
    %758 = vmatprep.subr.bf16.mxu0 0
    %759 = vmatpush1.bf16.msra.mxu0 %v742
    %760 = vmatprep.subr.bf16.mxu0 0
    %761 = vmatpush1.bf16.msra.mxu0 %v741
    %762 = vmatprep.subr.bf16.mxu0 0
    %763 = vmatpush1.bf16.msra.mxu0 %v740
    %764 = vmatprep.subr.bf16.mxu0 0
    %765 = vmatpush1.bf16.msra.mxu0 %v739
    %766 = vmatprep.subr.bf16.mxu0 0
    %767 = vmatpush2.bf16.msra.mxu0 0
    %768 = vmatprep.subr.bf16.mxu0 0
    %769 = vmatpush2.bf16.msra.mxu0 0
    %770 = vmatprep.subr.bf16.mxu0 0
    %771 = vmatpush2.bf16.msra.mxu0 0
    %772 = vmatprep.subr.bf16.mxu0 0
    %773 = vmatpush2.bf16.msra.mxu0 0
    %774 = vmatprep.subr.bf16.mxu0 0
    %775 = vmatpush2.bf16.msra.mxu0 0
    %776 = vmatprep.subr.bf16.mxu0 0
    %777 = vmatpush2.bf16.msra.mxu0 0
    %778 = vmatprep.subr.bf16.mxu0 0
    %779 = vmatpush2.bf16.msra.mxu0 0
    %780 = vmatprep.subr.bf16.mxu0 0
    %781 = vmatpush2.bf16.msra.mxu0 0
    %782 = vmatprep.mubr.bf16.mxu0 0
    %783 = vmatmul.mubr.bf16.gmra.mxu0 %v748
    %v784 = vpop.f32.mrf.mxu0
    %v785 = vadd.f32 %v718, %v784
    %v786 = vpop.f32.mrf.mxu0
    %v787 = vpop.f32.mrf.mxu0
    %v788 = vpop.f32.mrf.mxu0
    %789 = vdwg.mxu0
    %v790 = vld [vmem:[#allocation7 + $0x118] sm:$0xf]
    %v791 = vld [vmem:[#allocation7 + $0x11c] sm:$0xf]
    %v792 = vld [vmem:[#allocation7 + $0x120] sm:$0xf]
    %v793 = vld [vmem:[#allocation7 + $0x124] sm:$0xf]
    %v794 = vld [vmem:[#allocation7 + $0x128] sm:$0xf]
    %v795 = vld [vmem:[#allocation7 + $0x12c] sm:$0xf]
    %v796 = vld [vmem:[#allocation7 + $0x130] sm:$0xf]
    %v797 = vld [vmem:[#allocation7 + $0x134] sm:$0xf]
    %v798 = vpack.c.bf16 %v636, %v636
    %v807 = vunpack.c.l.b16 %v790
    %v808 = vunpack.c.l.b16 %v791
    %v809 = vunpack.c.l.b16 %v792
    %v810 = vunpack.c.l.b16 %v793
    %v811 = vunpack.c.l.b16 %v794
    %v812 = vunpack.c.l.b16 %v795
    %v813 = vunpack.c.l.b16 %v796
    %v814 = vunpack.c.l.b16 %v797
    %v815 = vpack.c.b16 %v808, %v807
    %v816 = vpack.c.b16 %v810, %v809
    %v817 = vpack.c.b16 %v812, %v811
    %v818 = vpack.c.b16 %v814, %v813
    %v824 = vsel %vm679, %v798, 0
    %826 = vmatprep.subr.bf16.mxu0 0
    %827 = vmatpush1.bf16.msra.mxu0 0
    %828 = vmatprep.subr.bf16.mxu0 0
    %829 = vmatpush1.bf16.msra.mxu0 0
    %830 = vmatprep.subr.bf16.mxu0 0
    %831 = vmatpush1.bf16.msra.mxu0 0
    %832 = vmatprep.subr.bf16.mxu0 0
    %833 = vmatpush1.bf16.msra.mxu0 0
    %834 = vmatprep.subr.bf16.mxu0 0
    %835 = vmatpush1.bf16.msra.mxu0 %v818
    %836 = vmatprep.subr.bf16.mxu0 0
    %837 = vmatpush1.bf16.msra.mxu0 %v817
    %838 = vmatprep.subr.bf16.mxu0 0
    %839 = vmatpush1.bf16.msra.mxu0 %v816
    %840 = vmatprep.subr.bf16.mxu0 0
    %841 = vmatpush1.bf16.msra.mxu0 %v815
    %842 = vmatprep.subr.bf16.mxu0 0
    %843 = vmatpush2.bf16.msra.mxu0 0
    %844 = vmatprep.subr.bf16.mxu0 0
    %845 = vmatpush2.bf16.msra.mxu0 0
    %846 = vmatprep.subr.bf16.mxu0 0
    %847 = vmatpush2.bf16.msra.mxu0 0
    %848 = vmatprep.subr.bf16.mxu0 0
    %849 = vmatpush2.bf16.msra.mxu0 0
    %850 = vmatprep.subr.bf16.mxu0 0
    %851 = vmatpush2.bf16.msra.mxu0 0
    %852 = vmatprep.subr.bf16.mxu0 0
    %853 = vmatpush2.bf16.msra.mxu0 0
    %854 = vmatprep.subr.bf16.mxu0 0
    %855 = vmatpush2.bf16.msra.mxu0 0
    %856 = vmatprep.subr.bf16.mxu0 0
    %857 = vmatpush2.bf16.msra.mxu0 0
    %858 = vmatprep.mubr.bf16.mxu0 0
    %859 = vmatmul.mubr.bf16.gmra.mxu0 %v824
    %v860 = vpop.f32.mrf.mxu0
    %v861 = vadd.f32 0.0, %v860
    %v862 = vpop.f32.mrf.mxu0
    %v863 = vpop.f32.mrf.mxu0
    %v864 = vpop.f32.mrf.mxu0
    %865 = vdwg.mxu0
    %v866 = vadd.f32 %v785, %v861
    %v867 = vld [vmem:[#allocation7 + $0x138] sm:$0x1]
    %v868 = vunpack.c.l.bf16 %v867
    %v869 = vlaneseq
    %v870 = vshrl.u32 %v869, 7
    %v871 = vsub.s32 0, %v870
    %v872 = vrot.slane %v868, %v871
    %v873 = vadd.f32 %v866, %v872
    %v874 = vmul.f32 %v873, 0.1
    %v891 = vunpack.c.l.b16 %v266
    %v892 = vunpack.c.l.b16 %v267
    %v893 = vunpack.c.l.b16 %v268
    %v894 = vunpack.c.l.b16 %v269
    %v895 = vunpack.c.l.b16 %v270
    %v896 = vunpack.c.l.b16 %v271
    %v897 = vunpack.c.l.b16 %v272
    %v898 = vunpack.c.l.b16 %v273
    %v899 = vunpack.c.l.b16 %v274
    %v900 = vunpack.c.l.b16 %v275
    %v901 = vunpack.c.l.b16 %v276
    %v902 = vunpack.c.l.b16 %v277
    %v903 = vunpack.c.l.b16 %v278
    %v904 = vunpack.c.l.b16 %v279
    %v905 = vunpack.c.l.b16 %v280
    %v906 = vunpack.c.l.b16 %v281
    %v907 = vpack.c.b16 %v892, %v891
    %v908 = vpack.c.b16 %v894, %v893
    %v909 = vpack.c.b16 %v896, %v895
    %v910 = vpack.c.b16 %v898, %v897
    %v911 = vpack.c.b16 %v900, %v899
    %v912 = vpack.c.b16 %v902, %v901
    %v913 = vpack.c.b16 %v904, %v903
    %v914 = vpack.c.b16 %v906, %v905
    %923 = vmatprep.subr.bf16.mxu0 0
    %924 = vmatpush1.bf16.msra.mxu0 %v914
    %925 = vmatprep.subr.bf16.mxu0 0
    %926 = vmatpush1.bf16.msra.mxu0 %v913
    %927 = vmatprep.subr.bf16.mxu0 0
    %928 = vmatpush1.bf16.msra.mxu0 %v912
    %929 = vmatprep.subr.bf16.mxu0 0
    %930 = vmatpush1.bf16.msra.mxu0 %v911
    %931 = vmatprep.subr.bf16.mxu0 0
    %932 = vmatpush1.bf16.msra.mxu0 %v910
    %933 = vmatprep.subr.bf16.mxu0 0
    %934 = vmatpush1.bf16.msra.mxu0 %v909
    %935 = vmatprep.subr.bf16.mxu0 0
    %936 = vmatpush1.bf16.msra.mxu0 %v908
    %937 = vmatprep.subr.bf16.mxu0 0
    %938 = vmatpush1.bf16.msra.mxu0 %v907
    %939 = vmatprep.subr.bf16.mxu0 0
    %940 = vmatpush2.bf16.msra.mxu0 0
    %941 = vmatprep.subr.bf16.mxu0 0
    %942 = vmatpush2.bf16.msra.mxu0 0
    %943 = vmatprep.subr.bf16.mxu0 0
    %944 = vmatpush2.bf16.msra.mxu0 0
    %945 = vmatprep.subr.bf16.mxu0 0
    %946 = vmatpush2.bf16.msra.mxu0 0
    %947 = vmatprep.subr.bf16.mxu0 0
    %948 = vmatpush2.bf16.msra.mxu0 0
    %949 = vmatprep.subr.bf16.mxu0 0
    %950 = vmatpush2.bf16.msra.mxu0 0
    %951 = vmatprep.subr.bf16.mxu0 0
    %952 = vmatpush2.bf16.msra.mxu0 0
    %953 = vmatprep.subr.bf16.mxu0 0
    %954 = vmatpush2.bf16.msra.mxu0 0
    %955 = vmatprep.mubr.bf16.mxu0 0
    %956 = vmatmul.mubr.bf16.gmra.mxu0 %v282
    %v957 = vpop.f32.mrf.mxu0
    %v958 = vadd.f32 %v874, %v957
    %v959 = vpop.f32.mrf.mxu0
    %v960 = vpop.f32.mrf.mxu0
    %v961 = vpop.f32.mrf.mxu0
    %962 = vdwg.mxu0
    %v963 = vld [vmem:[#allocation7 + $0x1a0] sm:$0xf]
    %v964 = vld [vmem:[#allocation7 + $0x1a4] sm:$0xf]
    %v965 = vld [vmem:[#allocation7 + $0x180] sm:$0xf]
    %v966 = vld [vmem:[#allocation7 + $0x184] sm:$0xf]
    %v967 = vld [vmem:[#allocation7 + $0x188] sm:$0xf]
    %v968 = vld [vmem:[#allocation7 + $0x18c] sm:$0xf]
    %v969 = vld [vmem:[#allocation7 + $0x190] sm:$0xf]
    %v970 = vld [vmem:[#allocation7 + $0x194] sm:$0xf]
    %v971 = vld [vmem:[#allocation7 + $0x198] sm:$0xf]
    %v972 = vld [vmem:[#allocation7 + $0x19c] sm:$0xf]
    %v973 = vpack.c.bf16 %v958, %v958
    %v982 = vunpack.c.l.b16 %v965
    %v983 = vunpack.c.l.b16 %v966
    %v984 = vunpack.c.l.b16 %v967
    %v985 = vunpack.c.l.b16 %v968
    %v986 = vunpack.c.l.b16 %v969
    %v987 = vunpack.c.l.b16 %v970
    %v988 = vunpack.c.l.b16 %v971
    %v989 = vunpack.c.l.b16 %v972
    %v990 = vpack.c.b16 %v983, %v982
    %v991 = vpack.c.b16 %v985, %v984
    %v992 = vpack.c.b16 %v987, %v986
    %v993 = vpack.c.b16 %v989, %v988
    %v999 = vsel %vm679, %v973, 0
    %1001 = vmatprep.subr.bf16.mxu0 0
    %1002 = vmatpush1.bf16.msra.mxu0 0
    %1003 = vmatprep.subr.bf16.mxu0 0
    %1004 = vmatpush1.bf16.msra.mxu0 0
    %1005 = vmatprep.subr.bf16.mxu0 0
    %1006 = vmatpush1.bf16.msra.mxu0 0
    %1007 = vmatprep.subr.bf16.mxu0 0
    %1008 = vmatpush1.bf16.msra.mxu0 0
    %1009 = vmatprep.subr.bf16.mxu0 0
    %1010 = vmatpush1.bf16.msra.mxu0 %v993
    %1011 = vmatprep.subr.bf16.mxu0 0
    %1012 = vmatpush1.bf16.msra.mxu0 %v992
    %1013 = vmatprep.subr.bf16.mxu0 0
    %1014 = vmatpush1.bf16.msra.mxu0 %v991
    %1015 = vmatprep.subr.bf16.mxu0 0
    %1016 = vmatpush1.bf16.msra.mxu0 %v990
    %1017 = vmatprep.subr.bf16.mxu0 0
    %1018 = vmatpush2.bf16.msra.mxu0 0
    %1019 = vmatprep.subr.bf16.mxu0 0
    %1020 = vmatpush2.bf16.msra.mxu0 0
    %1021 = vmatprep.subr.bf16.mxu0 0
    %1022 = vmatpush2.bf16.msra.mxu0 0
    %1023 = vmatprep.subr.bf16.mxu0 0
    %1024 = vmatpush2.bf16.msra.mxu0 0
    %1025 = vmatprep.subr.bf16.mxu0 0
    %1026 = vmatpush2.bf16.msra.mxu0 0
    %1027 = vmatprep.subr.bf16.mxu0 0
    %1028 = vmatpush2.bf16.msra.mxu0 0
    %1029 = vmatprep.subr.bf16.mxu0 0
    %1030 = vmatpush2.bf16.msra.mxu0 0
    %1031 = vmatprep.subr.bf16.mxu0 0
    %1032 = vmatpush2.bf16.msra.mxu0 0
    %1033 = vmatprep.mubr.bf16.mxu0 0
    %1034 = vmatmul.mubr.bf16.gmra.mxu0 %v999
    %v1035 = vpop.f32.mrf.mxu0
    %v1036 = vadd.f32 0.0, %v1035
    %v1037 = vpop.f32.mrf.mxu0
    %v1038 = vpop.f32.mrf.mxu0
    %v1039 = vpop.f32.mrf.mxu0
    %1040 = vdwg.mxu0
    %v1041 = vpack.c.bf16 %v1036, %v1036
    %v1044 = vunpack.c.l.b16 %v963
    %v1045 = vunpack.c.l.b16 %v964
    %v1046 = vpack.c.b16 %v1045, %v1044
    %vm1047 = vcmask 64512
    %v1049 = vsel %vm1047, %v1046, 0
    %vm1051 = vcmask 1043456
    %v1053 = vsel %vm1051, %v1041, 0
    %1055 = vmatprep.subr.bf16.mxu0 0
    %1056 = vmatpush1.bf16.msra.mxu0 0
    %1057 = vmatprep.subr.bf16.mxu0 0
    %1058 = vmatpush1.bf16.msra.mxu0 0
    %1059 = vmatprep.subr.bf16.mxu0 0
    %1060 = vmatpush1.bf16.msra.mxu0 0
    %1061 = vmatprep.subr.bf16.mxu0 0
    %1062 = vmatpush1.bf16.msra.mxu0 0
    %1063 = vmatprep.subr.bf16.mxu0 0
    %1064 = vmatpush1.bf16.msra.mxu0 0
    %1065 = vmatprep.subr.bf16.mxu0 0
    %1066 = vmatpush1.bf16.msra.mxu0 0
    %1067 = vmatprep.subr.bf16.mxu0 0
    %1068 = vmatpush1.bf16.msra.mxu0 0
    %1069 = vmatprep.subr.bf16.mxu0 0
    %1070 = vmatpush1.bf16.msra.mxu0 %v1053
    %1071 = vmatprep.subr.bf16.mxu0 0
    %1072 = vmatpush2.bf16.msra.mxu0 0
    %1073 = vmatprep.subr.bf16.mxu0 0
    %1074 = vmatpush2.bf16.msra.mxu0 0
    %1075 = vmatprep.subr.bf16.mxu0 0
    %1076 = vmatpush2.bf16.msra.mxu0 0
    %1077 = vmatprep.subr.bf16.mxu0 0
    %1078 = vmatpush2.bf16.msra.mxu0 0
    %1079 = vmatprep.subr.bf16.mxu0 0
    %1080 = vmatpush2.bf16.msra.mxu0 0
    %1081 = vmatprep.subr.bf16.mxu0 0
    %1082 = vmatpush2.bf16.msra.mxu0 0
    %1083 = vmatprep.subr.bf16.mxu0 0
    %1084 = vmatpush2.bf16.msra.mxu0 0
    %1085 = vmatprep.subr.bf16.mxu0 0
    %1086 = vmatpush2.bf16.msra.mxu0 0
    %1087 = vmatprep.mubr.bf16.mxu0 0
    %1088 = vmatmul.mubr.bf16.gmra.mxu0 %v1049
    %v1089 = vpop.f32.mrf.mxu0
    %v1090 = vadd.f32 0.0, %v1089
    %v1091 = vpop.f32.mrf.mxu0
    %v1092 = vpop.f32.mrf.mxu0
    %v1093 = vadd.f32 0.0, %v1092
    %v1094 = vpop.f32.mrf.mxu0
    %1095 = vdwg.mxu0
    %v1096 = vld [vmem:[#allocation7 + $0x2d8] sm:$0xf]
    %v1097 = vld [vmem:[#allocation7 + $0x2dc] sm:$0xf]
    %v1098 = vld [vmem:[#allocation7 + $0x2e0] sm:$0xf]
    %v1099 = vld [vmem:[#allocation7 + $0x2e4] sm:$0xf]
    %v1100 = vld [vmem:[#allocation7 + $0x2e8] sm:$0xf]
    %v1101 = vld [vmem:[#allocation7 + $0x2ec] sm:$0xf]
    %v1102 = vld [vmem:[#allocation7 + $0x2f0] sm:$0xf]
    %v1103 = vld [vmem:[#allocation7 + $0x2f4] sm:$0xf]
    %v1104 = vld [vmem:[#allocation7 + $0x2f8] sm:$0xf]
    %v1105 = vld [vmem:[#allocation7 + $0x2fc] sm:$0xf]
    %v1106 = vld [vmem:[#allocation7 + $0x300] sm:$0xf]
    %v1107 = vld [vmem:[#allocation7 + $0x304] sm:$0xf]
    %v1108 = vld [vmem:[#allocation7 + $0x308] sm:$0xf]
    %v1109 = vld [vmem:[#allocation7 + $0x30c] sm:$0xf]
    %v1110 = vld [vmem:[#allocation7 + $0x310] sm:$0xf]
    %v1111 = vld [vmem:[#allocation7 + $0x314] sm:$0xf]
    %v1112 = vpack.c.bf16 %v1093, %v1090
    %vm1113 = vcmp.gt.f32.partialorder %v1090, 0.0
    %vm1114 = vcmp.gt.f32.partialorder %v1093, 0.0
    %v1115 = vmul.f32 %v1090, 0.2
    %v1116 = vmul.f32 %v1093, 0.2
    %v1117 = vsel %vm1113, %v1090, %v1115
    %v1118 = vsel %vm1114, %v1093, %v1116
    %v1119 = vadd.s32 %v242, 8
    %v1120 = vand.u32 %v242, 7
    %v1121 = vand.u32 %v1119, 7
    %vm1122 = vcmp.ne.s32.totalorder %v1120, 0
    %vm1123 = vcmp.ne.s32.totalorder %v1121, 0
    %vm1124 = vcmp.ne.s32.totalorder %v1120, 7
    %vm1125 = vcmp.ne.s32.totalorder %v1121, 7
    %v1127 = vrot.slane %v1118, 7
    %v1130 = vrot.slane %v1117, 7
    %v1131 = vsel %vm62, %v1130, %v1127
    %v1134 = vsel %vm62, %v1127, %v1130
    %v1135 = vsel %vm1122, 1, 0
    %v1136 = vsel %vm1123, 1, 0
    %vm1137 = vcmp.eq.s32.totalorder %v1135, 1
    %vm1138 = vcmp.eq.s32.totalorder %v1136, 1
    %v1139 = vsel %vm1137, %v1134, 0.0
    %v1140 = vsel %vm1138, %v1131, 0.0
    %v1141 = vrot.slane %v1117, 1
    %v1142 = vrot.slane %v1118, 1
    %v1143 = vsel %vm297, %v1141, %v1142
    %v1147 = vsel %vm297, %v1142, %v1141
    %v1148 = vsel %vm1124, 1, 0
    %v1149 = vsel %vm1125, 1, 0
    %vm1150 = vcmp.eq.s32.totalorder %v1148, 1
    %vm1151 = vcmp.eq.s32.totalorder %v1149, 1
    %v1152 = vsel %vm1150, %v1143, 0.0
    %v1153 = vsel %vm1151, %v1147, 0.0
    %v1154 = vld [vmem:[#allocation7 + $0x1a8] sm:$0xf]
    %v1155 = vld [vmem:[#allocation7 + $0x1ac] sm:$0xf]
    %v1156 = vld [vmem:[#allocation7 + $0x1b0] sm:$0xf]
    %v1157 = vld [vmem:[#allocation7 + $0x1b4] sm:$0xf]
    %v1158 = vld [vmem:[#allocation7 + $0x1b8] sm:$0xf]
    %v1159 = vld [vmem:[#allocation7 + $0x1bc] sm:$0xf]
    %v1160 = vld [vmem:[#allocation7 + $0x1c0] sm:$0xf]
    %v1161 = vld [vmem:[#allocation7 + $0x1c4] sm:$0xf]
    %v1162 = vld [vmem:[#allocation7 + $0x1c8] sm:$0xf]
    %v1163 = vld [vmem:[#allocation7 + $0x1cc] sm:$0xf]
    %v1164 = vld [vmem:[#allocation7 + $0x1d0] sm:$0xf]
    %v1165 = vld [vmem:[#allocation7 + $0x1d4] sm:$0xf]
    %v1166 = vld [vmem:[#allocation7 + $0x1d8] sm:$0xf]
    %v1167 = vld [vmem:[#allocation7 + $0x1dc] sm:$0xf]
    %v1168 = vld [vmem:[#allocation7 + $0x1e0] sm:$0xf]
    %v1169 = vld [vmem:[#allocation7 + $0x1e4] sm:$0xf]
    %v1170 = vpack.c.bf16 %v1140, %v1139
    %v1171 = vld [vmem:[#allocation7 + $0x1e8] sm:$0xf]
    %v1172 = vld [vmem:[#allocation7 + $0x1ec] sm:$0xf]
    %v1173 = vld [vmem:[#allocation7 + $0x1f0] sm:$0xf]
    %v1174 = vld [vmem:[#allocation7 + $0x1f4] sm:$0xf]
    %v1175 = vld [vmem:[#allocation7 + $0x1f8] sm:$0xf]
    %v1176 = vld [vmem:[#allocation7 + $0x1fc] sm:$0xf]
    %v1177 = vld [vmem:[#allocation7 + $0x200] sm:$0xf]
    %v1178 = vld [vmem:[#allocation7 + $0x204] sm:$0xf]
    %v1179 = vld [vmem:[#allocation7 + $0x208] sm:$0xf]
    %v1180 = vld [vmem:[#allocation7 + $0x20c] sm:$0xf]
    %v1181 = vld [vmem:[#allocation7 + $0x210] sm:$0xf]
    %v1182 = vld [vmem:[#allocation7 + $0x214] sm:$0xf]
    %v1183 = vld [vmem:[#allocation7 + $0x218] sm:$0xf]
    %v1184 = vld [vmem:[#allocation7 + $0x21c] sm:$0xf]
    %v1185 = vld [vmem:[#allocation7 + $0x220] sm:$0xf]
    %v1186 = vld [vmem:[#allocation7 + $0x224] sm:$0xf]
    %v1187 = vpack.c.bf16 %v1118, %v1117
    %v1204 = vunpack.c.l.b16 %v1171
    %v1205 = vunpack.c.l.b16 %v1172
    %v1206 = vunpack.c.l.b16 %v1173
    %v1207 = vunpack.c.l.b16 %v1174
    %v1208 = vunpack.c.l.b16 %v1175
    %v1209 = vunpack.c.l.b16 %v1176
    %v1210 = vunpack.c.l.b16 %v1177
    %v1211 = vunpack.c.l.b16 %v1178
    %v1212 = vunpack.c.l.b16 %v1179
    %v1213 = vunpack.c.l.b16 %v1180
    %v1214 = vunpack.c.l.b16 %v1181
    %v1215 = vunpack.c.l.b16 %v1182
    %v1216 = vunpack.c.l.b16 %v1183
    %v1217 = vunpack.c.l.b16 %v1184
    %v1218 = vunpack.c.l.b16 %v1185
    %v1219 = vunpack.c.l.b16 %v1186
    %v1220 = vpack.c.b16 %v1205, %v1204
    %v1221 = vpack.c.b16 %v1207, %v1206
    %v1222 = vpack.c.b16 %v1209, %v1208
    %v1223 = vpack.c.b16 %v1211, %v1210
    %v1224 = vpack.c.b16 %v1213, %v1212
    %v1225 = vpack.c.b16 %v1215, %v1214
    %v1226 = vpack.c.b16 %v1217, %v1216
    %v1227 = vpack.c.b16 %v1219, %v1218
    %1236 = vmatprep.subr.bf16.mxu0 0
    %1237 = vmatpush1.bf16.msra.mxu0 %v1227
    %1238 = vmatprep.subr.bf16.mxu0 0
    %1239 = vmatpush1.bf16.msra.mxu0 %v1226
    %1240 = vmatprep.subr.bf16.mxu0 0
    %1241 = vmatpush1.bf16.msra.mxu0 %v1225
    %1242 = vmatprep.subr.bf16.mxu0 0
    %1243 = vmatpush1.bf16.msra.mxu0 %v1224
    %1244 = vmatprep.subr.bf16.mxu0 0
    %1245 = vmatpush1.bf16.msra.mxu0 %v1223
    %1246 = vmatprep.subr.bf16.mxu0 0
    %1247 = vmatpush1.bf16.msra.mxu0 %v1222
    %1248 = vmatprep.subr.bf16.mxu0 0
    %1249 = vmatpush1.bf16.msra.mxu0 %v1221
    %1250 = vmatprep.subr.bf16.mxu0 0
    %1251 = vmatpush1.bf16.msra.mxu0 %v1220
    %1252 = vmatprep.subr.bf16.mxu0 0
    %1253 = vmatpush2.bf16.msra.mxu0 0
    %1254 = vmatprep.subr.bf16.mxu0 0
    %1255 = vmatpush2.bf16.msra.mxu0 0
    %1256 = vmatprep.subr.bf16.mxu0 0
    %1257 = vmatpush2.bf16.msra.mxu0 0
    %1258 = vmatprep.subr.bf16.mxu0 0
    %1259 = vmatpush2.bf16.msra.mxu0 0
    %1260 = vmatprep.subr.bf16.mxu0 0
    %1261 = vmatpush2.bf16.msra.mxu0 0
    %1262 = vmatprep.subr.bf16.mxu0 0
    %1263 = vmatpush2.bf16.msra.mxu0 0
    %1264 = vmatprep.subr.bf16.mxu0 0
    %1265 = vmatpush2.bf16.msra.mxu0 0
    %1266 = vmatprep.subr.bf16.mxu0 0
    %1267 = vmatpush2.bf16.msra.mxu0 0
    %1268 = vmatprep.mubr.bf16.mxu0 0
    %1269 = vmatmul.mubr.bf16.gmra.mxu0 %v1187
    %v1270 = vpop.f32.mrf.mxu0
    %v1271 = vadd.f32 0.0, %v1270
    %v1272 = vpop.f32.mrf.mxu0
    %v1273 = vpop.f32.mrf.mxu0
    %v1274 = vadd.f32 0.0, %v1273
    %v1275 = vpop.f32.mrf.mxu0
    %1276 = vdwg.mxu0
    %v1293 = vunpack.c.l.b16 %v1154
    %v1294 = vunpack.c.l.b16 %v1155
    %v1295 = vunpack.c.l.b16 %v1156
    %v1296 = vunpack.c.l.b16 %v1157
    %v1297 = vunpack.c.l.b16 %v1158
    %v1298 = vunpack.c.l.b16 %v1159
    %v1299 = vunpack.c.l.b16 %v1160
    %v1300 = vunpack.c.l.b16 %v1161
    %v1301 = vunpack.c.l.b16 %v1162
    %v1302 = vunpack.c.l.b16 %v1163
    %v1303 = vunpack.c.l.b16 %v1164
    %v1304 = vunpack.c.l.b16 %v1165
    %v1305 = vunpack.c.l.b16 %v1166
    %v1306 = vunpack.c.l.b16 %v1167
    %v1307 = vunpack.c.l.b16 %v1168
    %v1308 = vunpack.c.l.b16 %v1169
    %v1309 = vpack.c.b16 %v1294, %v1293
    %v1310 = vpack.c.b16 %v1296, %v1295
    %v1311 = vpack.c.b16 %v1298, %v1297
    %v1312 = vpack.c.b16 %v1300, %v1299
    %v1313 = vpack.c.b16 %v1302, %v1301
    %v1314 = vpack.c.b16 %v1304, %v1303
    %v1315 = vpack.c.b16 %v1306, %v1305
    %v1316 = vpack.c.b16 %v1308, %v1307
    %1325 = vmatprep.subr.bf16.mxu0 0
    %1326 = vmatpush1.bf16.msra.mxu0 %v1316
    %1327 = vmatprep.subr.bf16.mxu0 0
    %1328 = vmatpush1.bf16.msra.mxu0 %v1315
    %1329 = vmatprep.subr.bf16.mxu0 0
    %1330 = vmatpush1.bf16.msra.mxu0 %v1314
    %1331 = vmatprep.subr.bf16.mxu0 0
    %1332 = vmatpush1.bf16.msra.mxu0 %v1313
    %1333 = vmatprep.subr.bf16.mxu0 0
    %1334 = vmatpush1.bf16.msra.mxu0 %v1312
    %1335 = vmatprep.subr.bf16.mxu0 0
    %1336 = vmatpush1.bf16.msra.mxu0 %v1311
    %1337 = vmatprep.subr.bf16.mxu0 0
    %1338 = vmatpush1.bf16.msra.mxu0 %v1310
    %1339 = vmatprep.subr.bf16.mxu0 0
    %1340 = vmatpush1.bf16.msra.mxu0 %v1309
    %1341 = vmatprep.subr.bf16.mxu0 0
    %1342 = vmatpush2.bf16.msra.mxu0 0
    %1343 = vmatprep.subr.bf16.mxu0 0
    %1344 = vmatpush2.bf16.msra.mxu0 0
    %1345 = vmatprep.subr.bf16.mxu0 0
    %1346 = vmatpush2.bf16.msra.mxu0 0
    %1347 = vmatprep.subr.bf16.mxu0 0
    %1348 = vmatpush2.bf16.msra.mxu0 0
    %1349 = vmatprep.subr.bf16.mxu0 0
    %1350 = vmatpush2.bf16.msra.mxu0 0
    %1351 = vmatprep.subr.bf16.mxu0 0
    %1352 = vmatpush2.bf16.msra.mxu0 0
    %1353 = vmatprep.subr.bf16.mxu0 0
    %1354 = vmatpush2.bf16.msra.mxu0 0
    %1355 = vmatprep.subr.bf16.mxu0 0
    %1356 = vmatpush2.bf16.msra.mxu0 0
    %1357 = vmatprep.mubr.bf16.mxu0 0
    %1358 = vmatmul.mubr.bf16.gmra.mxu0 %v1170
    %v1359 = vpop.f32.mrf.mxu0
    %v1360 = vadd.f32 %v1271, %v1359
    %v1361 = vpop.f32.mrf.mxu0
    %v1362 = vpop.f32.mrf.mxu0
    %v1363 = vadd.f32 %v1274, %v1362
    %v1364 = vpop.f32.mrf.mxu0
    %1365 = vdwg.mxu0
    %v1366 = vld [vmem:[#allocation7 + $0x228] sm:$0xf]
    %v1367 = vld [vmem:[#allocation7 + $0x22c] sm:$0xf]
    %v1368 = vld [vmem:[#allocation7 + $0x230] sm:$0xf]
    %v1369 = vld [vmem:[#allocation7 + $0x234] sm:$0xf]
    %v1370 = vld [vmem:[#allocation7 + $0x238] sm:$0xf]
    %v1371 = vld [vmem:[#allocation7 + $0x23c] sm:$0xf]
    %v1372 = vld [vmem:[#allocation7 + $0x240] sm:$0xf]
    %v1373 = vld [vmem:[#allocation7 + $0x244] sm:$0xf]
    %v1374 = vld [vmem:[#allocation7 + $0x248] sm:$0xf]
    %v1375 = vld [vmem:[#allocation7 + $0x24c] sm:$0xf]
    %v1376 = vld [vmem:[#allocation7 + $0x250] sm:$0xf]
    %v1377 = vld [vmem:[#allocation7 + $0x254] sm:$0xf]
    %v1378 = vld [vmem:[#allocation7 + $0x258] sm:$0xf]
    %v1379 = vld [vmem:[#allocation7 + $0x25c] sm:$0xf]
    %v1380 = vld [vmem:[#allocation7 + $0x260] sm:$0xf]
    %v1381 = vld [vmem:[#allocation7 + $0x264] sm:$0xf]
    %v1382 = vpack.c.bf16 %v1153, %v1152
    %v1399 = vunpack.c.l.b16 %v1366
    %v1400 = vunpack.c.l.b16 %v1367
    %v1401 = vunpack.c.l.b16 %v1368
    %v1402 = vunpack.c.l.b16 %v1369
    %v1403 = vunpack.c.l.b16 %v1370
    %v1404 = vunpack.c.l.b16 %v1371
    %v1405 = vunpack.c.l.b16 %v1372
    %v1406 = vunpack.c.l.b16 %v1373
    %v1407 = vunpack.c.l.b16 %v1374
    %v1408 = vunpack.c.l.b16 %v1375
    %v1409 = vunpack.c.l.b16 %v1376
    %v1410 = vunpack.c.l.b16 %v1377
    %v1411 = vunpack.c.l.b16 %v1378
    %v1412 = vunpack.c.l.b16 %v1379
    %v1413 = vunpack.c.l.b16 %v1380
    %v1414 = vunpack.c.l.b16 %v1381
    %v1415 = vpack.c.b16 %v1400, %v1399
    %v1416 = vpack.c.b16 %v1402, %v1401
    %v1417 = vpack.c.b16 %v1404, %v1403
    %v1418 = vpack.c.b16 %v1406, %v1405
    %v1419 = vpack.c.b16 %v1408, %v1407
    %v1420 = vpack.c.b16 %v1410, %v1409
    %v1421 = vpack.c.b16 %v1412, %v1411
    %v1422 = vpack.c.b16 %v1414, %v1413
    %1431 = vmatprep.subr.bf16.mxu0 0
    %1432 = vmatpush1.bf16.msra.mxu0 %v1422
    %1433 = vmatprep.subr.bf16.mxu0 0
    %1434 = vmatpush1.bf16.msra.mxu0 %v1421
    %1435 = vmatprep.subr.bf16.mxu0 0
    %1436 = vmatpush1.bf16.msra.mxu0 %v1420
    %1437 = vmatprep.subr.bf16.mxu0 0
    %1438 = vmatpush1.bf16.msra.mxu0 %v1419
    %1439 = vmatprep.subr.bf16.mxu0 0
    %1440 = vmatpush1.bf16.msra.mxu0 %v1418
    %1441 = vmatprep.subr.bf16.mxu0 0
    %1442 = vmatpush1.bf16.msra.mxu0 %v1417
    %1443 = vmatprep.subr.bf16.mxu0 0
    %1444 = vmatpush1.bf16.msra.mxu0 %v1416
    %1445 = vmatprep.subr.bf16.mxu0 0
    %1446 = vmatpush1.bf16.msra.mxu0 %v1415
    %1447 = vmatprep.subr.bf16.mxu0 0
    %1448 = vmatpush2.bf16.msra.mxu0 0
    %1449 = vmatprep.subr.bf16.mxu0 0
    %1450 = vmatpush2.bf16.msra.mxu0 0
    %1451 = vmatprep.subr.bf16.mxu0 0
    %1452 = vmatpush2.bf16.msra.mxu0 0
    %1453 = vmatprep.subr.bf16.mxu0 0
    %1454 = vmatpush2.bf16.msra.mxu0 0
    %1455 = vmatprep.subr.bf16.mxu0 0
    %1456 = vmatpush2.bf16.msra.mxu0 0
    %1457 = vmatprep.subr.bf16.mxu0 0
    %1458 = vmatpush2.bf16.msra.mxu0 0
    %1459 = vmatprep.subr.bf16.mxu0 0
    %1460 = vmatpush2.bf16.msra.mxu0 0
    %1461 = vmatprep.subr.bf16.mxu0 0
    %1462 = vmatpush2.bf16.msra.mxu0 0
    %1463 = vmatprep.mubr.bf16.mxu0 0
    %1464 = vmatmul.mubr.bf16.gmra.mxu0 %v1382
    %v1465 = vpop.f32.mrf.mxu0
    %v1466 = vadd.f32 0.0, %v1465
    %v1467 = vpop.f32.mrf.mxu0
    %v1468 = vpop.f32.mrf.mxu0
    %v1469 = vadd.f32 0.0, %v1468
    %v1470 = vpop.f32.mrf.mxu0
    %1471 = vdwg.mxu0
    %v1472 = vadd.f32 %v1360, %v1466
    %v1473 = vadd.f32 %v1363, %v1469
    %v1474 = vld [vmem:[#allocation7 + $0x268] sm:$0x1]
    %v1475 = vunpack.c.l.bf16 %v1474
    %v1476 = vlaneseq
    %v1477 = vshrl.u32 %v1476, 7
    %v1478 = vsub.s32 0, %v1477
    %v1479 = vrot.slane %v1475, %v1478
    %v1480 = vadd.f32 %v1472, %v1479
    %v1481 = vadd.f32 %v1473, %v1479
    %vm1482 = vcmp.gt.f32.partialorder %v1480, 0.0
    %vm1483 = vcmp.gt.f32.partialorder %v1481, 0.0
    %v1484 = vmul.f32 %v1480, 0.2
    %v1485 = vmul.f32 %v1481, 0.2
    %v1486 = vsel %vm1482, %v1480, %v1484
    %v1487 = vsel %vm1483, %v1481, %v1485
    %v1489 = vrot.slane %v1487, 7
    %v1492 = vrot.slane %v1486, 7
    %v1493 = vsel %vm62, %v1492, %v1489
    %v1496 = vsel %vm62, %v1489, %v1492
    %v1497 = vsel %vm1137, %v1496, 0.0
    %v1498 = vsel %vm1138, %v1493, 0.0
    %v1499 = vrot.slane %v1486, 1
    %v1500 = vrot.slane %v1487, 1
    %v1501 = vsel %vm297, %v1499, %v1500
    %v1505 = vsel %vm297, %v1500, %v1499
    %v1506 = vsel %vm1150, %v1501, 0.0
    %v1507 = vsel %vm1151, %v1505, 0.0
    %v1508 = vld [vmem:[#allocation7 + $0x270] sm:$0xf]
    %v1509 = vld [vmem:[#allocation7 + $0x274] sm:$0xf]
    %v1510 = vld [vmem:[#allocation7 + $0x278] sm:$0xf]
    %v1511 = vld [vmem:[#allocation7 + $0x27c] sm:$0xf]
    %v1512 = vld [vmem:[#allocation7 + $0x280] sm:$0xf]
    %v1513 = vld [vmem:[#allocation7 + $0x284] sm:$0xf]
    %v1514 = vld [vmem:[#allocation7 + $0x288] sm:$0xf]
    %v1515 = vld [vmem:[#allocation7 + $0x28c] sm:$0xf]
    %v1516 = vpack.c.bf16 %v1498, %v1497
    %v1517 = vld [vmem:[#allocation7 + $0x290] sm:$0xf]
    %v1518 = vld [vmem:[#allocation7 + $0x294] sm:$0xf]
    %v1519 = vld [vmem:[#allocation7 + $0x298] sm:$0xf]
    %v1520 = vld [vmem:[#allocation7 + $0x29c] sm:$0xf]
    %v1521 = vld [vmem:[#allocation7 + $0x2a0] sm:$0xf]
    %v1522 = vld [vmem:[#allocation7 + $0x2a4] sm:$0xf]
    %v1523 = vld [vmem:[#allocation7 + $0x2a8] sm:$0xf]
    %v1524 = vld [vmem:[#allocation7 + $0x2ac] sm:$0xf]
    %v1525 = vpack.c.bf16 %v1487, %v1486
    %v1534 = vunpack.c.l.b16 %v1517
    %v1535 = vunpack.c.l.b16 %v1518
    %v1536 = vunpack.c.l.b16 %v1519
    %v1537 = vunpack.c.l.b16 %v1520
    %v1538 = vunpack.c.l.b16 %v1521
    %v1539 = vunpack.c.l.b16 %v1522
    %v1540 = vunpack.c.l.b16 %v1523
    %v1541 = vunpack.c.l.b16 %v1524
    %v1542 = vpack.c.b16 %v1535, %v1534
    %v1543 = vpack.c.b16 %v1537, %v1536
    %v1544 = vpack.c.b16 %v1539, %v1538
    %v1545 = vpack.c.b16 %v1541, %v1540
    %v1551 = vsel %vm679, %v1525, 0
    %1553 = vmatprep.subr.bf16.mxu0 0
    %1554 = vmatpush1.bf16.msra.mxu0 0
    %1555 = vmatprep.subr.bf16.mxu0 0
    %1556 = vmatpush1.bf16.msra.mxu0 0
    %1557 = vmatprep.subr.bf16.mxu0 0
    %1558 = vmatpush1.bf16.msra.mxu0 0
    %1559 = vmatprep.subr.bf16.mxu0 0
    %1560 = vmatpush1.bf16.msra.mxu0 0
    %1561 = vmatprep.subr.bf16.mxu0 0
    %1562 = vmatpush1.bf16.msra.mxu0 %v1545
    %1563 = vmatprep.subr.bf16.mxu0 0
    %1564 = vmatpush1.bf16.msra.mxu0 %v1544
    %1565 = vmatprep.subr.bf16.mxu0 0
    %1566 = vmatpush1.bf16.msra.mxu0 %v1543
    %1567 = vmatprep.subr.bf16.mxu0 0
    %1568 = vmatpush1.bf16.msra.mxu0 %v1542
    %1569 = vmatprep.subr.bf16.mxu0 0
    %1570 = vmatpush2.bf16.msra.mxu0 0
    %1571 = vmatprep.subr.bf16.mxu0 0
    %1572 = vmatpush2.bf16.msra.mxu0 0
    %1573 = vmatprep.subr.bf16.mxu0 0
    %1574 = vmatpush2.bf16.msra.mxu0 0
    %1575 = vmatprep.subr.bf16.mxu0 0
    %1576 = vmatpush2.bf16.msra.mxu0 0
    %1577 = vmatprep.subr.bf16.mxu0 0
    %1578 = vmatpush2.bf16.msra.mxu0 0
    %1579 = vmatprep.subr.bf16.mxu0 0
    %1580 = vmatpush2.bf16.msra.mxu0 0
    %1581 = vmatprep.subr.bf16.mxu0 0
    %1582 = vmatpush2.bf16.msra.mxu0 0
    %1583 = vmatprep.subr.bf16.mxu0 0
    %1584 = vmatpush2.bf16.msra.mxu0 0
    %1585 = vmatprep.mubr.bf16.mxu0 0
    %1586 = vmatmul.mubr.bf16.gmra.mxu0 %v1551
    %v1587 = vpop.f32.mrf.mxu0
    %v1588 = vadd.f32 0.0, %v1587
    %v1589 = vpop.f32.mrf.mxu0
    %v1590 = vpop.f32.mrf.mxu0
    %v1591 = vadd.f32 0.0, %v1590
    %v1592 = vpop.f32.mrf.mxu0
    %1593 = vdwg.mxu0
    %v1602 = vunpack.c.l.b16 %v1508
    %v1603 = vunpack.c.l.b16 %v1509
    %v1604 = vunpack.c.l.b16 %v1510
    %v1605 = vunpack.c.l.b16 %v1511
    %v1606 = vunpack.c.l.b16 %v1512
    %v1607 = vunpack.c.l.b16 %v1513
    %v1608 = vunpack.c.l.b16 %v1514
    %v1609 = vunpack.c.l.b16 %v1515
    %v1610 = vpack.c.b16 %v1603, %v1602
    %v1611 = vpack.c.b16 %v1605, %v1604
    %v1612 = vpack.c.b16 %v1607, %v1606
    %v1613 = vpack.c.b16 %v1609, %v1608
    %v1619 = vsel %vm679, %v1516, 0
    %1621 = vmatprep.subr.bf16.mxu0 0
    %1622 = vmatpush1.bf16.msra.mxu0 0
    %1623 = vmatprep.subr.bf16.mxu0 0
    %1624 = vmatpush1.bf16.msra.mxu0 0
    %1625 = vmatprep.subr.bf16.mxu0 0
    %1626 = vmatpush1.bf16.msra.mxu0 0
    %1627 = vmatprep.subr.bf16.mxu0 0
    %1628 = vmatpush1.bf16.msra.mxu0 0
    %1629 = vmatprep.subr.bf16.mxu0 0
    %1630 = vmatpush1.bf16.msra.mxu0 %v1613
    %1631 = vmatprep.subr.bf16.mxu0 0
    %1632 = vmatpush1.bf16.msra.mxu0 %v1612
    %1633 = vmatprep.subr.bf16.mxu0 0
    %1634 = vmatpush1.bf16.msra.mxu0 %v1611
    %1635 = vmatprep.subr.bf16.mxu0 0
    %1636 = vmatpush1.bf16.msra.mxu0 %v1610
    %1637 = vmatprep.subr.bf16.mxu0 0
    %1638 = vmatpush2.bf16.msra.mxu0 0
    %1639 = vmatprep.subr.bf16.mxu0 0
    %1640 = vmatpush2.bf16.msra.mxu0 0
    %1641 = vmatprep.subr.bf16.mxu0 0
    %1642 = vmatpush2.bf16.msra.mxu0 0
    %1643 = vmatprep.subr.bf16.mxu0 0
    %1644 = vmatpush2.bf16.msra.mxu0 0
    %1645 = vmatprep.subr.bf16.mxu0 0
    %1646 = vmatpush2.bf16.msra.mxu0 0
    %1647 = vmatprep.subr.bf16.mxu0 0
    %1648 = vmatpush2.bf16.msra.mxu0 0
    %1649 = vmatprep.subr.bf16.mxu0 0
    %1650 = vmatpush2.bf16.msra.mxu0 0
    %1651 = vmatprep.subr.bf16.mxu0 0
    %1652 = vmatpush2.bf16.msra.mxu0 0
    %1653 = vmatprep.mubr.bf16.mxu0 0
    %1654 = vmatmul.mubr.bf16.gmra.mxu0 %v1619
    %v1655 = vpop.f32.mrf.mxu0
    %v1656 = vadd.f32 %v1588, %v1655
    %v1657 = vpop.f32.mrf.mxu0
    %v1658 = vpop.f32.mrf.mxu0
    %v1659 = vadd.f32 %v1591, %v1658
    %v1660 = vpop.f32.mrf.mxu0
    %1661 = vdwg.mxu0
    %v1662 = vld [vmem:[#allocation7 + $0x2b0] sm:$0xf]
    %v1663 = vld [vmem:[#allocation7 + $0x2b4] sm:$0xf]
    %v1664 = vld [vmem:[#allocation7 + $0x2b8] sm:$0xf]
    %v1665 = vld [vmem:[#allocation7 + $0x2bc] sm:$0xf]
    %v1666 = vld [vmem:[#allocation7 + $0x2c0] sm:$0xf]
    %v1667 = vld [vmem:[#allocation7 + $0x2c4] sm:$0xf]
    %v1668 = vld [vmem:[#allocation7 + $0x2c8] sm:$0xf]
    %v1669 = vld [vmem:[#allocation7 + $0x2cc] sm:$0xf]
    %v1670 = vpack.c.bf16 %v1507, %v1506
    %v1679 = vunpack.c.l.b16 %v1662
    %v1680 = vunpack.c.l.b16 %v1663
    %v1681 = vunpack.c.l.b16 %v1664
    %v1682 = vunpack.c.l.b16 %v1665
    %v1683 = vunpack.c.l.b16 %v1666
    %v1684 = vunpack.c.l.b16 %v1667
    %v1685 = vunpack.c.l.b16 %v1668
    %v1686 = vunpack.c.l.b16 %v1669
    %v1687 = vpack.c.b16 %v1680, %v1679
    %v1688 = vpack.c.b16 %v1682, %v1681
    %v1689 = vpack.c.b16 %v1684, %v1683
    %v1690 = vpack.c.b16 %v1686, %v1685
    %v1696 = vsel %vm679, %v1670, 0
    %1698 = vmatprep.subr.bf16.mxu0 0
    %1699 = vmatpush1.bf16.msra.mxu0 0
    %1700 = vmatprep.subr.bf16.mxu0 0
    %1701 = vmatpush1.bf16.msra.mxu0 0
    %1702 = vmatprep.subr.bf16.mxu0 0
    %1703 = vmatpush1.bf16.msra.mxu0 0
    %1704 = vmatprep.subr.bf16.mxu0 0
    %1705 = vmatpush1.bf16.msra.mxu0 0
    %1706 = vmatprep.subr.bf16.mxu0 0
    %1707 = vmatpush1.bf16.msra.mxu0 %v1690
    %1708 = vmatprep.subr.bf16.mxu0 0
    %1709 = vmatpush1.bf16.msra.mxu0 %v1689
    %1710 = vmatprep.subr.bf16.mxu0 0
    %1711 = vmatpush1.bf16.msra.mxu0 %v1688
    %1712 = vmatprep.subr.bf16.mxu0 0
    %1713 = vmatpush1.bf16.msra.mxu0 %v1687
    %1714 = vmatprep.subr.bf16.mxu0 0
    %1715 = vmatpush2.bf16.msra.mxu0 0
    %1716 = vmatprep.subr.bf16.mxu0 0
    %1717 = vmatpush2.bf16.msra.mxu0 0
    %1718 = vmatprep.subr.bf16.mxu0 0
    %1719 = vmatpush2.bf16.msra.mxu0 0
    %1720 = vmatprep.subr.bf16.mxu0 0
    %1721 = vmatpush2.bf16.msra.mxu0 0
    %1722 = vmatprep.subr.bf16.mxu0 0
    %1723 = vmatpush2.bf16.msra.mxu0 0
    %1724 = vmatprep.subr.bf16.mxu0 0
    %1725 = vmatpush2.bf16.msra.mxu0 0
    %1726 = vmatprep.subr.bf16.mxu0 0
    %1727 = vmatpush2.bf16.msra.mxu0 0
    %1728 = vmatprep.subr.bf16.mxu0 0
    %1729 = vmatpush2.bf16.msra.mxu0 0
    %1730 = vmatprep.mubr.bf16.mxu0 0
    %1731 = vmatmul.mubr.bf16.gmra.mxu0 %v1696
    %v1732 = vpop.f32.mrf.mxu0
    %v1733 = vadd.f32 0.0, %v1732
    %v1734 = vpop.f32.mrf.mxu0
    %v1735 = vpop.f32.mrf.mxu0
    %v1736 = vadd.f32 0.0, %v1735
    %v1737 = vpop.f32.mrf.mxu0
    %1738 = vdwg.mxu0
    %v1739 = vadd.f32 %v1656, %v1733
    %v1740 = vadd.f32 %v1659, %v1736
    %v1741 = vld [vmem:[#allocation7 + $0x2d0] sm:$0x1]
    %v1742 = vunpack.c.l.bf16 %v1741
    %v1743 = vlaneseq
    %v1744 = vshrl.u32 %v1743, 7
    %v1745 = vsub.s32 0, %v1744
    %v1746 = vrot.slane %v1742, %v1745
    %v1747 = vadd.f32 %v1739, %v1746
    %v1748 = vadd.f32 %v1740, %v1746
    %v1749 = vmul.f32 %v1747, 0.1
    %v1750 = vmul.f32 %v1748, 0.1
    %v1767 = vunpack.c.l.b16 %v1096
    %v1768 = vunpack.c.l.b16 %v1097
    %v1769 = vunpack.c.l.b16 %v1098
    %v1770 = vunpack.c.l.b16 %v1099
    %v1771 = vunpack.c.l.b16 %v1100
    %v1772 = vunpack.c.l.b16 %v1101
    %v1773 = vunpack.c.l.b16 %v1102
    %v1774 = vunpack.c.l.b16 %v1103
    %v1775 = vunpack.c.l.b16 %v1104
    %v1776 = vunpack.c.l.b16 %v1105
    %v1777 = vunpack.c.l.b16 %v1106
    %v1778 = vunpack.c.l.b16 %v1107
    %v1779 = vunpack.c.l.b16 %v1108
    %v1780 = vunpack.c.l.b16 %v1109
    %v1781 = vunpack.c.l.b16 %v1110
    %v1782 = vunpack.c.l.b16 %v1111
    %v1783 = vpack.c.b16 %v1768, %v1767
    %v1784 = vpack.c.b16 %v1770, %v1769
    %v1785 = vpack.c.b16 %v1772, %v1771
    %v1786 = vpack.c.b16 %v1774, %v1773
    %v1787 = vpack.c.b16 %v1776, %v1775
    %v1788 = vpack.c.b16 %v1778, %v1777
    %v1789 = vpack.c.b16 %v1780, %v1779
    %v1790 = vpack.c.b16 %v1782, %v1781
    %1799 = vmatprep.subr.bf16.mxu0 0
    %1800 = vmatpush1.bf16.msra.mxu0 %v1790
    %1801 = vmatprep.subr.bf16.mxu0 0
    %1802 = vmatpush1.bf16.msra.mxu0 %v1789
    %1803 = vmatprep.subr.bf16.mxu0 0
    %1804 = vmatpush1.bf16.msra.mxu0 %v1788
    %1805 = vmatprep.subr.bf16.mxu0 0
    %1806 = vmatpush1.bf16.msra.mxu0 %v1787
    %1807 = vmatprep.subr.bf16.mxu0 0
    %1808 = vmatpush1.bf16.msra.mxu0 %v1786
    %1809 = vmatprep.subr.bf16.mxu0 0
    %1810 = vmatpush1.bf16.msra.mxu0 %v1785
    %1811 = vmatprep.subr.bf16.mxu0 0
    %1812 = vmatpush1.bf16.msra.mxu0 %v1784
    %1813 = vmatprep.subr.bf16.mxu0 0
    %1814 = vmatpush1.bf16.msra.mxu0 %v1783
    %1815 = vmatprep.subr.bf16.mxu0 0
    %1816 = vmatpush2.bf16.msra.mxu0 0
    %1817 = vmatprep.subr.bf16.mxu0 0
    %1818 = vmatpush2.bf16.msra.mxu0 0
    %1819 = vmatprep.subr.bf16.mxu0 0
    %1820 = vmatpush2.bf16.msra.mxu0 0
    %1821 = vmatprep.subr.bf16.mxu0 0
    %1822 = vmatpush2.bf16.msra.mxu0 0
    %1823 = vmatprep.subr.bf16.mxu0 0
    %1824 = vmatpush2.bf16.msra.mxu0 0
    %1825 = vmatprep.subr.bf16.mxu0 0
    %1826 = vmatpush2.bf16.msra.mxu0 0
    %1827 = vmatprep.subr.bf16.mxu0 0
    %1828 = vmatpush2.bf16.msra.mxu0 0
    %1829 = vmatprep.subr.bf16.mxu0 0
    %1830 = vmatpush2.bf16.msra.mxu0 0
    %1831 = vmatprep.mubr.bf16.mxu0 0
    %1832 = vmatmul.mubr.bf16.gmra.mxu0 %v1112
    %v1833 = vpop.f32.mrf.mxu0
    %v1834 = vadd.f32 %v1749, %v1833
    %v1835 = vpop.f32.mrf.mxu0
    %v1836 = vpop.f32.mrf.mxu0
    %v1837 = vadd.f32 %v1750, %v1836
    %v1838 = vpop.f32.mrf.mxu0
    %1839 = vdwg.mxu0
    %v1840 = vld [vmem:[#allocation7 + $0x338] sm:$0xf]
    %v1841 = vld [vmem:[#allocation7 + $0x33c] sm:$0xf]
    %v1842 = vld [vmem:[#allocation7 + $0x340] sm:$0xf]
    %v1843 = vld [vmem:[#allocation7 + $0x344] sm:$0xf]
    %v1844 = vld [vmem:[#allocation7 + $0x318] sm:$0xf]
    %v1845 = vld [vmem:[#allocation7 + $0x31c] sm:$0xf]
    %v1846 = vld [vmem:[#allocation7 + $0x320] sm:$0xf]
    %v1847 = vld [vmem:[#allocation7 + $0x324] sm:$0xf]
    %v1848 = vld [vmem:[#allocation7 + $0x328] sm:$0xf]
    %v1849 = vld [vmem:[#allocation7 + $0x32c] sm:$0xf]
    %v1850 = vld [vmem:[#allocation7 + $0x330] sm:$0xf]
    %v1851 = vld [vmem:[#allocation7 + $0x334] sm:$0xf]
    %v1852 = vpack.c.bf16 %v1837, %v1834
    %v1861 = vunpack.c.l.b16 %v1844
    %v1862 = vunpack.c.l.b16 %v1845
    %v1863 = vunpack.c.l.b16 %v1846
    %v1864 = vunpack.c.l.b16 %v1847
    %v1865 = vunpack.c.l.b16 %v1848
    %v1866 = vunpack.c.l.b16 %v1849
    %v1867 = vunpack.c.l.b16 %v1850
    %v1868 = vunpack.c.l.b16 %v1851
    %v1869 = vpack.c.b16 %v1862, %v1861
    %v1870 = vpack.c.b16 %v1864, %v1863
    %v1871 = vpack.c.b16 %v1866, %v1865
    %v1872 = vpack.c.b16 %v1868, %v1867
    %v1878 = vsel %vm679, %v1852, 0
    %1880 = vmatprep.subr.bf16.mxu0 0
    %1881 = vmatpush1.bf16.msra.mxu0 0
    %1882 = vmatprep.subr.bf16.mxu0 0
    %1883 = vmatpush1.bf16.msra.mxu0 0
    %1884 = vmatprep.subr.bf16.mxu0 0
    %1885 = vmatpush1.bf16.msra.mxu0 0
    %1886 = vmatprep.subr.bf16.mxu0 0
    %1887 = vmatpush1.bf16.msra.mxu0 0
    %1888 = vmatprep.subr.bf16.mxu0 0
    %1889 = vmatpush1.bf16.msra.mxu0 %v1872
    %1890 = vmatprep.subr.bf16.mxu0 0
    %1891 = vmatpush1.bf16.msra.mxu0 %v1871
    %1892 = vmatprep.subr.bf16.mxu0 0
    %1893 = vmatpush1.bf16.msra.mxu0 %v1870
    %1894 = vmatprep.subr.bf16.mxu0 0
    %1895 = vmatpush1.bf16.msra.mxu0 %v1869
    %1896 = vmatprep.subr.bf16.mxu0 0
    %1897 = vmatpush2.bf16.msra.mxu0 0
    %1898 = vmatprep.subr.bf16.mxu0 0
    %1899 = vmatpush2.bf16.msra.mxu0 0
    %1900 = vmatprep.subr.bf16.mxu0 0
    %1901 = vmatpush2.bf16.msra.mxu0 0
    %1902 = vmatprep.subr.bf16.mxu0 0
    %1903 = vmatpush2.bf16.msra.mxu0 0
    %1904 = vmatprep.subr.bf16.mxu0 0
    %1905 = vmatpush2.bf16.msra.mxu0 0
    %1906 = vmatprep.subr.bf16.mxu0 0
    %1907 = vmatpush2.bf16.msra.mxu0 0
    %1908 = vmatprep.subr.bf16.mxu0 0
    %1909 = vmatpush2.bf16.msra.mxu0 0
    %1910 = vmatprep.subr.bf16.mxu0 0
    %1911 = vmatpush2.bf16.msra.mxu0 0
    %1912 = vmatprep.mubr.bf16.mxu0 0
    %1913 = vmatmul.mubr.bf16.gmra.mxu0 %v1878
    %v1914 = vpop.f32.mrf.mxu0
    %v1915 = vadd.f32 0.0, %v1914
    %v1916 = vpop.f32.mrf.mxu0
    %v1917 = vpop.f32.mrf.mxu0
    %v1918 = vadd.f32 0.0, %v1917
    %v1919 = vpop.f32.mrf.mxu0
    %1920 = vdwg.mxu0
    %v1921 = vpack.c.bf16 %v1918, %v1915
    %v1926 = vunpack.c.l.b16 %v1840
    %v1927 = vunpack.c.l.b16 %v1841
    %v1928 = vunpack.c.l.b16 %v1842
    %v1929 = vunpack.c.l.b16 %v1843
    %v1930 = vpack.c.b16 %v1927, %v1926
    %v1931 = vpack.c.b16 %v1929, %v1928
    %vm1932 = vcmask 130048
    %v1934 = vsel %vm1932, %v1930, 0
    %v1937 = vsel %vm1932, %v1931, 0
    %1939 = vmatprep.subr.bf16.mxu0 0
    %1940 = vmatpush1.bf16.msra.mxu0 0
    %1941 = vmatprep.subr.bf16.mxu0 0
    %1942 = vmatpush1.bf16.msra.mxu0 0
    %1943 = vmatprep.subr.bf16.mxu0 0
    %1944 = vmatpush1.bf16.msra.mxu0 0
    %1945 = vmatprep.subr.bf16.mxu0 0
    %1946 = vmatpush1.bf16.msra.mxu0 0
    %1947 = vmatprep.subr.bf16.mxu0 0
    %1948 = vmatpush1.bf16.msra.mxu0 0
    %1949 = vmatprep.subr.bf16.mxu0 0
    %1950 = vmatpush1.bf16.msra.mxu0 0
    %1951 = vmatprep.subr.bf16.mxu0 0
    %1952 = vmatpush1.bf16.msra.mxu0 0
    %1953 = vmatprep.subr.bf16.mxu0 0
    %1954 = vmatpush1.bf16.msra.mxu0 %v1921
    %1955 = vmatprep.subr.bf16.mxu0 0
    %1956 = vmatpush2.bf16.msra.mxu0 0
    %1957 = vmatprep.subr.bf16.mxu0 0
    %1958 = vmatpush2.bf16.msra.mxu0 0
    %1959 = vmatprep.subr.bf16.mxu0 0
    %1960 = vmatpush2.bf16.msra.mxu0 0
    %1961 = vmatprep.subr.bf16.mxu0 0
    %1962 = vmatpush2.bf16.msra.mxu0 0
    %1963 = vmatprep.subr.bf16.mxu0 0
    %1964 = vmatpush2.bf16.msra.mxu0 0
    %1965 = vmatprep.subr.bf16.mxu0 0
    %1966 = vmatpush2.bf16.msra.mxu0 0
    %1967 = vmatprep.subr.bf16.mxu0 0
    %1968 = vmatpush2.bf16.msra.mxu0 0
    %1969 = vmatprep.subr.bf16.mxu0 0
    %1970 = vmatpush2.bf16.msra.mxu0 0
    %1971 = vmatprep.mubr.bf16.mxu0 0
    %1972 = vmatmul.mubr.bf16.gmra.mxu0 %v1934
    %v1973 = vpop.f32.mrf.mxu0
    %v1974 = vadd.f32 0.0, %v1973
    %v1975 = vpop.f32.mrf.mxu0
    %v1976 = vpop.f32.mrf.mxu0
    %v1977 = vadd.f32 0.0, %v1976
    %v1978 = vpop.f32.mrf.mxu0
    %1979 = vmatprep.mubr.bf16.mxu0 0
    %1980 = vmatmul.mubr.bf16.gmra.mxu0 %v1937
    %v1981 = vpop.f32.mrf.mxu0
    %v1982 = vadd.f32 0.0, %v1981
    %v1983 = vpop.f32.mrf.mxu0
    %v1984 = vpop.f32.mrf.mxu0
    %v1985 = vadd.f32 0.0, %v1984
    %v1986 = vpop.f32.mrf.mxu0
    %1987 = vdwg.mxu0
    %vm1988 = vcmp.gt.f32.partialorder %v1974, 0.0
    %vm1989 = vcmp.gt.f32.partialorder %v1977, 0.0
    %vm1990 = vcmp.gt.f32.partialorder %v1982, 0.0
    %vm1991 = vcmp.gt.f32.partialorder %v1985, 0.0
    %v1992 = vmul.f32 %v1974, 0.2
    %v1993 = vmul.f32 %v1977, 0.2
    %v1994 = vmul.f32 %v1982, 0.2
    %v1995 = vmul.f32 %v1985, 0.2
    %v1996 = vsel %vm1988, %v1974, %v1992
    %v1997 = vsel %vm1989, %v1977, %v1993
    %v1998 = vsel %vm1990, %v1982, %v1994
    %v1999 = vsel %vm1991, %v1985, %v1995
    %v2000 = vadd.s32 %v242, 16
    %v2001 = vadd.s32 %v242, 24
    %v2002 = vand.u32 %v242, 15
    %v2003 = vand.u32 %v1119, 15
    %v2004 = vand.u32 %v2000, 15
    %v2005 = vand.u32 %v2001, 15
    %vm2006 = vcmp.ne.s32.totalorder %v2002, 0
    %vm2007 = vcmp.ne.s32.totalorder %v2003, 0
    %vm2008 = vcmp.ne.s32.totalorder %v2004, 0
    %vm2009 = vcmp.ne.s32.totalorder %v2005, 0
    %vm2010 = vcmp.ne.s32.totalorder %v2002, 15
    %vm2011 = vcmp.ne.s32.totalorder %v2003, 15
    %vm2012 = vcmp.ne.s32.totalorder %v2004, 15
    %vm2013 = vcmp.ne.s32.totalorder %v2005, 15
    %v2015 = vrot.slane %v1999, 7
    %v2020 = vrot.slane %v1996, 7
    %v2021 = vrot.slane %v1997, 7
    %v2022 = vsel %vm62, %v2020, %v2021
    %v2023 = vrot.slane %v1998, 7
    %v2024 = vsel %vm62, %v2021, %v2023
    %v2025 = vsel %vm62, %v2023, %v2015
    %v2030 = vsel %vm62, %v2015, %v2020
    %v2031 = vsel %vm2006, 1, 0
    %v2032 = vsel %vm2007, 1, 0
    %v2033 = vsel %vm2008, 1, 0
    %v2034 = vsel %vm2009, 1, 0
    %vm2035 = vcmp.eq.s32.totalorder %v2031, 1
    %vm2036 = vcmp.eq.s32.totalorder %v2032, 1
    %vm2037 = vcmp.eq.s32.totalorder %v2033, 1
    %vm2038 = vcmp.eq.s32.totalorder %v2034, 1
    %v2039 = vsel %vm2035, %v2030, 0.0
    %v2040 = vsel %vm2036, %v2022, 0.0
    %v2041 = vsel %vm2037, %v2024, 0.0
    %v2042 = vsel %vm2038, %v2025, 0.0
    %v2043 = vrot.slane %v1996, 1
    %v2044 = vrot.slane %v1997, 1
    %v2045 = vsel %vm297, %v2043, %v2044
    %v2046 = vrot.slane %v1998, 1
    %v2047 = vsel %vm297, %v2044, %v2046
    %v2048 = vrot.slane %v1999, 1
    %v2049 = vsel %vm297, %v2046, %v2048
    %v2055 = vsel %vm297, %v2048, %v2043
    %v2056 = vsel %vm2010, 1, 0
    %v2057 = vsel %vm2011, 1, 0
    %v2058 = vsel %vm2012, 1, 0
    %v2059 = vsel %vm2013, 1, 0
    %vm2060 = vcmp.eq.s32.totalorder %v2056, 1
    %vm2061 = vcmp.eq.s32.totalorder %v2057, 1
    %vm2062 = vcmp.eq.s32.totalorder %v2058, 1
    %vm2063 = vcmp.eq.s32.totalorder %v2059, 1
    %v2064 = vsel %vm2060, %v2045, 0.0
    %v2065 = vsel %vm2061, %v2047, 0.0
    %v2066 = vsel %vm2062, %v2049, 0.0
    %v2067 = vsel %vm2063, %v2055, 0.0
    %v2068 = vld [vmem:[#allocation7 + $0x348] sm:$0xf]
    %v2069 = vld [vmem:[#allocation7 + $0x34c] sm:$0xf]
    %v2070 = vld [vmem:[#allocation7 + $0x350] sm:$0xf]
    %v2071 = vld [vmem:[#allocation7 + $0x354] sm:$0xf]
    %v2072 = vld [vmem:[#allocation7 + $0x358] sm:$0xf]
    %v2073 = vld [vmem:[#allocation7 + $0x35c] sm:$0xf]
    %v2074 = vld [vmem:[#allocation7 + $0x360] sm:$0xf]
    %v2075 = vld [vmem:[#allocation7 + $0x364] sm:$0xf]
    %v2076 = vld [vmem:[#allocation7 + $0x368] sm:$0xf]
    %v2077 = vld [vmem:[#allocation7 + $0x36c] sm:$0xf]
    %v2078 = vld [vmem:[#allocation7 + $0x370] sm:$0xf]
    %v2079 = vld [vmem:[#allocation7 + $0x374] sm:$0xf]
    %v2080 = vld [vmem:[#allocation7 + $0x378] sm:$0xf]
    %v2081 = vld [vmem:[#allocation7 + $0x37c] sm:$0xf]
    %v2082 = vld [vmem:[#allocation7 + $0x380] sm:$0xf]
    %v2083 = vld [vmem:[#allocation7 + $0x384] sm:$0xf]
    %v2084 = vpack.c.bf16 %v2040, %v2039
    %v2085 = vpack.c.bf16 %v2042, %v2041
    %v2086 = vld [vmem:[#allocation7 + $0x388] sm:$0xf]
    %v2087 = vld [vmem:[#allocation7 + $0x38c] sm:$0xf]
    %v2088 = vld [vmem:[#allocation7 + $0x390] sm:$0xf]
    %v2089 = vld [vmem:[#allocation7 + $0x394] sm:$0xf]
    %v2090 = vld [vmem:[#allocation7 + $0x398] sm:$0xf]
    %v2091 = vld [vmem:[#allocation7 + $0x39c] sm:$0xf]
    %v2092 = vld [vmem:[#allocation7 + $0x3a0] sm:$0xf]
    %v2093 = vld [vmem:[#allocation7 + $0x3a4] sm:$0xf]
    %v2094 = vld [vmem:[#allocation7 + $0x3a8] sm:$0xf]
    %v2095 = vld [vmem:[#allocation7 + $0x3ac] sm:$0xf]
    %v2096 = vld [vmem:[#allocation7 + $0x3b0] sm:$0xf]
    %v2097 = vld [vmem:[#allocation7 + $0x3b4] sm:$0xf]
    %v2098 = vld [vmem:[#allocation7 + $0x3b8] sm:$0xf]
    %v2099 = vld [vmem:[#allocation7 + $0x3bc] sm:$0xf]
    %v2100 = vld [vmem:[#allocation7 + $0x3c0] sm:$0xf]
    %v2101 = vld [vmem:[#allocation7 + $0x3c4] sm:$0xf]
    %v2102 = vpack.c.bf16 %v1997, %v1996
    %v2103 = vpack.c.bf16 %v1999, %v1998
    %v2120 = vunpack.c.l.b16 %v2086
    %v2121 = vunpack.c.l.b16 %v2087
    %v2122 = vunpack.c.l.b16 %v2088
    %v2123 = vunpack.c.l.b16 %v2089
    %v2124 = vunpack.c.l.b16 %v2090
    %v2125 = vunpack.c.l.b16 %v2091
    %v2126 = vunpack.c.l.b16 %v2092
    %v2127 = vunpack.c.l.b16 %v2093
    %v2128 = vunpack.c.l.b16 %v2094
    %v2129 = vunpack.c.l.b16 %v2095
    %v2130 = vunpack.c.l.b16 %v2096
    %v2131 = vunpack.c.l.b16 %v2097
    %v2132 = vunpack.c.l.b16 %v2098
    %v2133 = vunpack.c.l.b16 %v2099
    %v2134 = vunpack.c.l.b16 %v2100
    %v2135 = vunpack.c.l.b16 %v2101
    %v2136 = vpack.c.b16 %v2121, %v2120
    %v2137 = vpack.c.b16 %v2123, %v2122
    %v2138 = vpack.c.b16 %v2125, %v2124
    %v2139 = vpack.c.b16 %v2127, %v2126
    %v2140 = vpack.c.b16 %v2129, %v2128
    %v2141 = vpack.c.b16 %v2131, %v2130
    %v2142 = vpack.c.b16 %v2133, %v2132
    %v2143 = vpack.c.b16 %v2135, %v2134
    %2152 = vmatprep.subr.bf16.mxu0 0
    %2153 = vmatpush1.bf16.msra.mxu0 %v2143
    %2154 = vmatprep.subr.bf16.mxu0 0
    %2155 = vmatpush1.bf16.msra.mxu0 %v2142
    %2156 = vmatprep.subr.bf16.mxu0 0
    %2157 = vmatpush1.bf16.msra.mxu0 %v2141
    %2158 = vmatprep.subr.bf16.mxu0 0
    %2159 = vmatpush1.bf16.msra.mxu0 %v2140
    %2160 = vmatprep.subr.bf16.mxu0 0
    %2161 = vmatpush1.bf16.msra.mxu0 %v2139
    %2162 = vmatprep.subr.bf16.mxu0 0
    %2163 = vmatpush1.bf16.msra.mxu0 %v2138
    %2164 = vmatprep.subr.bf16.mxu0 0
    %2165 = vmatpush1.bf16.msra.mxu0 %v2137
    %2166 = vmatprep.subr.bf16.mxu0 0
    %2167 = vmatpush1.bf16.msra.mxu0 %v2136
    %2168 = vmatprep.subr.bf16.mxu0 0
    %2169 = vmatpush2.bf16.msra.mxu0 0
    %2170 = vmatprep.subr.bf16.mxu0 0
    %2171 = vmatpush2.bf16.msra.mxu0 0
    %2172 = vmatprep.subr.bf16.mxu0 0
    %2173 = vmatpush2.bf16.msra.mxu0 0
    %2174 = vmatprep.subr.bf16.mxu0 0
    %2175 = vmatpush2.bf16.msra.mxu0 0
    %2176 = vmatprep.subr.bf16.mxu0 0
    %2177 = vmatpush2.bf16.msra.mxu0 0
    %2178 = vmatprep.subr.bf16.mxu0 0
    %2179 = vmatpush2.bf16.msra.mxu0 0
    %2180 = vmatprep.subr.bf16.mxu0 0
    %2181 = vmatpush2.bf16.msra.mxu0 0
    %2182 = vmatprep.subr.bf16.mxu0 0
    %2183 = vmatpush2.bf16.msra.mxu0 0
    %2184 = vmatprep.mubr.bf16.mxu0 0
    %2185 = vmatmul.mubr.bf16.gmra.mxu0 %v2102
    %v2186 = vpop.f32.mrf.mxu0
    %v2187 = vadd.f32 0.0, %v2186
    %v2188 = vpop.f32.mrf.mxu0
    %v2189 = vpop.f32.mrf.mxu0
    %v2190 = vadd.f32 0.0, %v2189
    %v2191 = vpop.f32.mrf.mxu0
    %2192 = vmatprep.mubr.bf16.mxu0 0
    %2193 = vmatmul.mubr.bf16.gmra.mxu0 %v2103
    %v2194 = vpop.f32.mrf.mxu0
    %v2195 = vadd.f32 0.0, %v2194
    %v2196 = vpop.f32.mrf.mxu0
    %v2197 = vpop.f32.mrf.mxu0
    %v2198 = vadd.f32 0.0, %v2197
    %v2199 = vpop.f32.mrf.mxu0
    %2200 = vdwg.mxu0
    %v2217 = vunpack.c.l.b16 %v2068
    %v2218 = vunpack.c.l.b16 %v2069
    %v2219 = vunpack.c.l.b16 %v2070
    %v2220 = vunpack.c.l.b16 %v2071
    %v2221 = vunpack.c.l.b16 %v2072
    %v2222 = vunpack.c.l.b16 %v2073
    %v2223 = vunpack.c.l.b16 %v2074
    %v2224 = vunpack.c.l.b16 %v2075
    %v2225 = vunpack.c.l.b16 %v2076
    %v2226 = vunpack.c.l.b16 %v2077
    %v2227 = vunpack.c.l.b16 %v2078
    %v2228 = vunpack.c.l.b16 %v2079
    %v2229 = vunpack.c.l.b16 %v2080
    %v2230 = vunpack.c.l.b16 %v2081
    %v2231 = vunpack.c.l.b16 %v2082
    %v2232 = vunpack.c.l.b16 %v2083
    %v2233 = vpack.c.b16 %v2218, %v2217
    %v2234 = vpack.c.b16 %v2220, %v2219
    %v2235 = vpack.c.b16 %v2222, %v2221
    %v2236 = vpack.c.b16 %v2224, %v2223
    %v2237 = vpack.c.b16 %v2226, %v2225
    %v2238 = vpack.c.b16 %v2228, %v2227
    %v2239 = vpack.c.b16 %v2230, %v2229
    %v2240 = vpack.c.b16 %v2232, %v2231
    %2249 = vmatprep.subr.bf16.mxu0 0
    %2250 = vmatpush1.bf16.msra.mxu0 %v2240
    %2251 = vmatprep.subr.bf16.mxu0 0
    %2252 = vmatpush1.bf16.msra.mxu0 %v2239
    %2253 = vmatprep.subr.bf16.mxu0 0
    %2254 = vmatpush1.bf16.msra.mxu0 %v2238
    %2255 = vmatprep.subr.bf16.mxu0 0
    %2256 = vmatpush1.bf16.msra.mxu0 %v2237
    %2257 = vmatprep.subr.bf16.mxu0 0
    %2258 = vmatpush1.bf16.msra.mxu0 %v2236
    %2259 = vmatprep.subr.bf16.mxu0 0
    %2260 = vmatpush1.bf16.msra.mxu0 %v2235
    %2261 = vmatprep.subr.bf16.mxu0 0
    %2262 = vmatpush1.bf16.msra.mxu0 %v2234
    %2263 = vmatprep.subr.bf16.mxu0 0
    %2264 = vmatpush1.bf16.msra.mxu0 %v2233
    %2265 = vmatprep.subr.bf16.mxu0 0
    %2266 = vmatpush2.bf16.msra.mxu0 0
    %2267 = vmatprep.subr.bf16.mxu0 0
    %2268 = vmatpush2.bf16.msra.mxu0 0
    %2269 = vmatprep.subr.bf16.mxu0 0
    %2270 = vmatpush2.bf16.msra.mxu0 0
    %2271 = vmatprep.subr.bf16.mxu0 0
    %2272 = vmatpush2.bf16.msra.mxu0 0
    %2273 = vmatprep.subr.bf16.mxu0 0
    %2274 = vmatpush2.bf16.msra.mxu0 0
    %2275 = vmatprep.subr.bf16.mxu0 0
    %2276 = vmatpush2.bf16.msra.mxu0 0
    %2277 = vmatprep.subr.bf16.mxu0 0
    %2278 = vmatpush2.bf16.msra.mxu0 0
    %2279 = vmatprep.subr.bf16.mxu0 0
    %2280 = vmatpush2.bf16.msra.mxu0 0
    %2281 = vmatprep.mubr.bf16.mxu0 0
    %2282 = vmatmul.mubr.bf16.gmra.mxu0 %v2084
    %v2283 = vpop.f32.mrf.mxu0
    %v2284 = vadd.f32 %v2187, %v2283
    %v2285 = vpop.f32.mrf.mxu0
    %v2286 = vpop.f32.mrf.mxu0
    %v2287 = vadd.f32 %v2190, %v2286
    %v2288 = vpop.f32.mrf.mxu0
    %2289 = vmatprep.mubr.bf16.mxu0 0
    %2290 = vmatmul.mubr.bf16.gmra.mxu0 %v2085
    %v2291 = vpop.f32.mrf.mxu0
    %v2292 = vadd.f32 %v2195, %v2291
    %v2293 = vpop.f32.mrf.mxu0
    %v2294 = vpop.f32.mrf.mxu0
    %v2295 = vadd.f32 %v2198, %v2294
    %v2296 = vpop.f32.mrf.mxu0
    %2297 = vdwg.mxu0
    %v2298 = vld [vmem:[#allocation7 + $0x3c8] sm:$0xf]
    %v2299 = vld [vmem:[#allocation7 + $0x3cc] sm:$0xf]
    %v2300 = vld [vmem:[#allocation7 + $0x3d0] sm:$0xf]
    %v2301 = vld [vmem:[#allocation7 + $0x3d4] sm:$0xf]
    %v2302 = vld [vmem:[#allocation7 + $0x3d8] sm:$0xf]
    %v2303 = vld [vmem:[#allocation7 + $0x3dc] sm:$0xf]
    %v2304 = vld [vmem:[#allocation7 + $0x3e0] sm:$0xf]
    %v2305 = vld [vmem:[#allocation7 + $0x3e4] sm:$0xf]
    %v2306 = vld [vmem:[#allocation7 + $0x3e8] sm:$0xf]
    %v2307 = vld [vmem:[#allocation7 + $0x3ec] sm:$0xf]
    %v2308 = vld [vmem:[#allocation7 + $0x3f0] sm:$0xf]
    %v2309 = vld [vmem:[#allocation7 + $0x3f4] sm:$0xf]
    %v2310 = vld [vmem:[#allocation7 + $0x3f8] sm:$0xf]
    %v2311 = vld [vmem:[#allocation7 + $0x3fc] sm:$0xf]
    %v2312 = vld [vmem:[#allocation7 + $0x400] sm:$0xf]
    %v2313 = vld [vmem:[#allocation7 + $0x404] sm:$0xf]
    %v2314 = vpack.c.bf16 %v2065, %v2064
    %v2315 = vpack.c.bf16 %v2067, %v2066
    %v2332 = vunpack.c.l.b16 %v2298
    %v2333 = vunpack.c.l.b16 %v2299
    %v2334 = vunpack.c.l.b16 %v2300
    %v2335 = vunpack.c.l.b16 %v2301
    %v2336 = vunpack.c.l.b16 %v2302
    %v2337 = vunpack.c.l.b16 %v2303
    %v2338 = vunpack.c.l.b16 %v2304
    %v2339 = vunpack.c.l.b16 %v2305
    %v2340 = vunpack.c.l.b16 %v2306
    %v2341 = vunpack.c.l.b16 %v2307
    %v2342 = vunpack.c.l.b16 %v2308
    %v2343 = vunpack.c.l.b16 %v2309
    %v2344 = vunpack.c.l.b16 %v2310
    %v2345 = vunpack.c.l.b16 %v2311
    %v2346 = vunpack.c.l.b16 %v2312
    %v2347 = vunpack.c.l.b16 %v2313
    %v2348 = vpack.c.b16 %v2333, %v2332
    %v2349 = vpack.c.b16 %v2335, %v2334
    %v2350 = vpack.c.b16 %v2337, %v2336
    %v2351 = vpack.c.b16 %v2339, %v2338
    %v2352 = vpack.c.b16 %v2341, %v2340
    %v2353 = vpack.c.b16 %v2343, %v2342
    %v2354 = vpack.c.b16 %v2345, %v2344
    %v2355 = vpack.c.b16 %v2347, %v2346
    %2364 = vmatprep.subr.bf16.mxu0 0
    %2365 = vmatpush1.bf16.msra.mxu0 %v2355
    %2366 = vmatprep.subr.bf16.mxu0 0
    %2367 = vmatpush1.bf16.msra.mxu0 %v2354
    %2368 = vmatprep.subr.bf16.mxu0 0
    %2369 = vmatpush1.bf16.msra.mxu0 %v2353
    %2370 = vmatprep.subr.bf16.mxu0 0
    %2371 = vmatpush1.bf16.msra.mxu0 %v2352
    %2372 = vmatprep.subr.bf16.mxu0 0
    %2373 = vmatpush1.bf16.msra.mxu0 %v2351
    %2374 = vmatprep.subr.bf16.mxu0 0
    %2375 = vmatpush1.bf16.msra.mxu0 %v2350
    %2376 = vmatprep.subr.bf16.mxu0 0
    %2377 = vmatpush1.bf16.msra.mxu0 %v2349
    %2378 = vmatprep.subr.bf16.mxu0 0
    %2379 = vmatpush1.bf16.msra.mxu0 %v2348
    %2380 = vmatprep.subr.bf16.mxu0 0
    %2381 = vmatpush2.bf16.msra.mxu0 0
    %2382 = vmatprep.subr.bf16.mxu0 0
    %2383 = vmatpush2.bf16.msra.mxu0 0
    %2384 = vmatprep.subr.bf16.mxu0 0
    %2385 = vmatpush2.bf16.msra.mxu0 0
    %2386 = vmatprep.subr.bf16.mxu0 0
    %2387 = vmatpush2.bf16.msra.mxu0 0
    %2388 = vmatprep.subr.bf16.mxu0 0
    %2389 = vmatpush2.bf16.msra.mxu0 0
    %2390 = vmatprep.subr.bf16.mxu0 0
    %2391 = vmatpush2.bf16.msra.mxu0 0
    %2392 = vmatprep.subr.bf16.mxu0 0
    %2393 = vmatpush2.bf16.msra.mxu0 0
    %2394 = vmatprep.subr.bf16.mxu0 0
    %2395 = vmatpush2.bf16.msra.mxu0 0
    %2396 = vmatprep.mubr.bf16.mxu0 0
    %2397 = vmatmul.mubr.bf16.gmra.mxu0 %v2314
    %v2398 = vpop.f32.mrf.mxu0
    %v2399 = vadd.f32 0.0, %v2398
    %v2400 = vpop.f32.mrf.mxu0
    %v2401 = vpop.f32.mrf.mxu0
    %v2402 = vadd.f32 0.0, %v2401
    %v2403 = vpop.f32.mrf.mxu0
    %2404 = vmatprep.mubr.bf16.mxu0 0
    %2405 = vmatmul.mubr.bf16.gmra.mxu0 %v2315
    %v2406 = vpop.f32.mrf.mxu0
    %v2407 = vadd.f32 0.0, %v2406
    %v2408 = vpop.f32.mrf.mxu0
    %v2409 = vpop.f32.mrf.mxu0
    %v2410 = vadd.f32 0.0, %v2409
    %v2411 = vpop.f32.mrf.mxu0
    %2412 = vdwg.mxu0
    %v2413 = vadd.f32 %v2284, %v2399
    %v2414 = vadd.f32 %v2287, %v2402
    %v2415 = vadd.f32 %v2292, %v2407
    %v2416 = vadd.f32 %v2295, %v2410
    %v2417 = vld [vmem:[#allocation7 + $0x408] sm:$0x1]
    %v2418 = vunpack.c.l.bf16 %v2417
    %v2419 = vlaneseq
    %v2420 = vshrl.u32 %v2419, 7
    %v2421 = vsub.s32 0, %v2420
    %v2422 = vrot.slane %v2418, %v2421
    %v2423 = vadd.f32 %v2413, %v2422
    %v2424 = vadd.f32 %v2414, %v2422
    %v2425 = vadd.f32 %v2415, %v2422
    %v2426 = vadd.f32 %v2416, %v2422
    %vm2427 = vcmp.gt.f32.partialorder %v2423, 0.0
    %vm2428 = vcmp.gt.f32.partialorder %v2424, 0.0
    %vm2429 = vcmp.gt.f32.partialorder %v2425, 0.0
    %vm2430 = vcmp.gt.f32.partialorder %v2426, 0.0
    %v2431 = vmul.f32 %v2423, 0.2
    %v2432 = vmul.f32 %v2424, 0.2
    %v2433 = vmul.f32 %v2425, 0.2
    %v2434 = vmul.f32 %v2426, 0.2
    %v2435 = vsel %vm2427, %v2423, %v2431
    %v2436 = vsel %vm2428, %v2424, %v2432
    %v2437 = vsel %vm2429, %v2425, %v2433
    %v2438 = vsel %vm2430, %v2426, %v2434
    %v2440 = vrot.slane %v2438, 7
    %v2445 = vrot.slane %v2435, 7
    %v2446 = vrot.slane %v2436, 7
    %v2447 = vsel %vm62, %v2445, %v2446
    %v2448 = vrot.slane %v2437, 7
    %v2449 = vsel %vm62, %v2446, %v2448
    %v2450 = vsel %vm62, %v2448, %v2440
    %v2455 = vsel %vm62, %v2440, %v2445
    %v2456 = vsel %vm2035, %v2455, 0.0
    %v2457 = vsel %vm2036, %v2447, 0.0
    %v2458 = vsel %vm2037, %v2449, 0.0
    %v2459 = vsel %vm2038, %v2450, 0.0
    %v2460 = vrot.slane %v2435, 1
    %v2461 = vrot.slane %v2436, 1
    %v2462 = vsel %vm297, %v2460, %v2461
    %v2463 = vrot.slane %v2437, 1
    %v2464 = vsel %vm297, %v2461, %v2463
    %v2465 = vrot.slane %v2438, 1
    %v2466 = vsel %vm297, %v2463, %v2465
    %v2472 = vsel %vm297, %v2465, %v2460
    %v2473 = vsel %vm2060, %v2462, 0.0
    %v2474 = vsel %vm2061, %v2464, 0.0
    %v2475 = vsel %vm2062, %v2466, 0.0
    %v2476 = vsel %vm2063, %v2472, 0.0
    %v2477 = vld [vmem:[#allocation7 + $0x410] sm:$0xf]
    %v2478 = vld [vmem:[#allocation7 + $0x414] sm:$0xf]
    %v2479 = vld [vmem:[#allocation7 + $0x418] sm:$0xf]
    %v2480 = vld [vmem:[#allocation7 + $0x41c] sm:$0xf]
    %v2481 = vld [vmem:[#allocation7 + $0x420] sm:$0xf]
    %v2482 = vld [vmem:[#allocation7 + $0x424] sm:$0xf]
    %v2483 = vld [vmem:[#allocation7 + $0x428] sm:$0xf]
    %v2484 = vld [vmem:[#allocation7 + $0x42c] sm:$0xf]
    %v2485 = vld [vmem:[#allocation7 + $0x430] sm:$0xf]
    %v2486 = vld [vmem:[#allocation7 + $0x434] sm:$0xf]
    %v2487 = vld [vmem:[#allocation7 + $0x438] sm:$0xf]
    %v2488 = vld [vmem:[#allocation7 + $0x43c] sm:$0xf]
    %v2489 = vld [vmem:[#allocation7 + $0x440] sm:$0xf]
    %v2490 = vld [vmem:[#allocation7 + $0x444] sm:$0xf]
    %v2491 = vld [vmem:[#allocation7 + $0x448] sm:$0xf]
    %v2492 = vld [vmem:[#allocation7 + $0x44c] sm:$0xf]
    %v2493 = vpack.c.bf16 %v2457, %v2456
    %v2494 = vpack.c.bf16 %v2459, %v2458
    %v2495 = vld [vmem:[#allocation7 + $0x450] sm:$0xf]
    %v2496 = vld [vmem:[#allocation7 + $0x454] sm:$0xf]
    %v2497 = vld [vmem:[#allocation7 + $0x458] sm:$0xf]
    %v2498 = vld [vmem:[#allocation7 + $0x45c] sm:$0xf]
    %v2499 = vld [vmem:[#allocation7 + $0x460] sm:$0xf]
    %v2500 = vld [vmem:[#allocation7 + $0x464] sm:$0xf]
    %v2501 = vld [vmem:[#allocation7 + $0x468] sm:$0xf]
    %v2502 = vld [vmem:[#allocation7 + $0x46c] sm:$0xf]
    %v2503 = vld [vmem:[#allocation7 + $0x470] sm:$0xf]
    %v2504 = vld [vmem:[#allocation7 + $0x474] sm:$0xf]
    %v2505 = vld [vmem:[#allocation7 + $0x478] sm:$0xf]
    %v2506 = vld [vmem:[#allocation7 + $0x47c] sm:$0xf]
    %v2507 = vld [vmem:[#allocation7 + $0x480] sm:$0xf]
    %v2508 = vld [vmem:[#allocation7 + $0x484] sm:$0xf]
    %v2509 = vld [vmem:[#allocation7 + $0x488] sm:$0xf]
    %v2510 = vld [vmem:[#allocation7 + $0x48c] sm:$0xf]
    %v2511 = vpack.c.bf16 %v2436, %v2435
    %v2512 = vpack.c.bf16 %v2438, %v2437
    %v2529 = vunpack.c.l.b16 %v2495
    %v2530 = vunpack.c.l.b16 %v2496
    %v2531 = vunpack.c.l.b16 %v2497
    %v2532 = vunpack.c.l.b16 %v2498
    %v2533 = vunpack.c.l.b16 %v2499
    %v2534 = vunpack.c.l.b16 %v2500
    %v2535 = vunpack.c.l.b16 %v2501
    %v2536 = vunpack.c.l.b16 %v2502
    %v2537 = vunpack.c.l.b16 %v2503
    %v2538 = vunpack.c.l.b16 %v2504
    %v2539 = vunpack.c.l.b16 %v2505
    %v2540 = vunpack.c.l.b16 %v2506
    %v2541 = vunpack.c.l.b16 %v2507
    %v2542 = vunpack.c.l.b16 %v2508
    %v2543 = vunpack.c.l.b16 %v2509
    %v2544 = vunpack.c.l.b16 %v2510
    %v2545 = vpack.c.b16 %v2530, %v2529
    %v2546 = vpack.c.b16 %v2532, %v2531
    %v2547 = vpack.c.b16 %v2534, %v2533
    %v2548 = vpack.c.b16 %v2536, %v2535
    %v2549 = vpack.c.b16 %v2538, %v2537
    %v2550 = vpack.c.b16 %v2540, %v2539
    %v2551 = vpack.c.b16 %v2542, %v2541
    %v2552 = vpack.c.b16 %v2544, %v2543
    %2561 = vmatprep.subr.bf16.mxu0 0
    %2562 = vmatpush1.bf16.msra.mxu0 %v2552
    %2563 = vmatprep.subr.bf16.mxu0 0
    %2564 = vmatpush1.bf16.msra.mxu0 %v2551
    %2565 = vmatprep.subr.bf16.mxu0 0
    %2566 = vmatpush1.bf16.msra.mxu0 %v2550
    %2567 = vmatprep.subr.bf16.mxu0 0
    %2568 = vmatpush1.bf16.msra.mxu0 %v2549
    %2569 = vmatprep.subr.bf16.mxu0 0
    %2570 = vmatpush1.bf16.msra.mxu0 %v2548
    %2571 = vmatprep.subr.bf16.mxu0 0
    %2572 = vmatpush1.bf16.msra.mxu0 %v2547
    %2573 = vmatprep.subr.bf16.mxu0 0
    %2574 = vmatpush1.bf16.msra.mxu0 %v2546
    %2575 = vmatprep.subr.bf16.mxu0 0
    %2576 = vmatpush1.bf16.msra.mxu0 %v2545
    %2577 = vmatprep.subr.bf16.mxu0 0
    %2578 = vmatpush2.bf16.msra.mxu0 0
    %2579 = vmatprep.subr.bf16.mxu0 0
    %2580 = vmatpush2.bf16.msra.mxu0 0
    %2581 = vmatprep.subr.bf16.mxu0 0
    %2582 = vmatpush2.bf16.msra.mxu0 0
    %2583 = vmatprep.subr.bf16.mxu0 0
    %2584 = vmatpush2.bf16.msra.mxu0 0
    %2585 = vmatprep.subr.bf16.mxu0 0
    %2586 = vmatpush2.bf16.msra.mxu0 0
    %2587 = vmatprep.subr.bf16.mxu0 0
    %2588 = vmatpush2.bf16.msra.mxu0 0
    %2589 = vmatprep.subr.bf16.mxu0 0
    %2590 = vmatpush2.bf16.msra.mxu0 0
    %2591 = vmatprep.subr.bf16.mxu0 0
    %2592 = vmatpush2.bf16.msra.mxu0 0
    %2593 = vmatprep.mubr.bf16.mxu0 0
    %2594 = vmatmul.mubr.bf16.gmra.mxu0 %v2511
    %v2595 = vpop.f32.mrf.mxu0
    %v2596 = vadd.f32 0.0, %v2595
    %v2597 = vpop.f32.mrf.mxu0
    %v2598 = vpop.f32.mrf.mxu0
    %v2599 = vadd.f32 0.0, %v2598
    %v2600 = vpop.f32.mrf.mxu0
    %2601 = vmatprep.mubr.bf16.mxu0 0
    %2602 = vmatmul.mubr.bf16.gmra.mxu0 %v2512
    %v2603 = vpop.f32.mrf.mxu0
    %v2604 = vadd.f32 0.0, %v2603
    %v2605 = vpop.f32.mrf.mxu0
    %v2606 = vpop.f32.mrf.mxu0
    %v2607 = vadd.f32 0.0, %v2606
    %v2608 = vpop.f32.mrf.mxu0
    %2609 = vdwg.mxu0
    %v2626 = vunpack.c.l.b16 %v2477
    %v2627 = vunpack.c.l.b16 %v2478
    %v2628 = vunpack.c.l.b16 %v2479
    %v2629 = vunpack.c.l.b16 %v2480
    %v2630 = vunpack.c.l.b16 %v2481
    %v2631 = vunpack.c.l.b16 %v2482
    %v2632 = vunpack.c.l.b16 %v2483
    %v2633 = vunpack.c.l.b16 %v2484
    %v2634 = vunpack.c.l.b16 %v2485
    %v2635 = vunpack.c.l.b16 %v2486
    %v2636 = vunpack.c.l.b16 %v2487
    %v2637 = vunpack.c.l.b16 %v2488
    %v2638 = vunpack.c.l.b16 %v2489
    %v2639 = vunpack.c.l.b16 %v2490
    %v2640 = vunpack.c.l.b16 %v2491
    %v2641 = vunpack.c.l.b16 %v2492
    %v2642 = vpack.c.b16 %v2627, %v2626
    %v2643 = vpack.c.b16 %v2629, %v2628
    %v2644 = vpack.c.b16 %v2631, %v2630
    %v2645 = vpack.c.b16 %v2633, %v2632
    %v2646 = vpack.c.b16 %v2635, %v2634
    %v2647 = vpack.c.b16 %v2637, %v2636
    %v2648 = vpack.c.b16 %v2639, %v2638
    %v2649 = vpack.c.b16 %v2641, %v2640
    %2658 = vmatprep.subr.bf16.mxu0 0
    %2659 = vmatpush1.bf16.msra.mxu0 %v2649
    %2660 = vmatprep.subr.bf16.mxu0 0
    %2661 = vmatpush1.bf16.msra.mxu0 %v2648
    %2662 = vmatprep.subr.bf16.mxu0 0
    %2663 = vmatpush1.bf16.msra.mxu0 %v2647
    %2664 = vmatprep.subr.bf16.mxu0 0
    %2665 = vmatpush1.bf16.msra.mxu0 %v2646
    %2666 = vmatprep.subr.bf16.mxu0 0
    %2667 = vmatpush1.bf16.msra.mxu0 %v2645
    %2668 = vmatprep.subr.bf16.mxu0 0
    %2669 = vmatpush1.bf16.msra.mxu0 %v2644
    %2670 = vmatprep.subr.bf16.mxu0 0
    %2671 = vmatpush1.bf16.msra.mxu0 %v2643
    %2672 = vmatprep.subr.bf16.mxu0 0
    %2673 = vmatpush1.bf16.msra.mxu0 %v2642
    %2674 = vmatprep.subr.bf16.mxu0 0
    %2675 = vmatpush2.bf16.msra.mxu0 0
    %2676 = vmatprep.subr.bf16.mxu0 0
    %2677 = vmatpush2.bf16.msra.mxu0 0
    %2678 = vmatprep.subr.bf16.mxu0 0
    %2679 = vmatpush2.bf16.msra.mxu0 0
    %2680 = vmatprep.subr.bf16.mxu0 0
    %2681 = vmatpush2.bf16.msra.mxu0 0
    %2682 = vmatprep.subr.bf16.mxu0 0
    %2683 = vmatpush2.bf16.msra.mxu0 0
    %2684 = vmatprep.subr.bf16.mxu0 0
    %2685 = vmatpush2.bf16.msra.mxu0 0
    %2686 = vmatprep.subr.bf16.mxu0 0
    %2687 = vmatpush2.bf16.msra.mxu0 0
    %2688 = vmatprep.subr.bf16.mxu0 0
    %2689 = vmatpush2.bf16.msra.mxu0 0
    %2690 = vmatprep.mubr.bf16.mxu0 0
    %2691 = vmatmul.mubr.bf16.gmra.mxu0 %v2493
    %v2692 = vpop.f32.mrf.mxu0
    %v2693 = vadd.f32 %v2596, %v2692
    %v2694 = vpop.f32.mrf.mxu0
    %v2695 = vpop.f32.mrf.mxu0
    %v2696 = vadd.f32 %v2599, %v2695
    %v2697 = vpop.f32.mrf.mxu0
    %2698 = vmatprep.mubr.bf16.mxu0 0
    %2699 = vmatmul.mubr.bf16.gmra.mxu0 %v2494
    %v2700 = vpop.f32.mrf.mxu0
    %v2701 = vadd.f32 %v2604, %v2700
    %v2702 = vpop.f32.mrf.mxu0
    %v2703 = vpop.f32.mrf.mxu0
    %v2704 = vadd.f32 %v2607, %v2703
    %v2705 = vpop.f32.mrf.mxu0
    %2706 = vdwg.mxu0
    %v2707 = vld [vmem:[#allocation7 + $0x490] sm:$0xf]
    %v2708 = vld [vmem:[#allocation7 + $0x494] sm:$0xf]
    %v2709 = vld [vmem:[#allocation7 + $0x498] sm:$0xf]
    %v2710 = vld [vmem:[#allocation7 + $0x49c] sm:$0xf]
    %v2711 = vld [vmem:[#allocation7 + $0x4a0] sm:$0xf]
    %v2712 = vld [vmem:[#allocation7 + $0x4a4] sm:$0xf]
    %v2713 = vld [vmem:[#allocation7 + $0x4a8] sm:$0xf]
    %v2714 = vld [vmem:[#allocation7 + $0x4ac] sm:$0xf]
    %v2715 = vld [vmem:[#allocation7 + $0x4b0] sm:$0xf]
    %v2716 = vld [vmem:[#allocation7 + $0x4b4] sm:$0xf]
    %v2717 = vld [vmem:[#allocation7 + $0x4b8] sm:$0xf]
    %v2718 = vld [vmem:[#allocation7 + $0x4bc] sm:$0xf]
    %v2719 = vld [vmem:[#allocation7 + $0x4c0] sm:$0xf]
    %v2720 = vld [vmem:[#allocation7 + $0x4c4] sm:$0xf]
    %v2721 = vld [vmem:[#allocation7 + $0x4c8] sm:$0xf]
    %v2722 = vld [vmem:[#allocation7 + $0x4cc] sm:$0xf]
    %v2723 = vpack.c.bf16 %v2474, %v2473
    %v2724 = vpack.c.bf16 %v2476, %v2475
    %v2741 = vunpack.c.l.b16 %v2707
    %v2742 = vunpack.c.l.b16 %v2708
    %v2743 = vunpack.c.l.b16 %v2709
    %v2744 = vunpack.c.l.b16 %v2710
    %v2745 = vunpack.c.l.b16 %v2711
    %v2746 = vunpack.c.l.b16 %v2712
    %v2747 = vunpack.c.l.b16 %v2713
    %v2748 = vunpack.c.l.b16 %v2714
    %v2749 = vunpack.c.l.b16 %v2715
    %v2750 = vunpack.c.l.b16 %v2716
    %v2751 = vunpack.c.l.b16 %v2717
    %v2752 = vunpack.c.l.b16 %v2718
    %v2753 = vunpack.c.l.b16 %v2719
    %v2754 = vunpack.c.l.b16 %v2720
    %v2755 = vunpack.c.l.b16 %v2721
    %v2756 = vunpack.c.l.b16 %v2722
    %v2757 = vpack.c.b16 %v2742, %v2741
    %v2758 = vpack.c.b16 %v2744, %v2743
    %v2759 = vpack.c.b16 %v2746, %v2745
    %v2760 = vpack.c.b16 %v2748, %v2747
    %v2761 = vpack.c.b16 %v2750, %v2749
    %v2762 = vpack.c.b16 %v2752, %v2751
    %v2763 = vpack.c.b16 %v2754, %v2753
    %v2764 = vpack.c.b16 %v2756, %v2755
    %2773 = vmatprep.subr.bf16.mxu0 0
    %2774 = vmatpush1.bf16.msra.mxu0 %v2764
    %2775 = vmatprep.subr.bf16.mxu0 0
    %2776 = vmatpush1.bf16.msra.mxu0 %v2763
    %2777 = vmatprep.subr.bf16.mxu0 0
    %2778 = vmatpush1.bf16.msra.mxu0 %v2762
    %2779 = vmatprep.subr.bf16.mxu0 0
    %2780 = vmatpush1.bf16.msra.mxu0 %v2761
    %2781 = vmatprep.subr.bf16.mxu0 0
    %2782 = vmatpush1.bf16.msra.mxu0 %v2760
    %2783 = vmatprep.subr.bf16.mxu0 0
    %2784 = vmatpush1.bf16.msra.mxu0 %v2759
    %2785 = vmatprep.subr.bf16.mxu0 0
    %2786 = vmatpush1.bf16.msra.mxu0 %v2758
    %2787 = vmatprep.subr.bf16.mxu0 0
    %2788 = vmatpush1.bf16.msra.mxu0 %v2757
    %2789 = vmatprep.subr.bf16.mxu0 0
    %2790 = vmatpush2.bf16.msra.mxu0 0
    %2791 = vmatprep.subr.bf16.mxu0 0
    %2792 = vmatpush2.bf16.msra.mxu0 0
    %2793 = vmatprep.subr.bf16.mxu0 0
    %2794 = vmatpush2.bf16.msra.mxu0 0
    %2795 = vmatprep.subr.bf16.mxu0 0
    %2796 = vmatpush2.bf16.msra.mxu0 0
    %2797 = vmatprep.subr.bf16.mxu0 0
    %2798 = vmatpush2.bf16.msra.mxu0 0
    %2799 = vmatprep.subr.bf16.mxu0 0
    %2800 = vmatpush2.bf16.msra.mxu0 0
    %2801 = vmatprep.subr.bf16.mxu0 0
    %2802 = vmatpush2.bf16.msra.mxu0 0
    %2803 = vmatprep.subr.bf16.mxu0 0
    %2804 = vmatpush2.bf16.msra.mxu0 0
    %2805 = vmatprep.mubr.bf16.mxu0 0
    %2806 = vmatmul.mubr.bf16.gmra.mxu0 %v2723
    %v2807 = vpop.f32.mrf.mxu0
    %v2808 = vadd.f32 0.0, %v2807
    %v2809 = vpop.f32.mrf.mxu0
    %v2810 = vpop.f32.mrf.mxu0
    %v2811 = vadd.f32 0.0, %v2810
    %v2812 = vpop.f32.mrf.mxu0
    %2813 = vmatprep.mubr.bf16.mxu0 0
    %2814 = vmatmul.mubr.bf16.gmra.mxu0 %v2724
    %v2815 = vpop.f32.mrf.mxu0
    %v2816 = vadd.f32 0.0, %v2815
    %v2817 = vpop.f32.mrf.mxu0
    %v2818 = vpop.f32.mrf.mxu0
    %v2819 = vadd.f32 0.0, %v2818
    %v2820 = vpop.f32.mrf.mxu0
    %2821 = vdwg.mxu0
    %v2822 = vadd.f32 %v2693, %v2808
    %v2823 = vadd.f32 %v2696, %v2811
    %v2824 = vadd.f32 %v2701, %v2816
    %v2825 = vadd.f32 %v2704, %v2819
    %v2826 = vld [vmem:[#allocation7 + $0x4d0] sm:$0x1]
    %v2827 = vunpack.c.l.bf16 %v2826
    %v2828 = vlaneseq
    %v2829 = vshrl.u32 %v2828, 7
    %v2830 = vsub.s32 0, %v2829
    %v2831 = vrot.slane %v2827, %v2830
    %v2832 = vadd.f32 %v2822, %v2831
    %v2833 = vadd.f32 %v2823, %v2831
    %v2834 = vadd.f32 %v2824, %v2831
    %v2835 = vadd.f32 %v2825, %v2831
    %v2836 = vmul.f32 %v2832, 0.1
    %v2837 = vmul.f32 %v2833, 0.1
    %v2838 = vmul.f32 %v2834, 0.1
    %v2839 = vmul.f32 %v2835, 0.1
    %v2840 = vadd.f32 %v1974, %v2836
    %v2841 = vadd.f32 %v1977, %v2837
    %v2842 = vadd.f32 %v1982, %v2838
    %v2843 = vadd.f32 %v1985, %v2839
    %vm2844 = vcmp.gt.f32.partialorder %v2840, 0.0
    %vm2845 = vcmp.gt.f32.partialorder %v2841, 0.0
    %vm2846 = vcmp.gt.f32.partialorder %v2842, 0.0
    %vm2847 = vcmp.gt.f32.partialorder %v2843, 0.0
    %v2848 = vmul.f32 %v2840, 0.2
    %v2849 = vmul.f32 %v2841, 0.2
    %v2850 = vmul.f32 %v2842, 0.2
    %v2851 = vmul.f32 %v2843, 0.2
    %v2852 = vsel %vm2844, %v2840, %v2848
    %v2853 = vsel %vm2845, %v2841, %v2849
    %v2854 = vsel %vm2846, %v2842, %v2850
    %v2855 = vsel %vm2847, %v2843, %v2851
    %v2857 = vrot.slane %v2855, 7
    %v2862 = vrot.slane %v2852, 7
    %v2863 = vrot.slane %v2853, 7
    %v2864 = vsel %vm62, %v2862, %v2863
    %v2865 = vrot.slane %v2854, 7
    %v2866 = vsel %vm62, %v2863, %v2865
    %v2867 = vsel %vm62, %v2865, %v2857
    %v2872 = vsel %vm62, %v2857, %v2862
    %v2873 = vsel %vm2035, %v2872, 0.0
    %v2874 = vsel %vm2036, %v2864, 0.0
    %v2875 = vsel %vm2037, %v2866, 0.0
    %v2876 = vsel %vm2038, %v2867, 0.0
    %v2877 = vrot.slane %v2852, 1
    %v2878 = vrot.slane %v2853, 1
    %v2879 = vsel %vm297, %v2877, %v2878
    %v2880 = vrot.slane %v2854, 1
    %v2881 = vsel %vm297, %v2878, %v2880
    %v2882 = vrot.slane %v2855, 1
    %v2883 = vsel %vm297, %v2880, %v2882
    %v2889 = vsel %vm297, %v2882, %v2877
    %v2890 = vsel %vm2060, %v2879, 0.0
    %v2891 = vsel %vm2061, %v2881, 0.0
    %v2892 = vsel %vm2062, %v2883, 0.0
    %v2893 = vsel %vm2063, %v2889, 0.0
    %v2894 = vld [vmem:[#allocation7 + $0x4d8] sm:$0xf]
    %v2895 = vld [vmem:[#allocation7 + $0x4dc] sm:$0xf]
    %v2896 = vld [vmem:[#allocation7 + $0x4e0] sm:$0xf]
    %v2897 = vld [vmem:[#allocation7 + $0x4e4] sm:$0xf]
    %v2898 = vld [vmem:[#allocation7 + $0x4e8] sm:$0xf]
    %v2899 = vld [vmem:[#allocation7 + $0x4ec] sm:$0xf]
    %v2900 = vld [vmem:[#allocation7 + $0x4f0] sm:$0xf]
    %v2901 = vld [vmem:[#allocation7 + $0x4f4] sm:$0xf]
    %v2902 = vld [vmem:[#allocation7 + $0x4f8] sm:$0xf]
    %v2903 = vld [vmem:[#allocation7 + $0x4fc] sm:$0xf]
    %v2904 = vld [vmem:[#allocation7 + $0x500] sm:$0xf]
    %v2905 = vld [vmem:[#allocation7 + $0x504] sm:$0xf]
    %v2906 = vld [vmem:[#allocation7 + $0x508] sm:$0xf]
    %v2907 = vld [vmem:[#allocation7 + $0x50c] sm:$0xf]
    %v2908 = vld [vmem:[#allocation7 + $0x510] sm:$0xf]
    %v2909 = vld [vmem:[#allocation7 + $0x514] sm:$0xf]
    %v2910 = vpack.c.bf16 %v2874, %v2873
    %v2911 = vpack.c.bf16 %v2876, %v2875
    %v2912 = vld [vmem:[#allocation7 + $0x518] sm:$0xf]
    %v2913 = vld [vmem:[#allocation7 + $0x51c] sm:$0xf]
    %v2914 = vld [vmem:[#allocation7 + $0x520] sm:$0xf]
    %v2915 = vld [vmem:[#allocation7 + $0x524] sm:$0xf]
    %v2916 = vld [vmem:[#allocation7 + $0x528] sm:$0xf]
    %v2917 = vld [vmem:[#allocation7 + $0x52c] sm:$0xf]
    %v2918 = vld [vmem:[#allocation7 + $0x530] sm:$0xf]
    %v2919 = vld [vmem:[#allocation7 + $0x534] sm:$0xf]
    %v2920 = vld [vmem:[#allocation7 + $0x538] sm:$0xf]
    %v2921 = vld [vmem:[#allocation7 + $0x53c] sm:$0xf]
    %v2922 = vld [vmem:[#allocation7 + $0x540] sm:$0xf]
    %v2923 = vld [vmem:[#allocation7 + $0x544] sm:$0xf]
    %v2924 = vld [vmem:[#allocation7 + $0x548] sm:$0xf]
    %v2925 = vld [vmem:[#allocation7 + $0x54c] sm:$0xf]
    %v2926 = vld [vmem:[#allocation7 + $0x550] sm:$0xf]
    %v2927 = vld [vmem:[#allocation7 + $0x554] sm:$0xf]
    %v2928 = vpack.c.bf16 %v2853, %v2852
    %v2929 = vpack.c.bf16 %v2855, %v2854
    %v2946 = vunpack.c.l.b16 %v2912
    %v2947 = vunpack.c.l.b16 %v2913
    %v2948 = vunpack.c.l.b16 %v2914
    %v2949 = vunpack.c.l.b16 %v2915
    %v2950 = vunpack.c.l.b16 %v2916
    %v2951 = vunpack.c.l.b16 %v2917
    %v2952 = vunpack.c.l.b16 %v2918
    %v2953 = vunpack.c.l.b16 %v2919
    %v2954 = vunpack.c.l.b16 %v2920
    %v2955 = vunpack.c.l.b16 %v2921
    %v2956 = vunpack.c.l.b16 %v2922
    %v2957 = vunpack.c.l.b16 %v2923
    %v2958 = vunpack.c.l.b16 %v2924
    %v2959 = vunpack.c.l.b16 %v2925
    %v2960 = vunpack.c.l.b16 %v2926
    %v2961 = vunpack.c.l.b16 %v2927
    %v2962 = vpack.c.b16 %v2947, %v2946
    %v2963 = vpack.c.b16 %v2949, %v2948
    %v2964 = vpack.c.b16 %v2951, %v2950
    %v2965 = vpack.c.b16 %v2953, %v2952
    %v2966 = vpack.c.b16 %v2955, %v2954
    %v2967 = vpack.c.b16 %v2957, %v2956
    %v2968 = vpack.c.b16 %v2959, %v2958
    %v2969 = vpack.c.b16 %v2961, %v2960
    %2978 = vmatprep.subr.bf16.mxu0 0
    %2979 = vmatpush1.bf16.msra.mxu0 %v2969
    %2980 = vmatprep.subr.bf16.mxu0 0
    %2981 = vmatpush1.bf16.msra.mxu0 %v2968
    %2982 = vmatprep.subr.bf16.mxu0 0
    %2983 = vmatpush1.bf16.msra.mxu0 %v2967
    %2984 = vmatprep.subr.bf16.mxu0 0
    %2985 = vmatpush1.bf16.msra.mxu0 %v2966
    %2986 = vmatprep.subr.bf16.mxu0 0
    %2987 = vmatpush1.bf16.msra.mxu0 %v2965
    %2988 = vmatprep.subr.bf16.mxu0 0
    %2989 = vmatpush1.bf16.msra.mxu0 %v2964
    %2990 = vmatprep.subr.bf16.mxu0 0
    %2991 = vmatpush1.bf16.msra.mxu0 %v2963
    %2992 = vmatprep.subr.bf16.mxu0 0
    %2993 = vmatpush1.bf16.msra.mxu0 %v2962
    %2994 = vmatprep.subr.bf16.mxu0 0
    %2995 = vmatpush2.bf16.msra.mxu0 0
    %2996 = vmatprep.subr.bf16.mxu0 0
    %2997 = vmatpush2.bf16.msra.mxu0 0
    %2998 = vmatprep.subr.bf16.mxu0 0
    %2999 = vmatpush2.bf16.msra.mxu0 0
    %3000 = vmatprep.subr.bf16.mxu0 0
    %3001 = vmatpush2.bf16.msra.mxu0 0
    %3002 = vmatprep.subr.bf16.mxu0 0
    %3003 = vmatpush2.bf16.msra.mxu0 0
    %3004 = vmatprep.subr.bf16.mxu0 0
    %3005 = vmatpush2.bf16.msra.mxu0 0
    %3006 = vmatprep.subr.bf16.mxu0 0
    %3007 = vmatpush2.bf16.msra.mxu0 0
    %3008 = vmatprep.subr.bf16.mxu0 0
    %3009 = vmatpush2.bf16.msra.mxu0 0
    %3010 = vmatprep.mubr.bf16.mxu0 0
    %3011 = vmatmul.mubr.bf16.gmra.mxu0 %v2928
    %v3012 = vpop.f32.mrf.mxu0
    %v3013 = vadd.f32 0.0, %v3012
    %v3014 = vpop.f32.mrf.mxu0
    %v3015 = vpop.f32.mrf.mxu0
    %v3016 = vadd.f32 0.0, %v3015
    %v3017 = vpop.f32.mrf.mxu0
    %3018 = vmatprep.mubr.bf16.mxu0 0
    %3019 = vmatmul.mubr.bf16.gmra.mxu0 %v2929
    %v3020 = vpop.f32.mrf.mxu0
    %v3021 = vadd.f32 0.0, %v3020
    %v3022 = vpop.f32.mrf.mxu0
    %v3023 = vpop.f32.mrf.mxu0
    %v3024 = vadd.f32 0.0, %v3023
    %v3025 = vpop.f32.mrf.mxu0
    %3026 = vdwg.mxu0
    %v3043 = vunpack.c.l.b16 %v2894
    %v3044 = vunpack.c.l.b16 %v2895
    %v3045 = vunpack.c.l.b16 %v2896
    %v3046 = vunpack.c.l.b16 %v2897
    %v3047 = vunpack.c.l.b16 %v2898
    %v3048 = vunpack.c.l.b16 %v2899
    %v3049 = vunpack.c.l.b16 %v2900
    %v3050 = vunpack.c.l.b16 %v2901
    %v3051 = vunpack.c.l.b16 %v2902
    %v3052 = vunpack.c.l.b16 %v2903
    %v3053 = vunpack.c.l.b16 %v2904
    %v3054 = vunpack.c.l.b16 %v2905
    %v3055 = vunpack.c.l.b16 %v2906
    %v3056 = vunpack.c.l.b16 %v2907
    %v3057 = vunpack.c.l.b16 %v2908
    %v3058 = vunpack.c.l.b16 %v2909
    %v3059 = vpack.c.b16 %v3044, %v3043
    %v3060 = vpack.c.b16 %v3046, %v3045
    %v3061 = vpack.c.b16 %v3048, %v3047
    %v3062 = vpack.c.b16 %v3050, %v3049
    %v3063 = vpack.c.b16 %v3052, %v3051
    %v3064 = vpack.c.b16 %v3054, %v3053
    %v3065 = vpack.c.b16 %v3056, %v3055
    %v3066 = vpack.c.b16 %v3058, %v3057
    %3075 = vmatprep.subr.bf16.mxu0 0
    %3076 = vmatpush1.bf16.msra.mxu0 %v3066
    %3077 = vmatprep.subr.bf16.mxu0 0
    %3078 = vmatpush1.bf16.msra.mxu0 %v3065
    %3079 = vmatprep.subr.bf16.mxu0 0
    %3080 = vmatpush1.bf16.msra.mxu0 %v3064
    %3081 = vmatprep.subr.bf16.mxu0 0
    %3082 = vmatpush1.bf16.msra.mxu0 %v3063
    %3083 = vmatprep.subr.bf16.mxu0 0
    %3084 = vmatpush1.bf16.msra.mxu0 %v3062
    %3085 = vmatprep.subr.bf16.mxu0 0
    %3086 = vmatpush1.bf16.msra.mxu0 %v3061
    %3087 = vmatprep.subr.bf16.mxu0 0
    %3088 = vmatpush1.bf16.msra.mxu0 %v3060
    %3089 = vmatprep.subr.bf16.mxu0 0
    %3090 = vmatpush1.bf16.msra.mxu0 %v3059
    %3091 = vmatprep.subr.bf16.mxu0 0
    %3092 = vmatpush2.bf16.msra.mxu0 0
    %3093 = vmatprep.subr.bf16.mxu0 0
    %3094 = vmatpush2.bf16.msra.mxu0 0
    %3095 = vmatprep.subr.bf16.mxu0 0
    %3096 = vmatpush2.bf16.msra.mxu0 0
    %3097 = vmatprep.subr.bf16.mxu0 0
    %3098 = vmatpush2.bf16.msra.mxu0 0
    %3099 = vmatprep.subr.bf16.mxu0 0
    %3100 = vmatpush2.bf16.msra.mxu0 0
    %3101 = vmatprep.subr.bf16.mxu0 0
    %3102 = vmatpush2.bf16.msra.mxu0 0
    %3103 = vmatprep.subr.bf16.mxu0 0
    %3104 = vmatpush2.bf16.msra.mxu0 0
    %3105 = vmatprep.subr.bf16.mxu0 0
    %3106 = vmatpush2.bf16.msra.mxu0 0
    %3107 = vmatprep.mubr.bf16.mxu0 0
    %3108 = vmatmul.mubr.bf16.gmra.mxu0 %v2910
    %v3109 = vpop.f32.mrf.mxu0
    %v3110 = vadd.f32 %v3013, %v3109
    %v3111 = vpop.f32.mrf.mxu0
    %v3112 = vpop.f32.mrf.mxu0
    %v3113 = vadd.f32 %v3016, %v3112
    %v3114 = vpop.f32.mrf.mxu0
    %3115 = vmatprep.mubr.bf16.mxu0 0
    %3116 = vmatmul.mubr.bf16.gmra.mxu0 %v2911
    %v3117 = vpop.f32.mrf.mxu0
    %v3118 = vadd.f32 %v3021, %v3117
    %v3119 = vpop.f32.mrf.mxu0
    %v3120 = vpop.f32.mrf.mxu0
    %v3121 = vadd.f32 %v3024, %v3120
    %v3122 = vpop.f32.mrf.mxu0
    %3123 = vdwg.mxu0
    %v3124 = vld [vmem:[#allocation7 + $0x558] sm:$0xf]
    %v3125 = vld [vmem:[#allocation7 + $0x55c] sm:$0xf]
    %v3126 = vld [vmem:[#allocation7 + $0x560] sm:$0xf]
    %v3127 = vld [vmem:[#allocation7 + $0x564] sm:$0xf]
    %v3128 = vld [vmem:[#allocation7 + $0x568] sm:$0xf]
    %v3129 = vld [vmem:[#allocation7 + $0x56c] sm:$0xf]
    %v3130 = vld [vmem:[#allocation7 + $0x570] sm:$0xf]
    %v3131 = vld [vmem:[#allocation7 + $0x574] sm:$0xf]
    %v3132 = vld [vmem:[#allocation7 + $0x578] sm:$0xf]
    %v3133 = vld [vmem:[#allocation7 + $0x57c] sm:$0xf]
    %v3134 = vld [vmem:[#allocation7 + $0x580] sm:$0xf]
    %v3135 = vld [vmem:[#allocation7 + $0x584] sm:$0xf]
    %v3136 = vld [vmem:[#allocation7 + $0x588] sm:$0xf]
    %v3137 = vld [vmem:[#allocation7 + $0x58c] sm:$0xf]
    %v3138 = vld [vmem:[#allocation7 + $0x590] sm:$0xf]
    %v3139 = vld [vmem:[#allocation7 + $0x594] sm:$0xf]
    %v3140 = vpack.c.bf16 %v2891, %v2890
    %v3141 = vpack.c.bf16 %v2893, %v2892
    %v3158 = vunpack.c.l.b16 %v3124
    %v3159 = vunpack.c.l.b16 %v3125
    %v3160 = vunpack.c.l.b16 %v3126
    %v3161 = vunpack.c.l.b16 %v3127
    %v3162 = vunpack.c.l.b16 %v3128
    %v3163 = vunpack.c.l.b16 %v3129
    %v3164 = vunpack.c.l.b16 %v3130
    %v3165 = vunpack.c.l.b16 %v3131
    %v3166 = vunpack.c.l.b16 %v3132
    %v3167 = vunpack.c.l.b16 %v3133
    %v3168 = vunpack.c.l.b16 %v3134
    %v3169 = vunpack.c.l.b16 %v3135
    %v3170 = vunpack.c.l.b16 %v3136
    %v3171 = vunpack.c.l.b16 %v3137
    %v3172 = vunpack.c.l.b16 %v3138
    %v3173 = vunpack.c.l.b16 %v3139
    %v3174 = vpack.c.b16 %v3159, %v3158
    %v3175 = vpack.c.b16 %v3161, %v3160
    %v3176 = vpack.c.b16 %v3163, %v3162
    %v3177 = vpack.c.b16 %v3165, %v3164
    %v3178 = vpack.c.b16 %v3167, %v3166
    %v3179 = vpack.c.b16 %v3169, %v3168
    %v3180 = vpack.c.b16 %v3171, %v3170
    %v3181 = vpack.c.b16 %v3173, %v3172
    %3190 = vmatprep.subr.bf16.mxu0 0
    %3191 = vmatpush1.bf16.msra.mxu0 %v3181
    %3192 = vmatprep.subr.bf16.mxu0 0
    %3193 = vmatpush1.bf16.msra.mxu0 %v3180
    %3194 = vmatprep.subr.bf16.mxu0 0
    %3195 = vmatpush1.bf16.msra.mxu0 %v3179
    %3196 = vmatprep.subr.bf16.mxu0 0
    %3197 = vmatpush1.bf16.msra.mxu0 %v3178
    %3198 = vmatprep.subr.bf16.mxu0 0
    %3199 = vmatpush1.bf16.msra.mxu0 %v3177
    %3200 = vmatprep.subr.bf16.mxu0 0
    %3201 = vmatpush1.bf16.msra.mxu0 %v3176
    %3202 = vmatprep.subr.bf16.mxu0 0
    %3203 = vmatpush1.bf16.msra.mxu0 %v3175
    %3204 = vmatprep.subr.bf16.mxu0 0
    %3205 = vmatpush1.bf16.msra.mxu0 %v3174
    %3206 = vmatprep.subr.bf16.mxu0 0
    %3207 = vmatpush2.bf16.msra.mxu0 0
    %3208 = vmatprep.subr.bf16.mxu0 0
    %3209 = vmatpush2.bf16.msra.mxu0 0
    %3210 = vmatprep.subr.bf16.mxu0 0
    %3211 = vmatpush2.bf16.msra.mxu0 0
    %3212 = vmatprep.subr.bf16.mxu0 0
    %3213 = vmatpush2.bf16.msra.mxu0 0
    %3214 = vmatprep.subr.bf16.mxu0 0
    %3215 = vmatpush2.bf16.msra.mxu0 0
    %3216 = vmatprep.subr.bf16.mxu0 0
    %3217 = vmatpush2.bf16.msra.mxu0 0
    %3218 = vmatprep.subr.bf16.mxu0 0
    %3219 = vmatpush2.bf16.msra.mxu0 0
    %3220 = vmatprep.subr.bf16.mxu0 0
    %3221 = vmatpush2.bf16.msra.mxu0 0
    %3222 = vmatprep.mubr.bf16.mxu0 0
    %3223 = vmatmul.mubr.bf16.gmra.mxu0 %v3140
    %v3224 = vpop.f32.mrf.mxu0
    %v3225 = vadd.f32 0.0, %v3224
    %v3226 = vpop.f32.mrf.mxu0
    %v3227 = vpop.f32.mrf.mxu0
    %v3228 = vadd.f32 0.0, %v3227
    %v3229 = vpop.f32.mrf.mxu0
    %3230 = vmatprep.mubr.bf16.mxu0 0
    %3231 = vmatmul.mubr.bf16.gmra.mxu0 %v3141
    %v3232 = vpop.f32.mrf.mxu0
    %v3233 = vadd.f32 0.0, %v3232
    %v3234 = vpop.f32.mrf.mxu0
    %v3235 = vpop.f32.mrf.mxu0
    %v3236 = vadd.f32 0.0, %v3235
    %v3237 = vpop.f32.mrf.mxu0
    %3238 = vdwg.mxu0
    %v3239 = vadd.f32 %v3110, %v3225
    %v3240 = vadd.f32 %v3113, %v3228
    %v3241 = vadd.f32 %v3118, %v3233
    %v3242 = vadd.f32 %v3121, %v3236
    %v3243 = vld [vmem:[#allocation7 + $0x598] sm:$0x1]
    %v3244 = vunpack.c.l.bf16 %v3243
    %v3245 = vlaneseq
    %v3246 = vshrl.u32 %v3245, 7
    %v3247 = vsub.s32 0, %v3246
    %v3248 = vrot.slane %v3244, %v3247
    %v3249 = vadd.f32 %v3239, %v3248
    %v3250 = vadd.f32 %v3240, %v3248
    %v3251 = vadd.f32 %v3241, %v3248
    %v3252 = vadd.f32 %v3242, %v3248
    %v3253 = vtanh.pop %v3249
    %v3254 = vtanh.pop %v3250
    %v3255 = vtanh.pop %v3251
    %v3256 = vtanh.pop %v3252
    %3257 = vst.msk [vmem:[#allocation8] sm:$0xff] %vm1932, %v3253
    %3258 = vst.msk [vmem:[#allocation8 + $0x8] sm:$0xff] %vm1932, %v3254
    %3261 = vrot.lane.b32.xlu0 %v3253, 112
    %v3262 = vpop.permute.xlu0 %3261
    %3263 = vrot.lane.b32.xlu0 %v3254, 112
    %v3264 = vpop.permute.xlu0 %3263
    %3267 = vst.msk [vmem:[#allocation8 + $0x10] sm:$0xff] %vm1932, %v3262
    %3268 = vst.msk [vmem:[#allocation8 + $0x18] sm:$0xff] %vm1932, %v3264
    %3269 = vrot.lane.b32.xlu0 %v3253, 96
    %v3270 = vpop.permute.xlu0 %3269
    %3271 = vrot.lane.b32.xlu0 %v3254, 96
    %v3272 = vpop.permute.xlu0 %3271
    %3275 = vst.msk [vmem:[#allocation8 + $0x20] sm:$0xff] %vm1932, %v3270
    %3276 = vst.msk [vmem:[#allocation8 + $0x28] sm:$0xff] %vm1932, %v3272
    %3277 = vst.msk [vmem:[#allocation8 + $0x30] sm:$0xff] %vm1932, %v3255
    %3278 = vst.msk [vmem:[#allocation8 + $0x38] sm:$0xff] %vm1932, %v3256
    %3281 = vrot.lane.b32.xlu0 %v3255, 112
    %v3282 = vpop.permute.xlu0 %3281
    %3283 = vrot.lane.b32.xlu0 %v3256, 112
    %v3284 = vpop.permute.xlu0 %3283
    %3287 = vst.msk [vmem:[#allocation8 + $0x40] sm:$0xff] %vm1932, %v3282
    %3288 = vst.msk [vmem:[#allocation8 + $0x48] sm:$0xff] %vm1932, %v3284
    %3289 = vrot.lane.b32.xlu0 %v3255, 96
    %v3290 = vpop.permute.xlu0 %3289
    %3291 = vrot.lane.b32.xlu0 %v3256, 96
    %v3292 = vpop.permute.xlu0 %3291
    %3295 = vst.msk [vmem:[#allocation8 + $0x50] sm:$0xff] %vm1932, %v3290
    %3296 = vst.msk [vmem:[#allocation8 + $0x58] sm:$0xff] %vm1932, %v3292
    // Predicated region
    $region26: #{_lambda_.1} parent=1 // pred_check
      _
    $region27: #{_lambda_.1} parent=1 // pred_check_branch
      %3298 = sbr.rel (0) target = $region29
    $region28: #{_lambda_.1} parent=1 // pred_region
      %s3300 = ssub.s32 1536, 1536
      %3301 = vsyncadd [#allocation4], %s3300
      %s3302 = sshll.u32 [#allocation8], 4
      %s3303 = int_to_ptr.vmem [resolvable:$true] %s3302
      %3308 = dma.vmem_to_hbm [thread:$0]  %s3303, 1536, %s3, [#allocation4], 128, 128, 8
    $region29: #{_lambda_.1} parent=1 // pred_fallthru
      _
    // Predicated region
    $region30: #{_lambda_.1} parent=1 // pred_check
      _
    $region31: #{_lambda_.1} parent=1 // pred_check_branch
      %3310 = sbr.rel (0) target = $region33
    $region32: #{_lambda_.1} parent=1 // pred_region
      %3311 = dma.done [#allocation4], 1536
    $region33: #{_lambda_.1} parent=1 // pred_fallthru
      _
    %3312 = vsyncpa [#allocation3], 1
    %3313 = vsyncpa [#allocation6], 1
    %3314 = vsyncpa [#allocation4], 1

</llo_original>
